<compile_context>
chip_gen: v5e
topology: v5e:2x2
jax: 0.10.0
libtpu: 0.0.40
codegen_flags: <defaults>
</compile_context>

<pallas_src>
import functools

import jax
import jax.numpy as jnp
from jax import lax
from jax.experimental import pallas as pl
from jax.experimental.pallas import tpu as pltpu

INPUT_SIZE = 512
HIDDEN_SIZE = 128
NUM_CLASSES = 13
NUM_LAYERS = 1  # single-layer GRU, as in the module

_SUBLANE = 8    # f32 sublane height
_LANE = 128     # lane width
_NEG = -1e30    # "minus infinity" for padded softmax lanes


def _round_up(v, m):
    return ((v + m - 1) // m) * m


def _gru_kernel(gi_ref, whh_ref, bhhn_ref, wfc_ref, bfc_ref, out_ref,
                h_scratch, *, t_total):
    """One grid step == one (batch-block, time-chunk).

    Refs:
      gi_ref   : (Tc, Bb, 3H)  precomputed x@W_ih + b_ih (+ b_hh r/z) for this chunk
      whh_ref  : (H, 3H)       hidden->hidden weights, gate order [r, z, n]
      bhhn_ref : (1, H)        n-gate hidden bias (must stay inside r * (...))
      wfc_ref  : (H, Cp)       FC weights, classes padded to 128 lanes
      bfc_ref  : (1, Cp)       FC bias; padded lanes hold -1e30
      out_ref  : (Bb, Cp)      softmax probabilities (written on last chunk only)
      h_scratch: (Bb, H) f32   hidden state, persists across the time-chunk axis
    """
    tc = gi_ref.shape[0]
    H = h_scratch.shape[1]
    t_chunk = pl.program_id(1)
    needs_mask = (t_total % tc) != 0  # static Python bool

    @pl.when(t_chunk == 0)
    def _():
        h_scratch[...] = jnp.zeros_like(h_scratch)

    bhh_n = bhhn_ref[...]          # (1, H), one vreg, hoisted out of the loop
    t0 = t_chunk * tc

    def step(j, h):
        gi = gi_ref[j]             # (Bb, 3H) — dynamic index on leading axis
        gh = jnp.dot(h.astype(whh_ref.dtype), whh_ref[...],
                     preferred_element_type=jnp.float32)          # (Bb, 3H)
        r = jax.nn.sigmoid(gi[:, 0 * H:1 * H] + gh[:, 0 * H:1 * H])
        z = jax.nn.sigmoid(gi[:, 1 * H:2 * H] + gh[:, 1 * H:2 * H])
        n = jnp.tanh(gi[:, 2 * H:3 * H] + r * (gh[:, 2 * H:3 * H] + bhh_n))
        h_new = (1.0 - z) * n + z * h
        if needs_mask:  # only emitted when T is not a multiple of Tc
            h_new = jnp.where(t0 + j < t_total, h_new, h)
        return h_new

    h = lax.fori_loop(0, tc, step, h_scratch[...], unroll=True)
    h_scratch[...] = h

    @pl.when(t_chunk == pl.num_programs(1) - 1)
    def _():
        logits = jnp.dot(h, wfc_ref[...],
                         preferred_element_type=jnp.float32) + bfc_ref[...]
        # Numerically stable softmax over the class axis; padded lanes are -1e30
        # so they contribute exp(...) == 0.
        m = jnp.max(logits, axis=1, keepdims=True)
        e = jnp.exp(logits - m)
        out_ref[...] = (e / jnp.sum(e, axis=1, keepdims=True)).astype(out_ref.dtype)


def _build_gru_call(b_pad, b_blk, t_pad, tc, H, c_pad, t_total,
                    single_buffer_weights):
    grid = (b_pad // b_blk, t_pad // tc)

    def const_spec(shape):
        # Weight/bias blocks never change index; single-buffer them to save VMEM.
        if single_buffer_weights:
            return pl.BlockSpec(shape, lambda b, t: (0, 0),
                                pipeline_mode=pl.Buffered(1))
        return pl.BlockSpec(shape, lambda b, t: (0, 0))

    grid_spec = pltpu.PrefetchScalarGridSpec(
        num_scalar_prefetch=0,
        grid=grid,
        in_specs=[
            pl.BlockSpec((tc, b_blk, 3 * H), lambda b, t: (t, b, 0)),  # gi chunk
            const_spec((H, 3 * H)),                                    # W_hh^T
            const_spec((1, H)),                                        # b_hh (n gate)
            const_spec((H, c_pad)),                                    # W_fc^T padded
            const_spec((1, c_pad)),                                    # b_fc padded
        ],
        out_specs=pl.BlockSpec((b_blk, c_pad), lambda b, t: (b, 0)),
        scratch_shapes=[pltpu.VMEM((b_blk, H), jnp.float32)],
    )
    kernel = functools.partial(_gru_kernel, t_total=t_total)
    return pl.pallas_call(
        kernel,
        out_shape=jax.ShapeDtypeStruct((b_pad, c_pad), jnp.float32),
        grid_spec=grid_spec,
        compiler_params=pltpu.CompilerParams(
            # batch blocks independent (megacore-parallel); recurrence serial.
            dimension_semantics=("parallel", "arbitrary"),
        ),
    )


def gru_model_forward(x_bti, params, *, time_chunk=8, use_bf16_matmul=False):
    """x_bti: (B, T, I) float32 (PyTorch batch_first layout). Returns (B, C)."""
    w_ih, w_hh, b_ih, b_hh, w_fc, b_fc = params
    B, T, I = x_bti.shape
    H = w_hh.shape[0]
    C = w_fc.shape[1]

    tc = max(1, min(time_chunk, T))           # timesteps per grid step
    b_blk = _SUBLANE                          # 8 rows per batch block (f32 sublanes)
    b_pad = _round_up(max(B, b_blk), b_blk)
    t_pad = _round_up(T, tc)
    c_pad = _round_up(C, _LANE)

    # bf16 only feeds the MXU; accumulation / gates / hidden state stay f32.
    mm_dtype = jnp.bfloat16 if use_bf16_matmul else x_bti.dtype

    # ---- Hoisted input projection: one batched matmul over all timesteps,
    # emitted directly time-major so x is only read once (no transpose pass).
    # Fold b_ih fully, and the r/z components of b_hh, into gi.
    b_fold = b_ih + jnp.concatenate(
        [b_hh[:, :2 * H], jnp.zeros((1, H), b_hh.dtype)], axis=1)      # (1, 3H)
    gi = jnp.einsum('bti,ig->tbg',
                    x_bti.astype(mm_dtype), w_ih.astype(mm_dtype),
                    preferred_element_type=jnp.float32) + b_fold        # (T, B, 3H)
    gi = jnp.pad(gi, ((0, t_pad - T), (0, b_pad - B), (0, 0)))

    b_hh_n = b_hh[:, 2 * H:]                                            # (1, H)

    # Lane-dense FC output: pad classes to 128; padded logits get -1e30 bias.
    w_fc_p = jnp.pad(w_fc, ((0, 0), (0, c_pad - C)))
    b_fc_p = jnp.pad(b_fc, ((0, 0), (0, c_pad - C)), constant_values=_NEG)

    args = (gi, w_hh.astype(mm_dtype), b_hh_n, w_fc_p, b_fc_p)

    try:
        call = _build_gru_call(b_pad, b_blk, t_pad, tc, H, c_pad, T,
                               single_buffer_weights=True)
        out = call(*args)
    except Exception:
        # pipeline_mode=pl.Buffered(1) unsupported on this jax build; fall back
        # to default double-buffering (only costs a little extra VMEM).
        call = _build_gru_call(b_pad, b_blk, t_pad, tc, H, c_pad, T,
                               single_buffer_weights=False)
        out = call(*args)

    return out[:B, :C]


def init_params(key, input_size=INPUT_SIZE, hidden_size=HIDDEN_SIZE,
                num_classes=NUM_CLASSES):
    """Deterministic synthetic parameters matching nn.GRU / nn.Linear shapes.

    PyTorch stores weight_ih_l0 as (3H, I) and weight_hh_l0 as (3H, H) with gate
    order [r, z, n]; we keep that order but pre-transpose for right-multiplication.
    """
    ks = jax.random.split(key, 6)
    scale = 0.05
    w_ih = scale * jax.random.normal(ks[0], (input_size, 3 * hidden_size), jnp.float32)
    w_hh = scale * jax.random.normal(ks[1], (hidden_size, 3 * hidden_size), jnp.float32)
    b_ih = scale * jax.random.normal(ks[2], (1, 3 * hidden_size), jnp.float32)
    b_hh = scale * jax.random.normal(ks[3], (1, 3 * hidden_size), jnp.float32)
    w_fc = scale * jax.random.normal(ks[4], (hidden_size, num_classes), jnp.float32)
    b_fc = scale * jax.random.normal(ks[5], (1, num_classes), jnp.float32)
    return (w_ih, w_hh, b_ih, b_hh, w_fc, b_fc)


def _reference_forward(x_bti, params):
    """Pure-JAX reference of the PyTorch forward, for a sanity check."""
    w_ih, w_hh, b_ih, b_hh, w_fc, b_fc = params
    B, T, I = x_bti.shape
    H = HIDDEN_SIZE
    h = jnp.zeros((B, H), jnp.float32)
    for t in range(T):
        x_t = x_bti[:, t, :]
        gi = x_t @ w_ih + b_ih
        gh = h @ w_hh + b_hh
        r = jax.nn.sigmoid(gi[:, :H] + gh[:, :H])
        z = jax.nn.sigmoid(gi[:, H:2 * H] + gh[:, H:2 * H])
        n = jnp.tanh(gi[:, 2 * H:] + r * gh[:, 2 * H:])
        h = (1.0 - z) * n + z * h
    logits = h @ w_fc + b_fc
    return jax.nn.softmax(logits, axis=1)


if __name__ == "__main__":
    key = jax.random.PRNGKey(0)
    k_x, k_p = jax.random.split(key)

    B, T = 2, 8  # small batch / sequence length
    x = jax.random.normal(k_x, (B, T, INPUT_SIZE), jnp.float32)
    params = init_params(k_p)

    out = gru_model_forward(x, params)   # f32 path; flip use_bf16_matmul=True on v6e/v7x
    out = jax.block_until_ready(out)

    ref = _reference_forward(x, params)
    assert out.shape == (B, NUM_CLASSES)
    assert jnp.allclose(out, ref, atol=2e-5, rtol=2e-5), (
        f"mismatch vs reference, max abs err {jnp.max(jnp.abs(out - ref))}")
    assert jnp.allclose(jnp.sum(out, axis=1), 1.0, atol=1e-5)

    print("KERNEL_OK")
</pallas_src>

<mosaic_0001>
module attributes {stable_mosaic.version = 11 : i64} {
  func.func @_gru_kernel(%arg0: i32, %arg1: i32, %arg2: memref<8x8x384xf32, #tpu.memory_space<vmem>>, %arg3: memref<128x384xf32, #tpu.memory_space<vmem>>, %arg4: memref<1x128xf32, #tpu.memory_space<vmem>>, %arg5: memref<128x128xf32, #tpu.memory_space<vmem>>, %arg6: memref<1x128xf32, #tpu.memory_space<vmem>>, %arg7: memref<8x128xf32, #tpu.memory_space<vmem>>, %arg8: memref<8x128xf32, #tpu.memory_space<vmem>>) attributes {dimension_semantics = [#tpu.dimension_semantics<parallel>, #tpu.dimension_semantics<arbitrary>], iteration_bounds = array<i64: 1, 1>, scalar_prefetch = 0 : i64, scratch_operands = 1 : i64, tpu.core_type = #tpu.core_type<tc>, window_params = [{transform_indices = @transform_0, window_bounds = array<i64: 8, 8, 384>}, {pipeline_mode = #tpu.pipeline_mode<synchronous>, transform_indices = @transform_1, window_bounds = array<i64: 128, 384>}, {pipeline_mode = #tpu.pipeline_mode<synchronous>, transform_indices = @transform_2, window_bounds = array<i64: 1, 128>}, {pipeline_mode = #tpu.pipeline_mode<synchronous>, transform_indices = @transform_3, window_bounds = array<i64: 128, 128>}, {pipeline_mode = #tpu.pipeline_mode<synchronous>, transform_indices = @transform_4, window_bounds = array<i64: 1, 128>}, {transform_indices = @transform_5, window_bounds = array<i64: 8, 128>}]} {
    %c0_i32 = arith.constant 0 : i32
    %0 = arith.cmpi eq, %arg1, %c0_i32 : i32
    %1 = arith.extui %0 : i1 to i32
    %c0_i32_0 = arith.constant 0 : i32
    %2 = arith.cmpi ne, %1, %c0_i32_0 : i32
    scf.if %2 {
      %cst_72 = arith.constant 0.000000e+00 : f32
      %273 = vector.broadcast %cst_72 : f32 to vector<8x128xf32>
      %c0_73 = arith.constant 0 : index
      %c0_74 = arith.constant 0 : index
      %274 = vector.load %arg8[%c0_73, %c0_74] : memref<8x128xf32, #tpu.memory_space<vmem>>, vector<8x128xf32>
      tpu.vector_store %arg8[%c0_73, %c0_74], %273 {strides = array<i32>} : memref<8x128xf32, #tpu.memory_space<vmem>>, vector<8x128xf32>,
    } else {
    }
    %c0 = arith.constant 0 : index
    %c0_1 = arith.constant 0 : index
    %3 = vector.load %arg4[%c0, %c0_1] : memref<1x128xf32, #tpu.memory_space<vmem>>, vector<1x128xf32>
    %c0_2 = arith.constant 0 : index
    %c0_3 = arith.constant 0 : index
    %4 = vector.load %arg8[%c0_2, %c0_3] : memref<8x128xf32, #tpu.memory_space<vmem>>, vector<8x128xf32>
    %c0_i32_4 = arith.constant 0 : i32
    %5 = arith.index_cast %c0_i32_4 : i32 to index
    %c0_5 = arith.constant 0 : index
    %c0_6 = arith.constant 0 : index
    %6 = vector.load %arg2[%5, %c0_5, %c0_6] : memref<8x8x384xf32, #tpu.memory_space<vmem>>, vector<1x8x384xf32>
    %7 = vector.shape_cast %6 : vector<1x8x384xf32> to vector<8x384xf32>
    %c0_7 = arith.constant 0 : index
    %c0_8 = arith.constant 0 : index
    %8 = vector.load %arg3[%c0_7, %c0_8] : memref<128x384xf32, #tpu.memory_space<vmem>>, vector<128x384xf32>
    %cst = arith.constant dense<0.000000e+00> : vector<8x384xf32>
    %9 = tpu.matmul %4, %8, %cst {dimension_numbers = #tpu.dot_dimension_numbers<[1], [0], [0], [1], [0, 0, 1, 1], [], []>} : vector<8x128xf32>, vector<128x384xf32>, vector<8x384xf32> -> vector<8x384xf32>
    %10 = vector.extract_strided_slice %7 {offsets = [0, 0], sizes = [8, 128], strides = [1, 1]} : vector<8x384xf32> to vector<8x128xf32>
    %11 = vector.extract_strided_slice %9 {offsets = [0, 0], sizes = [8, 128], strides = [1, 1]} : vector<8x384xf32> to vector<8x128xf32>
    %12 = arith.addf %10, %11 : vector<8x128xf32>
    %13 = arith.negf %12 : vector<8x128xf32>
    %14 = math.exp %13 : vector<8x128xf32>
    %cst_9 = arith.constant 1.000000e+00 : f32
    %15 = vector.broadcast %cst_9 : f32 to vector<8x128xf32>
    %16 = arith.addf %15, %14 : vector<8x128xf32>
    %17 = arith.divf %15, %16 : vector<8x128xf32>
    %18 = vector.extract_strided_slice %7 {offsets = [0, 128], sizes = [8, 128], strides = [1, 1]} : vector<8x384xf32> to vector<8x128xf32>
    %19 = vector.extract_strided_slice %9 {offsets = [0, 128], sizes = [8, 128], strides = [1, 1]} : vector<8x384xf32> to vector<8x128xf32>
    %20 = arith.addf %18, %19 : vector<8x128xf32>
    %21 = arith.negf %20 : vector<8x128xf32>
    %22 = math.exp %21 : vector<8x128xf32>
    %cst_10 = arith.constant 1.000000e+00 : f32
    %23 = vector.broadcast %cst_10 : f32 to vector<8x128xf32>
    %24 = arith.addf %23, %22 : vector<8x128xf32>
    %25 = arith.divf %23, %24 : vector<8x128xf32>
    %26 = vector.extract_strided_slice %7 {offsets = [0, 256], sizes = [8, 128], strides = [1, 1]} : vector<8x384xf32> to vector<8x128xf32>
    %27 = vector.extract_strided_slice %9 {offsets = [0, 256], sizes = [8, 128], strides = [1, 1]} : vector<8x384xf32> to vector<8x128xf32>
    %28 = vector.broadcast %3 : vector<1x128xf32> to vector<8x128xf32>
    %29 = arith.addf %27, %28 : vector<8x128xf32>
    %30 = arith.mulf %17, %29 : vector<8x128xf32>
    %31 = arith.addf %26, %30 : vector<8x128xf32>
    %32 = math.tanh %31 : vector<8x128xf32>
    %cst_11 = arith.constant 1.000000e+00 : f32
    %33 = vector.broadcast %cst_11 : f32 to vector<8x128xf32>
    %34 = arith.subf %33, %25 : vector<8x128xf32>
    %35 = arith.mulf %34, %32 : vector<8x128xf32>
    %36 = arith.mulf %25, %4 : vector<8x128xf32>
    %37 = arith.addf %35, %36 : vector<8x128xf32>
    %c1_i32 = arith.constant 1 : i32
    %38 = arith.index_cast %c1_i32 : i32 to index
    %c0_12 = arith.constant 0 : index
    %c0_13 = arith.constant 0 : index
    %39 = vector.load %arg2[%38, %c0_12, %c0_13] : memref<8x8x384xf32, #tpu.memory_space<vmem>>, vector<1x8x384xf32>
    %40 = vector.shape_cast %39 : vector<1x8x384xf32> to vector<8x384xf32>
    %c0_14 = arith.constant 0 : index
    %c0_15 = arith.constant 0 : index
    %41 = vector.load %arg3[%c0_14, %c0_15] : memref<128x384xf32, #tpu.memory_space<vmem>>, vector<128x384xf32>
    %cst_16 = arith.constant dense<0.000000e+00> : vector<8x384xf32>
    %42 = tpu.matmul %37, %41, %cst_16 {dimension_numbers = #tpu.dot_dimension_numbers<[1], [0], [0], [1], [0, 0, 1, 1], [], []>} : vector<8x128xf32>, vector<128x384xf32>, vector<8x384xf32> -> vector<8x384xf32>
    %43 = vector.extract_strided_slice %40 {offsets = [0, 0], sizes = [8, 128], strides = [1, 1]} : vector<8x384xf32> to vector<8x128xf32>
    %44 = vector.extract_strided_slice %42 {offsets = [0, 0], sizes = [8, 128], strides = [1, 1]} : vector<8x384xf32> to vector<8x128xf32>
    %45 = arith.addf %43, %44 : vector<8x128xf32>
    %46 = arith.negf %45 : vector<8x128xf32>
    %47 = math.exp %46 : vector<8x128xf32>
    %cst_17 = arith.constant 1.000000e+00 : f32
    %48 = vector.broadcast %cst_17 : f32 to vector<8x128xf32>
    %49 = arith.addf %48, %47 : vector<8x128xf32>
    %50 = arith.divf %48, %49 : vector<8x128xf32>
    %51 = vector.extract_strided_slice %40 {offsets = [0, 128], sizes = [8, 128], strides = [1, 1]} : vector<8x384xf32> to vector<8x128xf32>
    %52 = vector.extract_strided_slice %42 {offsets = [0, 128], sizes = [8, 128], strides = [1, 1]} : vector<8x384xf32> to vector<8x128xf32>
    %53 = arith.addf %51, %52 : vector<8x128xf32>
    %54 = arith.negf %53 : vector<8x128xf32>
    %55 = math.exp %54 : vector<8x128xf32>
    %cst_18 = arith.constant 1.000000e+00 : f32
    %56 = vector.broadcast %cst_18 : f32 to vector<8x128xf32>
    %57 = arith.addf %56, %55 : vector<8x128xf32>
    %58 = arith.divf %56, %57 : vector<8x128xf32>
    %59 = vector.extract_strided_slice %40 {offsets = [0, 256], sizes = [8, 128], strides = [1, 1]} : vector<8x384xf32> to vector<8x128xf32>
    %60 = vector.extract_strided_slice %42 {offsets = [0, 256], sizes = [8, 128], strides = [1, 1]} : vector<8x384xf32> to vector<8x128xf32>
    %61 = vector.broadcast %3 : vector<1x128xf32> to vector<8x128xf32>
    %62 = arith.addf %60, %61 : vector<8x128xf32>
    %63 = arith.mulf %50, %62 : vector<8x128xf32>
    %64 = arith.addf %59, %63 : vector<8x128xf32>
    %65 = math.tanh %64 : vector<8x128xf32>
    %cst_19 = arith.constant 1.000000e+00 : f32
    %66 = vector.broadcast %cst_19 : f32 to vector<8x128xf32>
    %67 = arith.subf %66, %58 : vector<8x128xf32>
    %68 = arith.mulf %67, %65 : vector<8x128xf32>
    %69 = arith.mulf %58, %37 : vector<8x128xf32>
    %70 = arith.addf %68, %69 : vector<8x128xf32>
    %c2_i32 = arith.constant 2 : i32
    %71 = arith.index_cast %c2_i32 : i32 to index
    %c0_20 = arith.constant 0 : index
    %c0_21 = arith.constant 0 : index
    %72 = vector.load %arg2[%71, %c0_20, %c0_21] : memref<8x8x384xf32, #tpu.memory_space<vmem>>, vector<1x8x384xf32>
    %73 = vector.shape_cast %72 : vector<1x8x384xf32> to vector<8x384xf32>
    %c0_22 = arith.constant 0 : index
    %c0_23 = arith.constant 0 : index
    %74 = vector.load %arg3[%c0_22, %c0_23] : memref<128x384xf32, #tpu.memory_space<vmem>>, vector<128x384xf32>
    %cst_24 = arith.constant dense<0.000000e+00> : vector<8x384xf32>
    %75 = tpu.matmul %70, %74, %cst_24 {dimension_numbers = #tpu.dot_dimension_numbers<[1], [0], [0], [1], [0, 0, 1, 1], [], []>} : vector<8x128xf32>, vector<128x384xf32>, vector<8x384xf32> -> vector<8x384xf32>
    %76 = vector.extract_strided_slice %73 {offsets = [0, 0], sizes = [8, 128], strides = [1, 1]} : vector<8x384xf32> to vector<8x128xf32>
    %77 = vector.extract_strided_slice %75 {offsets = [0, 0], sizes = [8, 128], strides = [1, 1]} : vector<8x384xf32> to vector<8x128xf32>
    %78 = arith.addf %76, %77 : vector<8x128xf32>
    %79 = arith.negf %78 : vector<8x128xf32>
    %80 = math.exp %79 : vector<8x128xf32>
    %cst_25 = arith.constant 1.000000e+00 : f32
    %81 = vector.broadcast %cst_25 : f32 to vector<8x128xf32>
    %82 = arith.addf %81, %80 : vector<8x128xf32>
    %83 = arith.divf %81, %82 : vector<8x128xf32>
    %84 = vector.extract_strided_slice %73 {offsets = [0, 128], sizes = [8, 128], strides = [1, 1]} : vector<8x384xf32> to vector<8x128xf32>
    %85 = vector.extract_strided_slice %75 {offsets = [0, 128], sizes = [8, 128], strides = [1, 1]} : vector<8x384xf32> to vector<8x128xf32>
    %86 = arith.addf %84, %85 : vector<8x128xf32>
    %87 = arith.negf %86 : vector<8x128xf32>
    %88 = math.exp %87 : vector<8x128xf32>
    %cst_26 = arith.constant 1.000000e+00 : f32
    %89 = vector.broadcast %cst_26 : f32 to vector<8x128xf32>
    %90 = arith.addf %89, %88 : vector<8x128xf32>
    %91 = arith.divf %89, %90 : vector<8x128xf32>
    %92 = vector.extract_strided_slice %73 {offsets = [0, 256], sizes = [8, 128], strides = [1, 1]} : vector<8x384xf32> to vector<8x128xf32>
    %93 = vector.extract_strided_slice %75 {offsets = [0, 256], sizes = [8, 128], strides = [1, 1]} : vector<8x384xf32> to vector<8x128xf32>
    %94 = vector.broadcast %3 : vector<1x128xf32> to vector<8x128xf32>
    %95 = arith.addf %93, %94 : vector<8x128xf32>
    %96 = arith.mulf %83, %95 : vector<8x128xf32>
    %97 = arith.addf %92, %96 : vector<8x128xf32>
    %98 = math.tanh %97 : vector<8x128xf32>
    %cst_27 = arith.constant 1.000000e+00 : f32
    %99 = vector.broadcast %cst_27 : f32 to vector<8x128xf32>
    %100 = arith.subf %99, %91 : vector<8x128xf32>
    %101 = arith.mulf %100, %98 : vector<8x128xf32>
    %102 = arith.mulf %91, %70 : vector<8x128xf32>
    %103 = arith.addf %101, %102 : vector<8x128xf32>
    %c3_i32 = arith.constant 3 : i32
    %104 = arith.index_cast %c3_i32 : i32 to index
    %c0_28 = arith.constant 0 : index
    %c0_29 = arith.constant 0 : index
    %105 = vector.load %arg2[%104, %c0_28, %c0_29] : memref<8x8x384xf32, #tpu.memory_space<vmem>>, vector<1x8x384xf32>
    %106 = vector.shape_cast %105 : vector<1x8x384xf32> to vector<8x384xf32>
    %c0_30 = arith.constant 0 : index
    %c0_31 = arith.constant 0 : index
    %107 = vector.load %arg3[%c0_30, %c0_31] : memref<128x384xf32, #tpu.memory_space<vmem>>, vector<128x384xf32>
    %cst_32 = arith.constant dense<0.000000e+00> : vector<8x384xf32>
    %108 = tpu.matmul %103, %107, %cst_32 {dimension_numbers = #tpu.dot_dimension_numbers<[1], [0], [0], [1], [0, 0, 1, 1], [], []>} : vector<8x128xf32>, vector<128x384xf32>, vector<8x384xf32> -> vector<8x384xf32>
    %109 = vector.extract_strided_slice %106 {offsets = [0, 0], sizes = [8, 128], strides = [1, 1]} : vector<8x384xf32> to vector<8x128xf32>
    %110 = vector.extract_strided_slice %108 {offsets = [0, 0], sizes = [8, 128], strides = [1, 1]} : vector<8x384xf32> to vector<8x128xf32>
    %111 = arith.addf %109, %110 : vector<8x128xf32>
    %112 = arith.negf %111 : vector<8x128xf32>
    %113 = math.exp %112 : vector<8x128xf32>
    %cst_33 = arith.constant 1.000000e+00 : f32
    %114 = vector.broadcast %cst_33 : f32 to vector<8x128xf32>
    %115 = arith.addf %114, %113 : vector<8x128xf32>
    %116 = arith.divf %114, %115 : vector<8x128xf32>
    %117 = vector.extract_strided_slice %106 {offsets = [0, 128], sizes = [8, 128], strides = [1, 1]} : vector<8x384xf32> to vector<8x128xf32>
    %118 = vector.extract_strided_slice %108 {offsets = [0, 128], sizes = [8, 128], strides = [1, 1]} : vector<8x384xf32> to vector<8x128xf32>
    %119 = arith.addf %117, %118 : vector<8x128xf32>
    %120 = arith.negf %119 : vector<8x128xf32>
    %121 = math.exp %120 : vector<8x128xf32>
    %cst_34 = arith.constant 1.000000e+00 : f32
    %122 = vector.broadcast %cst_34 : f32 to vector<8x128xf32>
    %123 = arith.addf %122, %121 : vector<8x128xf32>
    %124 = arith.divf %122, %123 : vector<8x128xf32>
    %125 = vector.extract_strided_slice %106 {offsets = [0, 256], sizes = [8, 128], strides = [1, 1]} : vector<8x384xf32> to vector<8x128xf32>
    %126 = vector.extract_strided_slice %108 {offsets = [0, 256], sizes = [8, 128], strides = [1, 1]} : vector<8x384xf32> to vector<8x128xf32>
    %127 = vector.broadcast %3 : vector<1x128xf32> to vector<8x128xf32>
    %128 = arith.addf %126, %127 : vector<8x128xf32>
    %129 = arith.mulf %116, %128 : vector<8x128xf32>
    %130 = arith.addf %125, %129 : vector<8x128xf32>
    %131 = math.tanh %130 : vector<8x128xf32>
    %cst_35 = arith.constant 1.000000e+00 : f32
    %132 = vector.broadcast %cst_35 : f32 to vector<8x128xf32>
    %133 = arith.subf %132, %124 : vector<8x128xf32>
    %134 = arith.mulf %133, %131 : vector<8x128xf32>
    %135 = arith.mulf %124, %103 : vector<8x128xf32>
    %136 = arith.addf %134, %135 : vector<8x128xf32>
    %c4_i32 = arith.constant 4 : i32
    %137 = arith.index_cast %c4_i32 : i32 to index
    %c0_36 = arith.constant 0 : index
    %c0_37 = arith.constant 0 : index
    %138 = vector.load %arg2[%137, %c0_36, %c0_37] : memref<8x8x384xf32, #tpu.memory_space<vmem>>, vector<1x8x384xf32>
    %139 = vector.shape_cast %138 : vector<1x8x384xf32> to vector<8x384xf32>
    %c0_38 = arith.constant 0 : index
    %c0_39 = arith.constant 0 : index
    %140 = vector.load %arg3[%c0_38, %c0_39] : memref<128x384xf32, #tpu.memory_space<vmem>>, vector<128x384xf32>
    %cst_40 = arith.constant dense<0.000000e+00> : vector<8x384xf32>
    %141 = tpu.matmul %136, %140, %cst_40 {dimension_numbers = #tpu.dot_dimension_numbers<[1], [0], [0], [1], [0, 0, 1, 1], [], []>} : vector<8x128xf32>, vector<128x384xf32>, vector<8x384xf32> -> vector<8x384xf32>
    %142 = vector.extract_strided_slice %139 {offsets = [0, 0], sizes = [8, 128], strides = [1, 1]} : vector<8x384xf32> to vector<8x128xf32>
    %143 = vector.extract_strided_slice %141 {offsets = [0, 0], sizes = [8, 128], strides = [1, 1]} : vector<8x384xf32> to vector<8x128xf32>
    %144 = arith.addf %142, %143 : vector<8x128xf32>
    %145 = arith.negf %144 : vector<8x128xf32>
    %146 = math.exp %145 : vector<8x128xf32>
    %cst_41 = arith.constant 1.000000e+00 : f32
    %147 = vector.broadcast %cst_41 : f32 to vector<8x128xf32>
    %148 = arith.addf %147, %146 : vector<8x128xf32>
    %149 = arith.divf %147, %148 : vector<8x128xf32>
    %150 = vector.extract_strided_slice %139 {offsets = [0, 128], sizes = [8, 128], strides = [1, 1]} : vector<8x384xf32> to vector<8x128xf32>
    %151 = vector.extract_strided_slice %141 {offsets = [0, 128], sizes = [8, 128], strides = [1, 1]} : vector<8x384xf32> to vector<8x128xf32>
    %152 = arith.addf %150, %151 : vector<8x128xf32>
    %153 = arith.negf %152 : vector<8x128xf32>
    %154 = math.exp %153 : vector<8x128xf32>
    %cst_42 = arith.constant 1.000000e+00 : f32
    %155 = vector.broadcast %cst_42 : f32 to vector<8x128xf32>
    %156 = arith.addf %155, %154 : vector<8x128xf32>
    %157 = arith.divf %155, %156 : vector<8x128xf32>
    %158 = vector.extract_strided_slice %139 {offsets = [0, 256], sizes = [8, 128], strides = [1, 1]} : vector<8x384xf32> to vector<8x128xf32>
    %159 = vector.extract_strided_slice %141 {offsets = [0, 256], sizes = [8, 128], strides = [1, 1]} : vector<8x384xf32> to vector<8x128xf32>
    %160 = vector.broadcast %3 : vector<1x128xf32> to vector<8x128xf32>
    %161 = arith.addf %159, %160 : vector<8x128xf32>
    %162 = arith.mulf %149, %161 : vector<8x128xf32>
    %163 = arith.addf %158, %162 : vector<8x128xf32>
    %164 = math.tanh %163 : vector<8x128xf32>
    %cst_43 = arith.constant 1.000000e+00 : f32
    %165 = vector.broadcast %cst_43 : f32 to vector<8x128xf32>
    %166 = arith.subf %165, %157 : vector<8x128xf32>
    %167 = arith.mulf %166, %164 : vector<8x128xf32>
    %168 = arith.mulf %157, %136 : vector<8x128xf32>
    %169 = arith.addf %167, %168 : vector<8x128xf32>
    %c5_i32 = arith.constant 5 : i32
    %170 = arith.index_cast %c5_i32 : i32 to index
    %c0_44 = arith.constant 0 : index
    %c0_45 = arith.constant 0 : index
    %171 = vector.load %arg2[%170, %c0_44, %c0_45] : memref<8x8x384xf32, #tpu.memory_space<vmem>>, vector<1x8x384xf32>
    %172 = vector.shape_cast %171 : vector<1x8x384xf32> to vector<8x384xf32>
    %c0_46 = arith.constant 0 : index
    %c0_47 = arith.constant 0 : index
    %173 = vector.load %arg3[%c0_46, %c0_47] : memref<128x384xf32, #tpu.memory_space<vmem>>, vector<128x384xf32>
    %cst_48 = arith.constant dense<0.000000e+00> : vector<8x384xf32>
    %174 = tpu.matmul %169, %173, %cst_48 {dimension_numbers = #tpu.dot_dimension_numbers<[1], [0], [0], [1], [0, 0, 1, 1], [], []>} : vector<8x128xf32>, vector<128x384xf32>, vector<8x384xf32> -> vector<8x384xf32>
    %175 = vector.extract_strided_slice %172 {offsets = [0, 0], sizes = [8, 128], strides = [1, 1]} : vector<8x384xf32> to vector<8x128xf32>
    %176 = vector.extract_strided_slice %174 {offsets = [0, 0], sizes = [8, 128], strides = [1, 1]} : vector<8x384xf32> to vector<8x128xf32>
    %177 = arith.addf %175, %176 : vector<8x128xf32>
    %178 = arith.negf %177 : vector<8x128xf32>
    %179 = math.exp %178 : vector<8x128xf32>
    %cst_49 = arith.constant 1.000000e+00 : f32
    %180 = vector.broadcast %cst_49 : f32 to vector<8x128xf32>
    %181 = arith.addf %180, %179 : vector<8x128xf32>
    %182 = arith.divf %180, %181 : vector<8x128xf32>
    %183 = vector.extract_strided_slice %172 {offsets = [0, 128], sizes = [8, 128], strides = [1, 1]} : vector<8x384xf32> to vector<8x128xf32>
    %184 = vector.extract_strided_slice %174 {offsets = [0, 128], sizes = [8, 128], strides = [1, 1]} : vector<8x384xf32> to vector<8x128xf32>
    %185 = arith.addf %183, %184 : vector<8x128xf32>
    %186 = arith.negf %185 : vector<8x128xf32>
    %187 = math.exp %186 : vector<8x128xf32>
    %cst_50 = arith.constant 1.000000e+00 : f32
    %188 = vector.broadcast %cst_50 : f32 to vector<8x128xf32>
    %189 = arith.addf %188, %187 : vector<8x128xf32>
    %190 = arith.divf %188, %189 : vector<8x128xf32>
    %191 = vector.extract_strided_slice %172 {offsets = [0, 256], sizes = [8, 128], strides = [1, 1]} : vector<8x384xf32> to vector<8x128xf32>
    %192 = vector.extract_strided_slice %174 {offsets = [0, 256], sizes = [8, 128], strides = [1, 1]} : vector<8x384xf32> to vector<8x128xf32>
    %193 = vector.broadcast %3 : vector<1x128xf32> to vector<8x128xf32>
    %194 = arith.addf %192, %193 : vector<8x128xf32>
    %195 = arith.mulf %182, %194 : vector<8x128xf32>
    %196 = arith.addf %191, %195 : vector<8x128xf32>
    %197 = math.tanh %196 : vector<8x128xf32>
    %cst_51 = arith.constant 1.000000e+00 : f32
    %198 = vector.broadcast %cst_51 : f32 to vector<8x128xf32>
    %199 = arith.subf %198, %190 : vector<8x128xf32>
    %200 = arith.mulf %199, %197 : vector<8x128xf32>
    %201 = arith.mulf %190, %169 : vector<8x128xf32>
    %202 = arith.addf %200, %201 : vector<8x128xf32>
    %c6_i32 = arith.constant 6 : i32
    %203 = arith.index_cast %c6_i32 : i32 to index
    %c0_52 = arith.constant 0 : index
    %c0_53 = arith.constant 0 : index
    %204 = vector.load %arg2[%203, %c0_52, %c0_53] : memref<8x8x384xf32, #tpu.memory_space<vmem>>, vector<1x8x384xf32>
    %205 = vector.shape_cast %204 : vector<1x8x384xf32> to vector<8x384xf32>
    %c0_54 = arith.constant 0 : index
    %c0_55 = arith.constant 0 : index
    %206 = vector.load %arg3[%c0_54, %c0_55] : memref<128x384xf32, #tpu.memory_space<vmem>>, vector<128x384xf32>
    %cst_56 = arith.constant dense<0.000000e+00> : vector<8x384xf32>
    %207 = tpu.matmul %202, %206, %cst_56 {dimension_numbers = #tpu.dot_dimension_numbers<[1], [0], [0], [1], [0, 0, 1, 1], [], []>} : vector<8x128xf32>, vector<128x384xf32>, vector<8x384xf32> -> vector<8x384xf32>
    %208 = vector.extract_strided_slice %205 {offsets = [0, 0], sizes = [8, 128], strides = [1, 1]} : vector<8x384xf32> to vector<8x128xf32>
    %209 = vector.extract_strided_slice %207 {offsets = [0, 0], sizes = [8, 128], strides = [1, 1]} : vector<8x384xf32> to vector<8x128xf32>
    %210 = arith.addf %208, %209 : vector<8x128xf32>
    %211 = arith.negf %210 : vector<8x128xf32>
    %212 = math.exp %211 : vector<8x128xf32>
    %cst_57 = arith.constant 1.000000e+00 : f32
    %213 = vector.broadcast %cst_57 : f32 to vector<8x128xf32>
    %214 = arith.addf %213, %212 : vector<8x128xf32>
    %215 = arith.divf %213, %214 : vector<8x128xf32>
    %216 = vector.extract_strided_slice %205 {offsets = [0, 128], sizes = [8, 128], strides = [1, 1]} : vector<8x384xf32> to vector<8x128xf32>
    %217 = vector.extract_strided_slice %207 {offsets = [0, 128], sizes = [8, 128], strides = [1, 1]} : vector<8x384xf32> to vector<8x128xf32>
    %218 = arith.addf %216, %217 : vector<8x128xf32>
    %219 = arith.negf %218 : vector<8x128xf32>
    %220 = math.exp %219 : vector<8x128xf32>
    %cst_58 = arith.constant 1.000000e+00 : f32
    %221 = vector.broadcast %cst_58 : f32 to vector<8x128xf32>
    %222 = arith.addf %221, %220 : vector<8x128xf32>
    %223 = arith.divf %221, %222 : vector<8x128xf32>
    %224 = vector.extract_strided_slice %205 {offsets = [0, 256], sizes = [8, 128], strides = [1, 1]} : vector<8x384xf32> to vector<8x128xf32>
    %225 = vector.extract_strided_slice %207 {offsets = [0, 256], sizes = [8, 128], strides = [1, 1]} : vector<8x384xf32> to vector<8x128xf32>
    %226 = vector.broadcast %3 : vector<1x128xf32> to vector<8x128xf32>
    %227 = arith.addf %225, %226 : vector<8x128xf32>
    %228 = arith.mulf %215, %227 : vector<8x128xf32>
    %229 = arith.addf %224, %228 : vector<8x128xf32>
    %230 = math.tanh %229 : vector<8x128xf32>
    %cst_59 = arith.constant 1.000000e+00 : f32
    %231 = vector.broadcast %cst_59 : f32 to vector<8x128xf32>
    %232 = arith.subf %231, %223 : vector<8x128xf32>
    %233 = arith.mulf %232, %230 : vector<8x128xf32>
    %234 = arith.mulf %223, %202 : vector<8x128xf32>
    %235 = arith.addf %233, %234 : vector<8x128xf32>
    %c7_i32 = arith.constant 7 : i32
    %236 = arith.index_cast %c7_i32 : i32 to index
    %c0_60 = arith.constant 0 : index
    %c0_61 = arith.constant 0 : index
    %237 = vector.load %arg2[%236, %c0_60, %c0_61] : memref<8x8x384xf32, #tpu.memory_space<vmem>>, vector<1x8x384xf32>
    %238 = vector.shape_cast %237 : vector<1x8x384xf32> to vector<8x384xf32>
    %c0_62 = arith.constant 0 : index
    %c0_63 = arith.constant 0 : index
    %239 = vector.load %arg3[%c0_62, %c0_63] : memref<128x384xf32, #tpu.memory_space<vmem>>, vector<128x384xf32>
    %cst_64 = arith.constant dense<0.000000e+00> : vector<8x384xf32>
    %240 = tpu.matmul %235, %239, %cst_64 {dimension_numbers = #tpu.dot_dimension_numbers<[1], [0], [0], [1], [0, 0, 1, 1], [], []>} : vector<8x128xf32>, vector<128x384xf32>, vector<8x384xf32> -> vector<8x384xf32>
    %241 = vector.extract_strided_slice %238 {offsets = [0, 0], sizes = [8, 128], strides = [1, 1]} : vector<8x384xf32> to vector<8x128xf32>
    %242 = vector.extract_strided_slice %240 {offsets = [0, 0], sizes = [8, 128], strides = [1, 1]} : vector<8x384xf32> to vector<8x128xf32>
    %243 = arith.addf %241, %242 : vector<8x128xf32>
    %244 = arith.negf %243 : vector<8x128xf32>
    %245 = math.exp %244 : vector<8x128xf32>
    %cst_65 = arith.constant 1.000000e+00 : f32
    %246 = vector.broadcast %cst_65 : f32 to vector<8x128xf32>
    %247 = arith.addf %246, %245 : vector<8x128xf32>
    %248 = arith.divf %246, %247 : vector<8x128xf32>
    %249 = vector.extract_strided_slice %238 {offsets = [0, 128], sizes = [8, 128], strides = [1, 1]} : vector<8x384xf32> to vector<8x128xf32>
    %250 = vector.extract_strided_slice %240 {offsets = [0, 128], sizes = [8, 128], strides = [1, 1]} : vector<8x384xf32> to vector<8x128xf32>
    %251 = arith.addf %249, %250 : vector<8x128xf32>
    %252 = arith.negf %251 : vector<8x128xf32>
    %253 = math.exp %252 : vector<8x128xf32>
    %cst_66 = arith.constant 1.000000e+00 : f32
    %254 = vector.broadcast %cst_66 : f32 to vector<8x128xf32>
    %255 = arith.addf %254, %253 : vector<8x128xf32>
    %256 = arith.divf %254, %255 : vector<8x128xf32>
    %257 = vector.extract_strided_slice %238 {offsets = [0, 256], sizes = [8, 128], strides = [1, 1]} : vector<8x384xf32> to vector<8x128xf32>
    %258 = vector.extract_strided_slice %240 {offsets = [0, 256], sizes = [8, 128], strides = [1, 1]} : vector<8x384xf32> to vector<8x128xf32>
    %259 = vector.broadcast %3 : vector<1x128xf32> to vector<8x128xf32>
    %260 = arith.addf %258, %259 : vector<8x128xf32>
    %261 = arith.mulf %248, %260 : vector<8x128xf32>
    %262 = arith.addf %257, %261 : vector<8x128xf32>
    %263 = math.tanh %262 : vector<8x128xf32>
    %cst_67 = arith.constant 1.000000e+00 : f32
    %264 = vector.broadcast %cst_67 : f32 to vector<8x128xf32>
    %265 = arith.subf %264, %256 : vector<8x128xf32>
    %266 = arith.mulf %265, %263 : vector<8x128xf32>
    %267 = arith.mulf %256, %235 : vector<8x128xf32>
    %268 = arith.addf %266, %267 : vector<8x128xf32>
    %c8_i32 = arith.constant 8 : i32
    %c0_68 = arith.constant 0 : index
    %c0_69 = arith.constant 0 : index
    %269 = vector.load %arg8[%c0_68, %c0_69] : memref<8x128xf32, #tpu.memory_space<vmem>>, vector<8x128xf32>
    tpu.vector_store %arg8[%c0_68, %c0_69], %268 {strides = array<i32>} : memref<8x128xf32, #tpu.memory_space<vmem>>, vector<8x128xf32>,
    %c0_i32_70 = arith.constant 0 : i32
    %270 = arith.cmpi eq, %arg1, %c0_i32_70 : i32
    %271 = arith.extui %270 : i1 to i32
    %c0_i32_71 = arith.constant 0 : i32
    %272 = arith.cmpi ne, %271, %c0_i32_71 : i32
    scf.if %272 {
      %c0_72 = arith.constant 0 : index
      %c0_73 = arith.constant 0 : index
      %273 = vector.load %arg5[%c0_72, %c0_73] : memref<128x128xf32, #tpu.memory_space<vmem>>, vector<128x128xf32>
      %cst_74 = arith.constant dense<0.000000e+00> : vector<8x128xf32>
      %274 = tpu.matmul %268, %273, %cst_74 {dimension_numbers = #tpu.dot_dimension_numbers<[1], [0], [0], [1], [0, 0, 1, 1], [], []>} : vector<8x128xf32>, vector<128x128xf32>, vector<8x128xf32> -> vector<8x128xf32>
      %c0_75 = arith.constant 0 : index
      %c0_76 = arith.constant 0 : index
      %275 = vector.load %arg6[%c0_75, %c0_76] : memref<1x128xf32, #tpu.memory_space<vmem>>, vector<1x128xf32>
      %276 = vector.broadcast %275 : vector<1x128xf32> to vector<8x128xf32>
      %277 = arith.addf %274, %276 : vector<8x128xf32>
      %cst_77 = arith.constant dense<0xFF800000> : vector<8xf32>
      %278 = vector.multi_reduction <maximumf>, %277, %cst_77 [1] : vector<8x128xf32> to vector<8xf32>
      %279 = vector.shape_cast %278 : vector<8xf32> to vector<8x1xf32>
      %280 = vector.broadcast %279 : vector<8x1xf32> to vector<8x128xf32>
      %281 = arith.subf %277, %280 : vector<8x128xf32>
      %282 = math.exp %281 : vector<8x128xf32>
      %cst_78 = arith.constant dense<0.000000e+00> : vector<8xf32>
      %283 = vector.multi_reduction <add>, %282, %cst_78 [1] : vector<8x128xf32> to vector<8xf32>
      %284 = vector.shape_cast %283 : vector<8xf32> to vector<8x1xf32>
      %285 = vector.broadcast %284 : vector<8x1xf32> to vector<8x128xf32>
      %286 = arith.divf %282, %285 : vector<8x128xf32>
      %c0_79 = arith.constant 0 : index
      %c0_80 = arith.constant 0 : index
      %287 = vector.load %arg7[%c0_79, %c0_80] : memref<8x128xf32, #tpu.memory_space<vmem>>, vector<8x128xf32>
      tpu.vector_store %arg7[%c0_79, %c0_80], %286 {strides = array<i32>} : memref<8x128xf32, #tpu.memory_space<vmem>>, vector<8x128xf32>,
    } else {
    }
    return
  }
  func.func @transform_0(%arg0: i32, %arg1: i32) -> (i32, i32, i32) {
    %c0_i32 = arith.constant 0 : i32
    %c0_i32_0 = arith.constant 0 : i32
    return %arg1, %arg0, %c0_i32 : i32, i32, i32
  }
  func.func @transform_1(%arg0: i32, %arg1: i32) -> (i32, i32) {
    %c0_i32 = arith.constant 0 : i32
    %c0_i32_0 = arith.constant 0 : i32
    %c0_i32_1 = arith.constant 0 : i32
    return %c0_i32, %c0_i32_0 : i32, i32
  }
  func.func @transform_2(%arg0: i32, %arg1: i32) -> (i32, i32) {
    %c0_i32 = arith.constant 0 : i32
    %c0_i32_0 = arith.constant 0 : i32
    %c0_i32_1 = arith.constant 0 : i32
    return %c0_i32, %c0_i32_0 : i32, i32
  }
  func.func @transform_3(%arg0: i32, %arg1: i32) -> (i32, i32) {
    %c0_i32 = arith.constant 0 : i32
    %c0_i32_0 = arith.constant 0 : i32
    %c0_i32_1 = arith.constant 0 : i32
    return %c0_i32, %c0_i32_0 : i32, i32
  }
  func.func @transform_4(%arg0: i32, %arg1: i32) -> (i32, i32) {
    %c0_i32 = arith.constant 0 : i32
    %c0_i32_0 = arith.constant 0 : i32
    %c0_i32_1 = arith.constant 0 : i32
    return %c0_i32, %c0_i32_0 : i32, i32
  }
  func.func @transform_5(%arg0: i32, %arg1: i32) -> (i32, i32) {
    %c0_i32 = arith.constant 0 : i32
    %c0_i32_0 = arith.constant 0 : i32
    return %arg0, %c0_i32 : i32, i32
  }
}

module attributes {stable_mosaic.version = 11 : i64} {
  func.func @_gru_kernel(%arg0: i32, %arg1: i32, %arg2: memref<8x8x384xf32, #tpu.memory_space<vmem>>, %arg3: memref<128x384xf32, #tpu.memory_space<vmem>>, %arg4: memref<1x128xf32, #tpu.memory_space<vmem>>, %arg5: memref<128x128xf32, #tpu.memory_space<vmem>>, %arg6: memref<1x128xf32, #tpu.memory_space<vmem>>, %arg7: memref<8x128xf32, #tpu.memory_space<vmem>>, %arg8: memref<8x128xf32, #tpu.memory_space<vmem>>) attributes {dimension_semantics = [#tpu.dimension_semantics<parallel>, #tpu.dimension_semantics<arbitrary>], iteration_bounds = array<i64: 1, 1>, scalar_prefetch = 0 : i64, scratch_operands = 1 : i64, tpu.core_type = #tpu.core_type<tc>, window_params = [{transform_indices = @transform_0, window_bounds = array<i64: 8, 8, 384>}, {pipeline_mode = #tpu.pipeline_mode<synchronous>, transform_indices = @transform_1, window_bounds = array<i64: 128, 384>}, {pipeline_mode = #tpu.pipeline_mode<synchronous>, transform_indices = @transform_2, window_bounds = array<i64: 1, 128>}, {pipeline_mode = #tpu.pipeline_mode<synchronous>, transform_indices = @transform_3, window_bounds = array<i64: 128, 128>}, {pipeline_mode = #tpu.pipeline_mode<synchronous>, transform_indices = @transform_4, window_bounds = array<i64: 1, 128>}, {transform_indices = @transform_5, window_bounds = array<i64: 8, 128>}]} {
    %c0_i32 = arith.constant 0 : i32
    %0 = arith.cmpi eq, %arg1, %c0_i32 : i32
    %1 = arith.extui %0 : i1 to i32
    %c0_i32_0 = arith.constant 0 : i32
    %2 = arith.cmpi ne, %1, %c0_i32_0 : i32
    scf.if %2 {
      %cst_72 = arith.constant 0.000000e+00 : f32
      %273 = vector.broadcast %cst_72 : f32 to vector<8x128xf32>
      %c0_73 = arith.constant 0 : index
      %c0_74 = arith.constant 0 : index
      %274 = vector.load %arg8[%c0_73, %c0_74] : memref<8x128xf32, #tpu.memory_space<vmem>>, vector<8x128xf32>
      tpu.vector_store %arg8[%c0_73, %c0_74], %273 {strides = array<i32>} : memref<8x128xf32, #tpu.memory_space<vmem>>, vector<8x128xf32>,
    } else {
    }
    %c0 = arith.constant 0 : index
    %c0_1 = arith.constant 0 : index
    %3 = vector.load %arg4[%c0, %c0_1] : memref<1x128xf32, #tpu.memory_space<vmem>>, vector<1x128xf32>
    %c0_2 = arith.constant 0 : index
    %c0_3 = arith.constant 0 : index
    %4 = vector.load %arg8[%c0_2, %c0_3] : memref<8x128xf32, #tpu.memory_space<vmem>>, vector<8x128xf32>
    %c0_i32_4 = arith.constant 0 : i32
    %5 = arith.index_cast %c0_i32_4 : i32 to index
    %c0_5 = arith.constant 0 : index
    %c0_6 = arith.constant 0 : index
    %6 = vector.load %arg2[%5, %c0_5, %c0_6] : memref<8x8x384xf32, #tpu.memory_space<vmem>>, vector<1x8x384xf32>
    %7 = vector.shape_cast %6 : vector<1x8x384xf32> to vector<8x384xf32>
    %c0_7 = arith.constant 0 : index
    %c0_8 = arith.constant 0 : index
    %8 = vector.load %arg3[%c0_7, %c0_8] : memref<128x384xf32, #tpu.memory_space<vmem>>, vector<128x384xf32>
    %cst = arith.constant dense<0.000000e+00> : vector<8x384xf32>
    %9 = tpu.matmul %4, %8, %cst {dimension_numbers = #tpu.dot_dimension_numbers<[1], [0], [0], [1], [0, 0, 1, 1], [], []>} : vector<8x128xf32>, vector<128x384xf32>, vector<8x384xf32> -> vector<8x384xf32>
    %10 = vector.extract_strided_slice %7 {offsets = [0, 0], sizes = [8, 128], strides = [1, 1]} : vector<8x384xf32> to vector<8x128xf32>
    %11 = vector.extract_strided_slice %9 {offsets = [0, 0], sizes = [8, 128], strides = [1, 1]} : vector<8x384xf32> to vector<8x128xf32>
    %12 = arith.addf %10, %11 : vector<8x128xf32>
    %13 = arith.negf %12 : vector<8x128xf32>
    %14 = math.exp %13 : vector<8x128xf32>
    %cst_9 = arith.constant 1.000000e+00 : f32
    %15 = vector.broadcast %cst_9 : f32 to vector<8x128xf32>
    %16 = arith.addf %15, %14 : vector<8x128xf32>
    %17 = arith.divf %15, %16 : vector<8x128xf32>
    %18 = vector.extract_strided_slice %7 {offsets = [0, 128], sizes = [8, 128], strides = [1, 1]} : vector<8x384xf32> to vector<8x128xf32>
    %19 = vector.extract_strided_slice %9 {offsets = [0, 128], sizes = [8, 128], strides = [1, 1]} : vector<8x384xf32> to vector<8x128xf32>
    %20 = arith.addf %18, %19 : vector<8x128xf32>
    %21 = arith.negf %20 : vector<8x128xf32>
    %22 = math.exp %21 : vector<8x128xf32>
    %cst_10 = arith.constant 1.000000e+00 : f32
    %23 = vector.broadcast %cst_10 : f32 to vector<8x128xf32>
    %24 = arith.addf %23, %22 : vector<8x128xf32>
    %25 = arith.divf %23, %24 : vector<8x128xf32>
    %26 = vector.extract_strided_slice %7 {offsets = [0, 256], sizes = [8, 128], strides = [1, 1]} : vector<8x384xf32> to vector<8x128xf32>
    %27 = vector.extract_strided_slice %9 {offsets = [0, 256], sizes = [8, 128], strides = [1, 1]} : vector<8x384xf32> to vector<8x128xf32>
    %28 = vector.broadcast %3 : vector<1x128xf32> to vector<8x128xf32>
    %29 = arith.addf %27, %28 : vector<8x128xf32>
    %30 = arith.mulf %17, %29 : vector<8x128xf32>
    %31 = arith.addf %26, %30 : vector<8x128xf32>
    %32 = math.tanh %31 : vector<8x128xf32>
    %cst_11 = arith.constant 1.000000e+00 : f32
    %33 = vector.broadcast %cst_11 : f32 to vector<8x128xf32>
    %34 = arith.subf %33, %25 : vector<8x128xf32>
    %35 = arith.mulf %34, %32 : vector<8x128xf32>
    %36 = arith.mulf %25, %4 : vector<8x128xf32>
    %37 = arith.addf %35, %36 : vector<8x128xf32>
    %c1_i32 = arith.constant 1 : i32
    %38 = arith.index_cast %c1_i32 : i32 to index
    %c0_12 = arith.constant 0 : index
    %c0_13 = arith.constant 0 : index
    %39 = vector.load %arg2[%38, %c0_12, %c0_13] : memref<8x8x384xf32, #tpu.memory_space<vmem>>, vector<1x8x384xf32>
    %40 = vector.shape_cast %39 : vector<1x8x384xf32> to vector<8x384xf32>
    %c0_14 = arith.constant 0 : index
    %c0_15 = arith.constant 0 : index
    %41 = vector.load %arg3[%c0_14, %c0_15] : memref<128x384xf32, #tpu.memory_space<vmem>>, vector<128x384xf32>
    %cst_16 = arith.constant dense<0.000000e+00> : vector<8x384xf32>
    %42 = tpu.matmul %37, %41, %cst_16 {dimension_numbers = #tpu.dot_dimension_numbers<[1], [0], [0], [1], [0, 0, 1, 1], [], []>} : vector<8x128xf32>, vector<128x384xf32>, vector<8x384xf32> -> vector<8x384xf32>
    %43 = vector.extract_strided_slice %40 {offsets = [0, 0], sizes = [8, 128], strides = [1, 1]} : vector<8x384xf32> to vector<8x128xf32>
    %44 = vector.extract_strided_slice %42 {offsets = [0, 0], sizes = [8, 128], strides = [1, 1]} : vector<8x384xf32> to vector<8x128xf32>
    %45 = arith.addf %43, %44 : vector<8x128xf32>
    %46 = arith.negf %45 : vector<8x128xf32>
    %47 = math.exp %46 : vector<8x128xf32>
    %cst_17 = arith.constant 1.000000e+00 : f32
    %48 = vector.broadcast %cst_17 : f32 to vector<8x128xf32>
    %49 = arith.addf %48, %47 : vector<8x128xf32>
    %50 = arith.divf %48, %49 : vector<8x128xf32>
    %51 = vector.extract_strided_slice %40 {offsets = [0, 128], sizes = [8, 128], strides = [1, 1]} : vector<8x384xf32> to vector<8x128xf32>
    %52 = vector.extract_strided_slice %42 {offsets = [0, 128], sizes = [8, 128], strides = [1, 1]} : vector<8x384xf32> to vector<8x128xf32>
    %53 = arith.addf %51, %52 : vector<8x128xf32>
    %54 = arith.negf %53 : vector<8x128xf32>
    %55 = math.exp %54 : vector<8x128xf32>
    %cst_18 = arith.constant 1.000000e+00 : f32
    %56 = vector.broadcast %cst_18 : f32 to vector<8x128xf32>
    %57 = arith.addf %56, %55 : vector<8x128xf32>
    %58 = arith.divf %56, %57 : vector<8x128xf32>
    %59 = vector.extract_strided_slice %40 {offsets = [0, 256], sizes = [8, 128], strides = [1, 1]} : vector<8x384xf32> to vector<8x128xf32>
    %60 = vector.extract_strided_slice %42 {offsets = [0, 256], sizes = [8, 128], strides = [1, 1]} : vector<8x384xf32> to vector<8x128xf32>
    %61 = vector.broadcast %3 : vector<1x128xf32> to vector<8x128xf32>
    %62 = arith.addf %60, %61 : vector<8x128xf32>
    %63 = arith.mulf %50, %62 : vector<8x128xf32>
    %64 = arith.addf %59, %63 : vector<8x128xf32>
    %65 = math.tanh %64 : vector<8x128xf32>
    %cst_19 = arith.constant 1.000000e+00 : f32
    %66 = vector.broadcast %cst_19 : f32 to vector<8x128xf32>
    %67 = arith.subf %66, %58 : vector<8x128xf32>
    %68 = arith.mulf %67, %65 : vector<8x128xf32>
    %69 = arith.mulf %58, %37 : vector<8x128xf32>
    %70 = arith.addf %68, %69 : vector<8x128xf32>
    %c2_i32 = arith.constant 2 : i32
    %71 = arith.index_cast %c2_i32 : i32 to index
    %c0_20 = arith.constant 0 : index
    %c0_21 = arith.constant 0 : index
    %72 = vector.load %arg2[%71, %c0_20, %c0_21] : memref<8x8x384xf32, #tpu.memory_space<vmem>>, vector<1x8x384xf32>
    %73 = vector.shape_cast %72 : vector<1x8x384xf32> to vector<8x384xf32>
    %c0_22 = arith.constant 0 : index
    %c0_23 = arith.constant 0 : index
    %74 = vector.load %arg3[%c0_22, %c0_23] : memref<128x384xf32, #tpu.memory_space<vmem>>, vector<128x384xf32>
    %cst_24 = arith.constant dense<0.000000e+00> : vector<8x384xf32>
    %75 = tpu.matmul %70, %74, %cst_24 {dimension_numbers = #tpu.dot_dimension_numbers<[1], [0], [0], [1], [0, 0, 1, 1], [], []>} : vector<8x128xf32>, vector<128x384xf32>, vector<8x384xf32> -> vector<8x384xf32>
    %76 = vector.extract_strided_slice %73 {offsets = [0, 0], sizes = [8, 128], strides = [1, 1]} : vector<8x384xf32> to vector<8x128xf32>
    %77 = vector.extract_strided_slice %75 {offsets = [0, 0], sizes = [8, 128], strides = [1, 1]} : vector<8x384xf32> to vector<8x128xf32>
    %78 = arith.addf %76, %77 : vector<8x128xf32>
    %79 = arith.negf %78 : vector<8x128xf32>
    %80 = math.exp %79 : vector<8x128xf32>
    %cst_25 = arith.constant 1.000000e+00 : f32
    %81 = vector.broadcast %cst_25 : f32 to vector<8x128xf32>
    %82 = arith.addf %81, %80 : vector<8x128xf32>
    %83 = arith.divf %81, %82 : vector<8x128xf32>
    %84 = vector.extract_strided_slice %73 {offsets = [0, 128], sizes = [8, 128], strides = [1, 1]} : vector<8x384xf32> to vector<8x128xf32>
    %85 = vector.extract_strided_slice %75 {offsets = [0, 128], sizes = [8, 128], strides = [1, 1]} : vector<8x384xf32> to vector<8x128xf32>
    %86 = arith.addf %84, %85 : vector<8x128xf32>
    %87 = arith.negf %86 : vector<8x128xf32>
    %88 = math.exp %87 : vector<8x128xf32>
    %cst_26 = arith.constant 1.000000e+00 : f32
    %89 = vector.broadcast %cst_26 : f32 to vector<8x128xf32>
    %90 = arith.addf %89, %88 : vector<8x128xf32>
    %91 = arith.divf %89, %90 : vector<8x128xf32>
    %92 = vector.extract_strided_slice %73 {offsets = [0, 256], sizes = [8, 128], strides = [1, 1]} : vector<8x384xf32> to vector<8x128xf32>
    %93 = vector.extract_strided_slice %75 {offsets = [0, 256], sizes = [8, 128], strides = [1, 1]} : vector<8x384xf32> to vector<8x128xf32>
    %94 = vector.broadcast %3 : vector<1x128xf32> to vector<8x128xf32>
    %95 = arith.addf %93, %94 : vector<8x128xf32>
    %96 = arith.mulf %83, %95 : vector<8x128xf32>
    %97 = arith.addf %92, %96 : vector<8x128xf32>
    %98 = math.tanh %97 : vector<8x128xf32>
    %cst_27 = arith.constant 1.000000e+00 : f32
    %99 = vector.broadcast %cst_27 : f32 to vector<8x128xf32>
    %100 = arith.subf %99, %91 : vector<8x128xf32>
    %101 = arith.mulf %100, %98 : vector<8x128xf32>
    %102 = arith.mulf %91, %70 : vector<8x128xf32>
    %103 = arith.addf %101, %102 : vector<8x128xf32>
    %c3_i32 = arith.constant 3 : i32
    %104 = arith.index_cast %c3_i32 : i32 to index
    %c0_28 = arith.constant 0 : index
    %c0_29 = arith.constant 0 : index
    %105 = vector.load %arg2[%104, %c0_28, %c0_29] : memref<8x8x384xf32, #tpu.memory_space<vmem>>, vector<1x8x384xf32>
    %106 = vector.shape_cast %105 : vector<1x8x384xf32> to vector<8x384xf32>
    %c0_30 = arith.constant 0 : index
    %c0_31 = arith.constant 0 : index
    %107 = vector.load %arg3[%c0_30, %c0_31] : memref<128x384xf32, #tpu.memory_space<vmem>>, vector<128x384xf32>
    %cst_32 = arith.constant dense<0.000000e+00> : vector<8x384xf32>
    %108 = tpu.matmul %103, %107, %cst_32 {dimension_numbers = #tpu.dot_dimension_numbers<[1], [0], [0], [1], [0, 0, 1, 1], [], []>} : vector<8x128xf32>, vector<128x384xf32>, vector<8x384xf32> -> vector<8x384xf32>
    %109 = vector.extract_strided_slice %106 {offsets = [0, 0], sizes = [8, 128], strides = [1, 1]} : vector<8x384xf32> to vector<8x128xf32>
    %110 = vector.extract_strided_slice %108 {offsets = [0, 0], sizes = [8, 128], strides = [1, 1]} : vector<8x384xf32> to vector<8x128xf32>
    %111 = arith.addf %109, %110 : vector<8x128xf32>
    %112 = arith.negf %111 : vector<8x128xf32>
    %113 = math.exp %112 : vector<8x128xf32>
    %cst_33 = arith.constant 1.000000e+00 : f32
    %114 = vector.broadcast %cst_33 : f32 to vector<8x128xf32>
    %115 = arith.addf %114, %113 : vector<8x128xf32>
    %116 = arith.divf %114, %115 : vector<8x128xf32>
    %117 = vector.extract_strided_slice %106 {offsets = [0, 128], sizes = [8, 128], strides = [1, 1]} : vector<8x384xf32> to vector<8x128xf32>
    %118 = vector.extract_strided_slice %108 {offsets = [0, 128], sizes = [8, 128], strides = [1, 1]} : vector<8x384xf32> to vector<8x128xf32>
    %119 = arith.addf %117, %118 : vector<8x128xf32>
    %120 = arith.negf %119 : vector<8x128xf32>
    %121 = math.exp %120 : vector<8x128xf32>
    %cst_34 = arith.constant 1.000000e+00 : f32
    %122 = vector.broadcast %cst_34 : f32 to vector<8x128xf32>
    %123 = arith.addf %122, %121 : vector<8x128xf32>
    %124 = arith.divf %122, %123 : vector<8x128xf32>
    %125 = vector.extract_strided_slice %106 {offsets = [0, 256], sizes = [8, 128], strides = [1, 1]} : vector<8x384xf32> to vector<8x128xf32>
    %126 = vector.extract_strided_slice %108 {offsets = [0, 256], sizes = [8, 128], strides = [1, 1]} : vector<8x384xf32> to vector<8x128xf32>
    %127 = vector.broadcast %3 : vector<1x128xf32> to vector<8x128xf32>
    %128 = arith.addf %126, %127 : vector<8x128xf32>
    %129 = arith.mulf %116, %128 : vector<8x128xf32>
    %130 = arith.addf %125, %129 : vector<8x128xf32>
    %131 = math.tanh %130 : vector<8x128xf32>
    %cst_35 = arith.constant 1.000000e+00 : f32
    %132 = vector.broadcast %cst_35 : f32 to vector<8x128xf32>
    %133 = arith.subf %132, %124 : vector<8x128xf32>
    %134 = arith.mulf %133, %131 : vector<8x128xf32>
    %135 = arith.mulf %124, %103 : vector<8x128xf32>
    %136 = arith.addf %134, %135 : vector<8x128xf32>
    %c4_i32 = arith.constant 4 : i32
    %137 = arith.index_cast %c4_i32 : i32 to index
    %c0_36 = arith.constant 0 : index
    %c0_37 = arith.constant 0 : index
    %138 = vector.load %arg2[%137, %c0_36, %c0_37] : memref<8x8x384xf32, #tpu.memory_space<vmem>>, vector<1x8x384xf32>
    %139 = vector.shape_cast %138 : vector<1x8x384xf32> to vector<8x384xf32>
    %c0_38 = arith.constant 0 : index
    %c0_39 = arith.constant 0 : index
    %140 = vector.load %arg3[%c0_38, %c0_39] : memref<128x384xf32, #tpu.memory_space<vmem>>, vector<128x384xf32>
    %cst_40 = arith.constant dense<0.000000e+00> : vector<8x384xf32>
    %141 = tpu.matmul %136, %140, %cst_40 {dimension_numbers = #tpu.dot_dimension_numbers<[1], [0], [0], [1], [0, 0, 1, 1], [], []>} : vector<8x128xf32>, vector<128x384xf32>, vector<8x384xf32> -> vector<8x384xf32>
    %142 = vector.extract_strided_slice %139 {offsets = [0, 0], sizes = [8, 128], strides = [1, 1]} : vector<8x384xf32> to vector<8x128xf32>
    %143 = vector.extract_strided_slice %141 {offsets = [0, 0], sizes = [8, 128], strides = [1, 1]} : vector<8x384xf32> to vector<8x128xf32>
    %144 = arith.addf %142, %143 : vector<8x128xf32>
    %145 = arith.negf %144 : vector<8x128xf32>
    %146 = math.exp %145 : vector<8x128xf32>
    %cst_41 = arith.constant 1.000000e+00 : f32
    %147 = vector.broadcast %cst_41 : f32 to vector<8x128xf32>
    %148 = arith.addf %147, %146 : vector<8x128xf32>
    %149 = arith.divf %147, %148 : vector<8x128xf32>
    %150 = vector.extract_strided_slice %139 {offsets = [0, 128], sizes = [8, 128], strides = [1, 1]} : vector<8x384xf32> to vector<8x128xf32>
    %151 = vector.extract_strided_slice %141 {offsets = [0, 128], sizes = [8, 128], strides = [1, 1]} : vector<8x384xf32> to vector<8x128xf32>
    %152 = arith.addf %150, %151 : vector<8x128xf32>
    %153 = arith.negf %152 : vector<8x128xf32>
    %154 = math.exp %153 : vector<8x128xf32>
    %cst_42 = arith.constant 1.000000e+00 : f32
    %155 = vector.broadcast %cst_42 : f32 to vector<8x128xf32>
    %156 = arith.addf %155, %154 : vector<8x128xf32>
    %157 = arith.divf %155, %156 : vector<8x128xf32>
    %158 = vector.extract_strided_slice %139 {offsets = [0, 256], sizes = [8, 128], strides = [1, 1]} : vector<8x384xf32> to vector<8x128xf32>
    %159 = vector.extract_strided_slice %141 {offsets = [0, 256], sizes = [8, 128], strides = [1, 1]} : vector<8x384xf32> to vector<8x128xf32>
    %160 = vector.broadcast %3 : vector<1x128xf32> to vector<8x128xf32>
    %161 = arith.addf %159, %160 : vector<8x128xf32>
    %162 = arith.mulf %149, %161 : vector<8x128xf32>
    %163 = arith.addf %158, %162 : vector<8x128xf32>
    %164 = math.tanh %163 : vector<8x128xf32>
    %cst_43 = arith.constant 1.000000e+00 : f32
    %165 = vector.broadcast %cst_43 : f32 to vector<8x128xf32>
    %166 = arith.subf %165, %157 : vector<8x128xf32>
    %167 = arith.mulf %166, %164 : vector<8x128xf32>
    %168 = arith.mulf %157, %136 : vector<8x128xf32>
    %169 = arith.addf %167, %168 : vector<8x128xf32>
    %c5_i32 = arith.constant 5 : i32
    %170 = arith.index_cast %c5_i32 : i32 to index
    %c0_44 = arith.constant 0 : index
    %c0_45 = arith.constant 0 : index
    %171 = vector.load %arg2[%170, %c0_44, %c0_45] : memref<8x8x384xf32, #tpu.memory_space<vmem>>, vector<1x8x384xf32>
    %172 = vector.shape_cast %171 : vector<1x8x384xf32> to vector<8x384xf32>
    %c0_46 = arith.constant 0 : index
    %c0_47 = arith.constant 0 : index
    %173 = vector.load %arg3[%c0_46, %c0_47] : memref<128x384xf32, #tpu.memory_space<vmem>>, vector<128x384xf32>
    %cst_48 = arith.constant dense<0.000000e+00> : vector<8x384xf32>
    %174 = tpu.matmul %169, %173, %cst_48 {dimension_numbers = #tpu.dot_dimension_numbers<[1], [0], [0], [1], [0, 0, 1, 1], [], []>} : vector<8x128xf32>, vector<128x384xf32>, vector<8x384xf32> -> vector<8x384xf32>
    %175 = vector.extract_strided_slice %172 {offsets = [0, 0], sizes = [8, 128], strides = [1, 1]} : vector<8x384xf32> to vector<8x128xf32>
    %176 = vector.extract_strided_slice %174 {offsets = [0, 0], sizes = [8, 128], strides = [1, 1]} : vector<8x384xf32> to vector<8x128xf32>
    %177 = arith.addf %175, %176 : vector<8x128xf32>
    %178 = arith.negf %177 : vector<8x128xf32>
    %179 = math.exp %178 : vector<8x128xf32>
    %cst_49 = arith.constant 1.000000e+00 : f32
    %180 = vector.broadcast %cst_49 : f32 to vector<8x128xf32>
    %181 = arith.addf %180, %179 : vector<8x128xf32>
    %182 = arith.divf %180, %181 : vector<8x128xf32>
    %183 = vector.extract_strided_slice %172 {offsets = [0, 128], sizes = [8, 128], strides = [1, 1]} : vector<8x384xf32> to vector<8x128xf32>
    %184 = vector.extract_strided_slice %174 {offsets = [0, 128], sizes = [8, 128], strides = [1, 1]} : vector<8x384xf32> to vector<8x128xf32>
    %185 = arith.addf %183, %184 : vector<8x128xf32>
    %186 = arith.negf %185 : vector<8x128xf32>
    %187 = math.exp %186 : vector<8x128xf32>
    %cst_50 = arith.constant 1.000000e+00 : f32
    %188 = vector.broadcast %cst_50 : f32 to vector<8x128xf32>
    %189 = arith.addf %188, %187 : vector<8x128xf32>
    %190 = arith.divf %188, %189 : vector<8x128xf32>
    %191 = vector.extract_strided_slice %172 {offsets = [0, 256], sizes = [8, 128], strides = [1, 1]} : vector<8x384xf32> to vector<8x128xf32>
    %192 = vector.extract_strided_slice %174 {offsets = [0, 256], sizes = [8, 128], strides = [1, 1]} : vector<8x384xf32> to vector<8x128xf32>
    %193 = vector.broadcast %3 : vector<1x128xf32> to vector<8x128xf32>
    %194 = arith.addf %192, %193 : vector<8x128xf32>
    %195 = arith.mulf %182, %194 : vector<8x128xf32>
    %196 = arith.addf %191, %195 : vector<8x128xf32>
    %197 = math.tanh %196 : vector<8x128xf32>
    %cst_51 = arith.constant 1.000000e+00 : f32
    %198 = vector.broadcast %cst_51 : f32 to vector<8x128xf32>
    %199 = arith.subf %198, %190 : vector<8x128xf32>
    %200 = arith.mulf %199, %197 : vector<8x128xf32>
    %201 = arith.mulf %190, %169 : vector<8x128xf32>
    %202 = arith.addf %200, %201 : vector<8x128xf32>
    %c6_i32 = arith.constant 6 : i32
    %203 = arith.index_cast %c6_i32 : i32 to index
    %c0_52 = arith.constant 0 : index
    %c0_53 = arith.constant 0 : index
    %204 = vector.load %arg2[%203, %c0_52, %c0_53] : memref<8x8x384xf32, #tpu.memory_space<vmem>>, vector<1x8x384xf32>
    %205 = vector.shape_cast %204 : vector<1x8x384xf32> to vector<8x384xf32>
    %c0_54 = arith.constant 0 : index
    %c0_55 = arith.constant 0 : index
    %206 = vector.load %arg3[%c0_54, %c0_55] : memref<128x384xf32, #tpu.memory_space<vmem>>, vector<128x384xf32>
    %cst_56 = arith.constant dense<0.000000e+00> : vector<8x384xf32>
    %207 = tpu.matmul %202, %206, %cst_56 {dimension_numbers = #tpu.dot_dimension_numbers<[1], [0], [0], [1], [0, 0, 1, 1], [], []>} : vector<8x128xf32>, vector<128x384xf32>, vector<8x384xf32> -> vector<8x384xf32>
    %208 = vector.extract_strided_slice %205 {offsets = [0, 0], sizes = [8, 128], strides = [1, 1]} : vector<8x384xf32> to vector<8x128xf32>
    %209 = vector.extract_strided_slice %207 {offsets = [0, 0], sizes = [8, 128], strides = [1, 1]} : vector<8x384xf32> to vector<8x128xf32>
    %210 = arith.addf %208, %209 : vector<8x128xf32>
    %211 = arith.negf %210 : vector<8x128xf32>
    %212 = math.exp %211 : vector<8x128xf32>
    %cst_57 = arith.constant 1.000000e+00 : f32
    %213 = vector.broadcast %cst_57 : f32 to vector<8x128xf32>
    %214 = arith.addf %213, %212 : vector<8x128xf32>
    %215 = arith.divf %213, %214 : vector<8x128xf32>
    %216 = vector.extract_strided_slice %205 {offsets = [0, 128], sizes = [8, 128], strides = [1, 1]} : vector<8x384xf32> to vector<8x128xf32>
    %217 = vector.extract_strided_slice %207 {offsets = [0, 128], sizes = [8, 128], strides = [1, 1]} : vector<8x384xf32> to vector<8x128xf32>
    %218 = arith.addf %216, %217 : vector<8x128xf32>
    %219 = arith.negf %218 : vector<8x128xf32>
    %220 = math.exp %219 : vector<8x128xf32>
    %cst_58 = arith.constant 1.000000e+00 : f32
    %221 = vector.broadcast %cst_58 : f32 to vector<8x128xf32>
    %222 = arith.addf %221, %220 : vector<8x128xf32>
    %223 = arith.divf %221, %222 : vector<8x128xf32>
    %224 = vector.extract_strided_slice %205 {offsets = [0, 256], sizes = [8, 128], strides = [1, 1]} : vector<8x384xf32> to vector<8x128xf32>
    %225 = vector.extract_strided_slice %207 {offsets = [0, 256], sizes = [8, 128], strides = [1, 1]} : vector<8x384xf32> to vector<8x128xf32>
    %226 = vector.broadcast %3 : vector<1x128xf32> to vector<8x128xf32>
    %227 = arith.addf %225, %226 : vector<8x128xf32>
    %228 = arith.mulf %215, %227 : vector<8x128xf32>
    %229 = arith.addf %224, %228 : vector<8x128xf32>
    %230 = math.tanh %229 : vector<8x128xf32>
    %cst_59 = arith.constant 1.000000e+00 : f32
    %231 = vector.broadcast %cst_59 : f32 to vector<8x128xf32>
    %232 = arith.subf %231, %223 : vector<8x128xf32>
    %233 = arith.mulf %232, %230 : vector<8x128xf32>
    %234 = arith.mulf %223, %202 : vector<8x128xf32>
    %235 = arith.addf %233, %234 : vector<8x128xf32>
    %c7_i32 = arith.constant 7 : i32
    %236 = arith.index_cast %c7_i32 : i32 to index
    %c0_60 = arith.constant 0 : index
    %c0_61 = arith.constant 0 : index
    %237 = vector.load %arg2[%236, %c0_60, %c0_61] : memref<8x8x384xf32, #tpu.memory_space<vmem>>, vector<1x8x384xf32>
    %238 = vector.shape_cast %237 : vector<1x8x384xf32> to vector<8x384xf32>
    %c0_62 = arith.constant 0 : index
    %c0_63 = arith.constant 0 : index
    %239 = vector.load %arg3[%c0_62, %c0_63] : memref<128x384xf32, #tpu.memory_space<vmem>>, vector<128x384xf32>
    %cst_64 = arith.constant dense<0.000000e+00> : vector<8x384xf32>
    %240 = tpu.matmul %235, %239, %cst_64 {dimension_numbers = #tpu.dot_dimension_numbers<[1], [0], [0], [1], [0, 0, 1, 1], [], []>} : vector<8x128xf32>, vector<128x384xf32>, vector<8x384xf32> -> vector<8x384xf32>
    %241 = vector.extract_strided_slice %238 {offsets = [0, 0], sizes = [8, 128], strides = [1, 1]} : vector<8x384xf32> to vector<8x128xf32>
    %242 = vector.extract_strided_slice %240 {offsets = [0, 0], sizes = [8, 128], strides = [1, 1]} : vector<8x384xf32> to vector<8x128xf32>
    %243 = arith.addf %241, %242 : vector<8x128xf32>
    %244 = arith.negf %243 : vector<8x128xf32>
    %245 = math.exp %244 : vector<8x128xf32>
    %cst_65 = arith.constant 1.000000e+00 : f32
    %246 = vector.broadcast %cst_65 : f32 to vector<8x128xf32>
    %247 = arith.addf %246, %245 : vector<8x128xf32>
    %248 = arith.divf %246, %247 : vector<8x128xf32>
    %249 = vector.extract_strided_slice %238 {offsets = [0, 128], sizes = [8, 128], strides = [1, 1]} : vector<8x384xf32> to vector<8x128xf32>
    %250 = vector.extract_strided_slice %240 {offsets = [0, 128], sizes = [8, 128], strides = [1, 1]} : vector<8x384xf32> to vector<8x128xf32>
    %251 = arith.addf %249, %250 : vector<8x128xf32>
    %252 = arith.negf %251 : vector<8x128xf32>
    %253 = math.exp %252 : vector<8x128xf32>
    %cst_66 = arith.constant 1.000000e+00 : f32
    %254 = vector.broadcast %cst_66 : f32 to vector<8x128xf32>
    %255 = arith.addf %254, %253 : vector<8x128xf32>
    %256 = arith.divf %254, %255 : vector<8x128xf32>
    %257 = vector.extract_strided_slice %238 {offsets = [0, 256], sizes = [8, 128], strides = [1, 1]} : vector<8x384xf32> to vector<8x128xf32>
    %258 = vector.extract_strided_slice %240 {offsets = [0, 256], sizes = [8, 128], strides = [1, 1]} : vector<8x384xf32> to vector<8x128xf32>
    %259 = vector.broadcast %3 : vector<1x128xf32> to vector<8x128xf32>
    %260 = arith.addf %258, %259 : vector<8x128xf32>
    %261 = arith.mulf %248, %260 : vector<8x128xf32>
    %262 = arith.addf %257, %261 : vector<8x128xf32>
    %263 = math.tanh %262 : vector<8x128xf32>
    %cst_67 = arith.constant 1.000000e+00 : f32
    %264 = vector.broadcast %cst_67 : f32 to vector<8x128xf32>
    %265 = arith.subf %264, %256 : vector<8x128xf32>
    %266 = arith.mulf %265, %263 : vector<8x128xf32>
    %267 = arith.mulf %256, %235 : vector<8x128xf32>
    %268 = arith.addf %266, %267 : vector<8x128xf32>
    %c8_i32 = arith.constant 8 : i32
    %c0_68 = arith.constant 0 : index
    %c0_69 = arith.constant 0 : index
    %269 = vector.load %arg8[%c0_68, %c0_69] : memref<8x128xf32, #tpu.memory_space<vmem>>, vector<8x128xf32>
    tpu.vector_store %arg8[%c0_68, %c0_69], %268 {strides = array<i32>} : memref<8x128xf32, #tpu.memory_space<vmem>>, vector<8x128xf32>,
    %c0_i32_70 = arith.constant 0 : i32
    %270 = arith.cmpi eq, %arg1, %c0_i32_70 : i32
    %271 = arith.extui %270 : i1 to i32
    %c0_i32_71 = arith.constant 0 : i32
    %272 = arith.cmpi ne, %271, %c0_i32_71 : i32
    scf.if %272 {
      %c0_72 = arith.constant 0 : index
      %c0_73 = arith.constant 0 : index
      %273 = vector.load %arg5[%c0_72, %c0_73] : memref<128x128xf32, #tpu.memory_space<vmem>>, vector<128x128xf32>
      %cst_74 = arith.constant dense<0.000000e+00> : vector<8x128xf32>
      %274 = tpu.matmul %268, %273, %cst_74 {dimension_numbers = #tpu.dot_dimension_numbers<[1], [0], [0], [1], [0, 0, 1, 1], [], []>} : vector<8x128xf32>, vector<128x128xf32>, vector<8x128xf32> -> vector<8x128xf32>
      %c0_75 = arith.constant 0 : index
      %c0_76 = arith.constant 0 : index
      %275 = vector.load %arg6[%c0_75, %c0_76] : memref<1x128xf32, #tpu.memory_space<vmem>>, vector<1x128xf32>
      %276 = vector.broadcast %275 : vector<1x128xf32> to vector<8x128xf32>
      %277 = arith.addf %274, %276 : vector<8x128xf32>
      %cst_77 = arith.constant dense<0xFF800000> : vector<8xf32>
      %278 = vector.multi_reduction <maximumf>, %277, %cst_77 [1] : vector<8x128xf32> to vector<8xf32>
      %279 = vector.shape_cast %278 : vector<8xf32> to vector<8x1xf32>
      %280 = vector.broadcast %279 : vector<8x1xf32> to vector<8x128xf32>
      %281 = arith.subf %277, %280 : vector<8x128xf32>
      %282 = math.exp %281 : vector<8x128xf32>
      %cst_78 = arith.constant dense<0.000000e+00> : vector<8xf32>
      %283 = vector.multi_reduction <add>, %282, %cst_78 [1] : vector<8x128xf32> to vector<8xf32>
      %284 = vector.shape_cast %283 : vector<8xf32> to vector<8x1xf32>
      %285 = vector.broadcast %284 : vector<8x1xf32> to vector<8x128xf32>
      %286 = arith.divf %282, %285 : vector<8x128xf32>
      %c0_79 = arith.constant 0 : index
      %c0_80 = arith.constant 0 : index
      %287 = vector.load %arg7[%c0_79, %c0_80] : memref<8x128xf32, #tpu.memory_space<vmem>>, vector<8x128xf32>
      tpu.vector_store %arg7[%c0_79, %c0_80], %286 {strides = array<i32>} : memref<8x128xf32, #tpu.memory_space<vmem>>, vector<8x128xf32>,
    } else {
    }
    return
  }
  func.func @transform_0(%arg0: i32, %arg1: i32) -> (i32, i32, i32) {
    %c0_i32 = arith.constant 0 : i32
    %c0_i32_0 = arith.constant 0 : i32
    return %arg1, %arg0, %c0_i32 : i32, i32, i32
  }
  func.func @transform_1(%arg0: i32, %arg1: i32) -> (i32, i32) {
    %c0_i32 = arith.constant 0 : i32
    %c0_i32_0 = arith.constant 0 : i32
    %c0_i32_1 = arith.constant 0 : i32
    return %c0_i32, %c0_i32_0 : i32, i32
  }
  func.func @transform_2(%arg0: i32, %arg1: i32) -> (i32, i32) {
    %c0_i32 = arith.constant 0 : i32
    %c0_i32_0 = arith.constant 0 : i32
    %c0_i32_1 = arith.constant 0 : i32
    return %c0_i32, %c0_i32_0 : i32, i32
  }
  func.func @transform_3(%arg0: i32, %arg1: i32) -> (i32, i32) {
    %c0_i32 = arith.constant 0 : i32
    %c0_i32_0 = arith.constant 0 : i32
    %c0_i32_1 = arith.constant 0 : i32
    return %c0_i32, %c0_i32_0 : i32, i32
  }
  func.func @transform_4(%arg0: i32, %arg1: i32) -> (i32, i32) {
    %c0_i32 = arith.constant 0 : i32
    %c0_i32_0 = arith.constant 0 : i32
    %c0_i32_1 = arith.constant 0 : i32
    return %c0_i32, %c0_i32_0 : i32, i32
  }
  func.func @transform_5(%arg0: i32, %arg1: i32) -> (i32, i32) {
    %c0_i32 = arith.constant 0 : i32
    %c0_i32_0 = arith.constant 0 : i32
    return %arg0, %c0_i32 : i32, i32
  }
}

</mosaic_0001>

<llo_original>
// kernel: tpu_custom_call.1
$region0: #{tpu_custom_call.1}
  #allocation0 [shape = 'u32[]', space=smem, size = 0x4, offset = 0x4, fixed_abs, tag = 'smem constant byte address 0x4 - core index']
  #allocation1 [shape = 'u32[72,128]{1,0:T(1,128)}', space=vmem, size = 0x9000, scoped, tag = 'internal scratch']
  #allocation2 [shape = 'f32[8,128]{1,0:T(8,128)}', space=vmem, size = 0x1000, scoped, tag = 'scratch operand']
  %s0 = inlined_call_operand.hbm [shape: f32[8,8,384], index: 0, kind: input, shape index: {}]
  %s1 = inlined_call_operand.hbm [shape: f32[128,384], index: 1, kind: input, shape index: {}]
  %s2 = inlined_call_operand.vmem [shape: f32[1,128], index: 2, kind: input, shape index: {}]
  %s3 = inlined_call_operand.hbm [shape: f32[128,128], index: 3, kind: input, shape index: {}]
  %s4 = inlined_call_operand.vmem [shape: f32[1,128], index: 4, kind: input, shape index: {}]
  %s5 = inlined_call_operand.hbm [shape: f32[8,128], index: 5, kind: output, shape index: {}]
  %s6 = sld [smem:[#allocation0]]
  $region50: #{tpu_custom_call.1} parent=0
    _
  %s8 = ssub.s32 1, %s6
  %s9 = scalar_select 0, %s8, %s6
  $region1: #{tpu_custom_call.1} parent=0
    #allocation3 [shape = 'u8[98304]{0}', space=vmem, size = 0x18000, scoped, tag = 'input window, operand 0, single buffered']
    #allocation4 [shape = 's32[1]{0}', space=sflag, size = 0x4, scoped, tag = 'scoped memory for tpu_custom_call.1']
    #allocation5 [shape = 's32[1]{0}', space=sflag, size = 0x4, scoped, tag = 'scoped memory for tpu_custom_call.1']
    #allocation6 [shape = 'u8[196608]{0}', space=vmem, size = 0x30000, scoped, tag = 'input window, operand 1, single buffered']
    #allocation7 [shape = 's32[1]{0}', space=sflag, size = 0x4, scoped, tag = 'scoped memory for tpu_custom_call.1']
    #allocation8 [shape = 'u8[65536]{0}', space=vmem, size = 0x10000, scoped, tag = 'input window, operand 3, single buffered']
    #allocation9 [shape = 'u8[4096]{0}', space=vmem, size = 0x1000, scoped, tag = 'output window, operand 0, single buffered']
    %10 = vsyncpa [#allocation4], 0
    %11 = vsyncpa [#allocation7], 0
    %12 = vsyncpa [#allocation5], 0
    // Predicated region
    $region2: #{tpu_custom_call.1} parent=1 // pred_check
      _
    $region3: #{tpu_custom_call.1} parent=1 // pred_check_branch
      %14 = sbr.rel (0) target = $region5
    $region4: #{tpu_custom_call.1} parent=1 // pred_region
      %16 = vsyncadd [#allocation4], 0
      %s17 = sshll.u32 %s0, 4
      %s18 = int_to_ptr.hbm [resolvable:$true] %s17
      %s19 = sshll.u32 [#allocation3], 4
      %s20 = int_to_ptr.vmem [resolvable:$true] %s19
      %25 = dma.hbm_to_vmem [thread:$0]  %s18, 3072, %s20, [#allocation4], 384, 384, 24
    $region5: #{tpu_custom_call.1} parent=1 // pred_fallthru
      _
    // Predicated region
    $region6: #{tpu_custom_call.1} parent=1 // pred_check
      _
    $region7: #{tpu_custom_call.1} parent=1 // pred_check_branch
      %27 = sbr.rel (0) target = $region9
    $region8: #{tpu_custom_call.1} parent=1 // pred_region
      %29 = vsyncadd [#allocation7], 0
      %s30 = sshll.u32 %s1, 4
      %s31 = int_to_ptr.hbm [resolvable:$true] %s30
      %s32 = sshll.u32 [#allocation6], 4
      %s33 = int_to_ptr.vmem [resolvable:$true] %s32
      %38 = dma.hbm_to_vmem [thread:$0]  %s31, 6144, %s33, [#allocation7], 384, 384, 24
    $region9: #{tpu_custom_call.1} parent=1 // pred_fallthru
      _
    // Predicated region
    $region10: #{tpu_custom_call.1} parent=1 // pred_check
      _
    $region11: #{tpu_custom_call.1} parent=1 // pred_check_branch
      %40 = sbr.rel (0) target = $region13
    $region12: #{tpu_custom_call.1} parent=1 // pred_region
      _
    $region13: #{tpu_custom_call.1} parent=1 // pred_fallthru
      _
    // Predicated region
    $region14: #{tpu_custom_call.1} parent=1 // pred_check
      _
    $region15: #{tpu_custom_call.1} parent=1 // pred_check_branch
      %42 = sbr.rel (0) target = $region17
    $region16: #{tpu_custom_call.1} parent=1 // pred_region
      %44 = vsyncadd [#allocation7], 0
      %s45 = sshll.u32 %s3, 4
      %s46 = int_to_ptr.hbm [resolvable:$true] %s45
      %s47 = sshll.u32 [#allocation8], 4
      %s48 = int_to_ptr.vmem [resolvable:$true] %s47
      %53 = dma.hbm_to_vmem [thread:$0]  %s46, 2048, %s48, [#allocation7], 128, 128, 8
    $region17: #{tpu_custom_call.1} parent=1 // pred_fallthru
      _
    // Predicated region
    $region18: #{tpu_custom_call.1} parent=1 // pred_check
      _
    $region19: #{tpu_custom_call.1} parent=1 // pred_check_branch
      %55 = sbr.rel (0) target = $region21
    $region20: #{tpu_custom_call.1} parent=1 // pred_region
      _
    $region21: #{tpu_custom_call.1} parent=1 // pred_fallthru
      _
    // Predicated region
    $region22: #{tpu_custom_call.1} parent=1 // pred_check
      _
    $region23: #{tpu_custom_call.1} parent=1 // pred_check_branch
      %57 = sbr.rel (0) target = $region25
    $region24: #{tpu_custom_call.1} parent=1 // pred_region
      %59 = dma.done [#allocation4], 3072
    $region25: #{tpu_custom_call.1} parent=1 // pred_fallthru
      _
    // Predicated region
    $region26: #{tpu_custom_call.1} parent=1 // pred_check
      _
    $region27: #{tpu_custom_call.1} parent=1 // pred_check_branch
      %61 = sbr.rel (0) target = $region29
    $region28: #{tpu_custom_call.1} parent=1 // pred_region
      %63 = dma.done [#allocation7], 6144
    $region29: #{tpu_custom_call.1} parent=1 // pred_fallthru
      _
    // Predicated region
    $region30: #{tpu_custom_call.1} parent=1 // pred_check
      _
    $region31: #{tpu_custom_call.1} parent=1 // pred_check_branch
      %65 = sbr.rel (0) target = $region33
    $region32: #{tpu_custom_call.1} parent=1 // pred_region
      %67 = dma.done [#allocation7], 2048
    $region33: #{tpu_custom_call.1} parent=1 // pred_fallthru
      _
    %p68 = scmp.eq.s32.totalorder 0, 0
    // Predicated region
    $region34: #{tpu_custom_call.1} parent=1 // pred_check
      %p69 = pneg %p68
    $region35: #{tpu_custom_call.1} parent=1 // pred_check_branch
      %71 = sbr.rel (%p69) target = $region37
    $region36: #{tpu_custom_call.1} parent=1 // pred_region
      %72 = vst [vmem:[#allocation2] sm:$0xff] 0.0
    $region37: #{tpu_custom_call.1} parent=1 // pred_fallthru
      _
    %v73 = vld [vmem:[%s2] sm:$0x1]
    %v74 = vld [vmem:[#allocation2] sm:$0xff]
    %v75 = vld [vmem:[#allocation3] sm:$0xff]
    %v76 = vld [vmem:[#allocation3 + $0x8] sm:$0xff]
    %v77 = vld [vmem:[#allocation3 + $0x10] sm:$0xff]
    %v78 = vld [vmem:[#allocation6] sm:$0xff]
    %v79 = vld [vmem:[#allocation6 + $0x8] sm:$0xff]
    %v80 = vld [vmem:[#allocation6 + $0x10] sm:$0xff]
    %v81 = vld [vmem:[#allocation6 + $0x18] sm:$0xff]
    %v82 = vld [vmem:[#allocation6 + $0x20] sm:$0xff]
    %v83 = vld [vmem:[#allocation6 + $0x28] sm:$0xff]
    %v84 = vld [vmem:[#allocation6 + $0x30] sm:$0xff]
    %v85 = vld [vmem:[#allocation6 + $0x38] sm:$0xff]
    %v86 = vld [vmem:[#allocation6 + $0x40] sm:$0xff]
    %v87 = vld [vmem:[#allocation6 + $0x48] sm:$0xff]
    %v88 = vld [vmem:[#allocation6 + $0x50] sm:$0xff]
    %v89 = vld [vmem:[#allocation6 + $0x58] sm:$0xff]
    %v90 = vld [vmem:[#allocation6 + $0x60] sm:$0xff]
    %v91 = vld [vmem:[#allocation6 + $0x68] sm:$0xff]
    %v92 = vld [vmem:[#allocation6 + $0x70] sm:$0xff]
    %v93 = vld [vmem:[#allocation6 + $0x78] sm:$0xff]
    %v94 = vld [vmem:[#allocation6 + $0x80] sm:$0xff]
    %v95 = vld [vmem:[#allocation6 + $0x88] sm:$0xff]
    %v96 = vld [vmem:[#allocation6 + $0x90] sm:$0xff]
    %v97 = vld [vmem:[#allocation6 + $0x98] sm:$0xff]
    %v98 = vld [vmem:[#allocation6 + $0xa0] sm:$0xff]
    %v99 = vld [vmem:[#allocation6 + $0xa8] sm:$0xff]
    %v100 = vld [vmem:[#allocation6 + $0xb0] sm:$0xff]
    %v101 = vld [vmem:[#allocation6 + $0xb8] sm:$0xff]
    %v102 = vld [vmem:[#allocation6 + $0xc0] sm:$0xff]
    %v103 = vld [vmem:[#allocation6 + $0xc8] sm:$0xff]
    %v104 = vld [vmem:[#allocation6 + $0xd0] sm:$0xff]
    %v105 = vld [vmem:[#allocation6 + $0xd8] sm:$0xff]
    %v106 = vld [vmem:[#allocation6 + $0xe0] sm:$0xff]
    %v107 = vld [vmem:[#allocation6 + $0xe8] sm:$0xff]
    %v108 = vld [vmem:[#allocation6 + $0xf0] sm:$0xff]
    %v109 = vld [vmem:[#allocation6 + $0xf8] sm:$0xff]
    %v110 = vld [vmem:[#allocation6 + $0x100] sm:$0xff]
    %v111 = vld [vmem:[#allocation6 + $0x108] sm:$0xff]
    %v112 = vld [vmem:[#allocation6 + $0x110] sm:$0xff]
    %v113 = vld [vmem:[#allocation6 + $0x118] sm:$0xff]
    %v114 = vld [vmem:[#allocation6 + $0x120] sm:$0xff]
    %v115 = vld [vmem:[#allocation6 + $0x128] sm:$0xff]
    %v116 = vld [vmem:[#allocation6 + $0x130] sm:$0xff]
    %v117 = vld [vmem:[#allocation6 + $0x138] sm:$0xff]
    %v118 = vld [vmem:[#allocation6 + $0x140] sm:$0xff]
    %v119 = vld [vmem:[#allocation6 + $0x148] sm:$0xff]
    %v120 = vld [vmem:[#allocation6 + $0x150] sm:$0xff]
    %v121 = vld [vmem:[#allocation6 + $0x158] sm:$0xff]
    %v122 = vld [vmem:[#allocation6 + $0x160] sm:$0xff]
    %v123 = vld [vmem:[#allocation6 + $0x168] sm:$0xff]
    %v124 = vld [vmem:[#allocation6 + $0x170] sm:$0xff]
    %v125 = vld [vmem:[#allocation6 + $0x178] sm:$0xff]
    %126 = vmatpush.msra.mxu0 %v123
    %127 = vmatpush.msra.mxu0 %v120
    %128 = vmatpush.msra.mxu0 %v117
    %129 = vmatpush.msra.mxu0 %v114
    %130 = vmatpush.msra.mxu0 %v111
    %131 = vmatpush.msra.mxu0 %v108
    %132 = vmatpush.msra.mxu0 %v105
    %133 = vmatpush.msra.mxu0 %v102
    %134 = vmatpush.msra.mxu0 %v99
    %135 = vmatpush.msra.mxu0 %v96
    %136 = vmatpush.msra.mxu0 %v93
    %137 = vmatpush.msra.mxu0 %v90
    %138 = vmatpush.msra.mxu0 %v87
    %139 = vmatpush.msra.mxu0 %v84
    %140 = vmatpush.msra.mxu0 %v81
    %141 = vmatpush.msra.mxu0 %v78
    %142 = vmatmul.f32.gmra.mxu0 %v74
    %v143 = vpop.f32.mrf.mxu0
    %v144 = vadd.f32 0.0, %v143
    %145 = vdwg.mxu0
    %146 = vmatpush.msra.mxu0 %v124
    %147 = vmatpush.msra.mxu0 %v121
    %148 = vmatpush.msra.mxu0 %v118
    %149 = vmatpush.msra.mxu0 %v115
    %150 = vmatpush.msra.mxu0 %v112
    %151 = vmatpush.msra.mxu0 %v109
    %152 = vmatpush.msra.mxu0 %v106
    %153 = vmatpush.msra.mxu0 %v103
    %154 = vmatpush.msra.mxu0 %v100
    %155 = vmatpush.msra.mxu0 %v97
    %156 = vmatpush.msra.mxu0 %v94
    %157 = vmatpush.msra.mxu0 %v91
    %158 = vmatpush.msra.mxu0 %v88
    %159 = vmatpush.msra.mxu0 %v85
    %160 = vmatpush.msra.mxu0 %v82
    %161 = vmatpush.msra.mxu0 %v79
    %162 = vmatmul.f32.gmra.mxu0 %v74
    %v163 = vpop.f32.mrf.mxu0
    %v164 = vadd.f32 0.0, %v163
    %165 = vdwg.mxu0
    %166 = vmatpush.msra.mxu0 %v125
    %167 = vmatpush.msra.mxu0 %v122
    %168 = vmatpush.msra.mxu0 %v119
    %169 = vmatpush.msra.mxu0 %v116
    %170 = vmatpush.msra.mxu0 %v113
    %171 = vmatpush.msra.mxu0 %v110
    %172 = vmatpush.msra.mxu0 %v107
    %173 = vmatpush.msra.mxu0 %v104
    %174 = vmatpush.msra.mxu0 %v101
    %175 = vmatpush.msra.mxu0 %v98
    %176 = vmatpush.msra.mxu0 %v95
    %177 = vmatpush.msra.mxu0 %v92
    %178 = vmatpush.msra.mxu0 %v89
    %179 = vmatpush.msra.mxu0 %v86
    %180 = vmatpush.msra.mxu0 %v83
    %181 = vmatpush.msra.mxu0 %v80
    %182 = vmatmul.f32.gmra.mxu0 %v74
    %v183 = vpop.f32.mrf.mxu0
    %v184 = vadd.f32 0.0, %v183
    %185 = vdwg.mxu0
    %v186 = vadd.f32 %v75, %v144
    %v187 = vxor.u32 %v186, 2147483648
    %v188 = vmul.f32 %v187, 1.442695
    %v189 = vpow.pop %v188
    %v190 = vadd.f32 %v189, 1.0
    %v191 = vrcp.pop %v190
    %v192 = vmul.f32 %v190, %v191
    %v193 = vsub.f32 1.0, %v192
    %v194 = vmul.f32 %v191, %v193
    %v195 = vadd.f32 %v191, %v194
    %vm196 = vweird.f32 %v190
    %vm197 = vweird.f32 %v191
    %vm198 = vmor %vm196, %vm197
    %v199 = vsel %vm198, %v191, %v195
    %v200 = vand.u32 2147483647, %v190
    %vm201 = vcmp.eq.f32.partialorder %v200, 8.507059e+37
    %v202 = vand.u32 %v190, 2147483648
    %v203 = vor.u32 1.1754944e-38, %v202
    %v204 = vsel %vm201, %v203, %v199
    %v205 = vmul.f32 1.0, %v204
    %v206 = vadd.f32 %v76, %v164
    %v207 = vxor.u32 %v206, 2147483648
    %v208 = vmul.f32 %v207, 1.442695
    %v209 = vpow.pop %v208
    %v210 = vadd.f32 %v209, 1.0
    %v211 = vrcp.pop %v210
    %v212 = vmul.f32 %v210, %v211
    %v213 = vsub.f32 1.0, %v212
    %v214 = vmul.f32 %v211, %v213
    %v215 = vadd.f32 %v211, %v214
    %vm216 = vweird.f32 %v210
    %vm217 = vweird.f32 %v211
    %vm218 = vmor %vm216, %vm217
    %v219 = vsel %vm218, %v211, %v215
    %v220 = vand.u32 2147483647, %v210
    %vm221 = vcmp.eq.f32.partialorder %v220, 8.507059e+37
    %v222 = vand.u32 %v210, 2147483648
    %v223 = vor.u32 1.1754944e-38, %v222
    %v224 = vsel %vm221, %v223, %v219
    %v225 = vmul.f32 1.0, %v224
    %v227 = vperm.slane %v73, 0
    %v229 = vadd.f32 %v184, %v227
    %v230 = vmul.f32 %v205, %v229
    %v231 = vadd.f32 %v77, %v230
    %v232 = vtanh.pop %v231
    %v233 = vsub.f32 1.0, %v225
    %v234 = vmul.f32 %v233, %v232
    %v235 = vmul.f32 %v225, %v74
    %v236 = vadd.f32 %v234, %v235
    %s237 = scalar_lea.vmem [#allocation3], 24
    %v238 = vld [vmem:[%s237] sm:$0xff]
    %v239 = vld [vmem:[%s237 + $0x8] sm:$0xff]
    %v240 = vld [vmem:[%s237 + $0x10] sm:$0xff]
    %241 = vmatpush.msra.mxu0 %v123
    %242 = vmatpush.msra.mxu0 %v120
    %243 = vmatpush.msra.mxu0 %v117
    %244 = vmatpush.msra.mxu0 %v114
    %245 = vmatpush.msra.mxu0 %v111
    %246 = vmatpush.msra.mxu0 %v108
    %247 = vmatpush.msra.mxu0 %v105
    %248 = vmatpush.msra.mxu0 %v102
    %249 = vmatpush.msra.mxu0 %v99
    %250 = vmatpush.msra.mxu0 %v96
    %251 = vmatpush.msra.mxu0 %v93
    %252 = vmatpush.msra.mxu0 %v90
    %253 = vmatpush.msra.mxu0 %v87
    %254 = vmatpush.msra.mxu0 %v84
    %255 = vmatpush.msra.mxu0 %v81
    %256 = vmatpush.msra.mxu0 %v78
    %257 = vmatmul.f32.gmra.mxu0 %v236
    %v258 = vpop.f32.mrf.mxu0
    %v259 = vadd.f32 0.0, %v258
    %260 = vdwg.mxu0
    %261 = vmatpush.msra.mxu0 %v124
    %262 = vmatpush.msra.mxu0 %v121
    %263 = vmatpush.msra.mxu0 %v118
    %264 = vmatpush.msra.mxu0 %v115
    %265 = vmatpush.msra.mxu0 %v112
    %266 = vmatpush.msra.mxu0 %v109
    %267 = vmatpush.msra.mxu0 %v106
    %268 = vmatpush.msra.mxu0 %v103
    %269 = vmatpush.msra.mxu0 %v100
    %270 = vmatpush.msra.mxu0 %v97
    %271 = vmatpush.msra.mxu0 %v94
    %272 = vmatpush.msra.mxu0 %v91
    %273 = vmatpush.msra.mxu0 %v88
    %274 = vmatpush.msra.mxu0 %v85
    %275 = vmatpush.msra.mxu0 %v82
    %276 = vmatpush.msra.mxu0 %v79
    %277 = vmatmul.f32.gmra.mxu0 %v236
    %v278 = vpop.f32.mrf.mxu0
    %v279 = vadd.f32 0.0, %v278
    %280 = vdwg.mxu0
    %281 = vmatpush.msra.mxu0 %v125
    %282 = vmatpush.msra.mxu0 %v122
    %283 = vmatpush.msra.mxu0 %v119
    %284 = vmatpush.msra.mxu0 %v116
    %285 = vmatpush.msra.mxu0 %v113
    %286 = vmatpush.msra.mxu0 %v110
    %287 = vmatpush.msra.mxu0 %v107
    %288 = vmatpush.msra.mxu0 %v104
    %289 = vmatpush.msra.mxu0 %v101
    %290 = vmatpush.msra.mxu0 %v98
    %291 = vmatpush.msra.mxu0 %v95
    %292 = vmatpush.msra.mxu0 %v92
    %293 = vmatpush.msra.mxu0 %v89
    %294 = vmatpush.msra.mxu0 %v86
    %295 = vmatpush.msra.mxu0 %v83
    %296 = vmatpush.msra.mxu0 %v80
    %297 = vmatmul.f32.gmra.mxu0 %v236
    %v298 = vpop.f32.mrf.mxu0
    %v299 = vadd.f32 0.0, %v298
    %300 = vdwg.mxu0
    %v301 = vadd.f32 %v238, %v259
    %v302 = vxor.u32 %v301, 2147483648
    %v303 = vmul.f32 %v302, 1.442695
    %v304 = vpow.pop %v303
    %v305 = vadd.f32 %v304, 1.0
    %v306 = vrcp.pop %v305
    %v307 = vmul.f32 %v305, %v306
    %v308 = vsub.f32 1.0, %v307
    %v309 = vmul.f32 %v306, %v308
    %v310 = vadd.f32 %v306, %v309
    %vm311 = vweird.f32 %v305
    %vm312 = vweird.f32 %v306
    %vm313 = vmor %vm311, %vm312
    %v314 = vsel %vm313, %v306, %v310
    %v315 = vand.u32 2147483647, %v305
    %vm316 = vcmp.eq.f32.partialorder %v315, 8.507059e+37
    %v317 = vand.u32 %v305, 2147483648
    %v318 = vor.u32 1.1754944e-38, %v317
    %v319 = vsel %vm316, %v318, %v314
    %v320 = vmul.f32 1.0, %v319
    %v321 = vadd.f32 %v239, %v279
    %v322 = vxor.u32 %v321, 2147483648
    %v323 = vmul.f32 %v322, 1.442695
    %v324 = vpow.pop %v323
    %v325 = vadd.f32 %v324, 1.0
    %v326 = vrcp.pop %v325
    %v327 = vmul.f32 %v325, %v326
    %v328 = vsub.f32 1.0, %v327
    %v329 = vmul.f32 %v326, %v328
    %v330 = vadd.f32 %v326, %v329
    %vm331 = vweird.f32 %v325
    %vm332 = vweird.f32 %v326
    %vm333 = vmor %vm331, %vm332
    %v334 = vsel %vm333, %v326, %v330
    %v335 = vand.u32 2147483647, %v325
    %vm336 = vcmp.eq.f32.partialorder %v335, 8.507059e+37
    %v337 = vand.u32 %v325, 2147483648
    %v338 = vor.u32 1.1754944e-38, %v337
    %v339 = vsel %vm336, %v338, %v334
    %v340 = vmul.f32 1.0, %v339
    %v341 = vadd.f32 %v299, %v227
    %v342 = vmul.f32 %v320, %v341
    %v343 = vadd.f32 %v240, %v342
    %v344 = vtanh.pop %v343
    %v345 = vsub.f32 1.0, %v340
    %v346 = vmul.f32 %v345, %v344
    %v347 = vmul.f32 %v340, %v236
    %v348 = vadd.f32 %v346, %v347
    %s349 = scalar_lea.vmem [#allocation3], 48
    %v350 = vld [vmem:[%s349] sm:$0xff]
    %v351 = vld [vmem:[%s349 + $0x8] sm:$0xff]
    %v352 = vld [vmem:[%s349 + $0x10] sm:$0xff]
    %353 = vmatpush.msra.mxu0 %v123
    %354 = vmatpush.msra.mxu0 %v120
    %355 = vmatpush.msra.mxu0 %v117
    %356 = vmatpush.msra.mxu0 %v114
    %357 = vmatpush.msra.mxu0 %v111
    %358 = vmatpush.msra.mxu0 %v108
    %359 = vmatpush.msra.mxu0 %v105
    %360 = vmatpush.msra.mxu0 %v102
    %361 = vmatpush.msra.mxu0 %v99
    %362 = vmatpush.msra.mxu0 %v96
    %363 = vmatpush.msra.mxu0 %v93
    %364 = vmatpush.msra.mxu0 %v90
    %365 = vmatpush.msra.mxu0 %v87
    %366 = vmatpush.msra.mxu0 %v84
    %367 = vmatpush.msra.mxu0 %v81
    %368 = vmatpush.msra.mxu0 %v78
    %369 = vmatmul.f32.gmra.mxu0 %v348
    %v370 = vpop.f32.mrf.mxu0
    %v371 = vadd.f32 0.0, %v370
    %372 = vdwg.mxu0
    %373 = vmatpush.msra.mxu0 %v124
    %374 = vmatpush.msra.mxu0 %v121
    %375 = vmatpush.msra.mxu0 %v118
    %376 = vmatpush.msra.mxu0 %v115
    %377 = vmatpush.msra.mxu0 %v112
    %378 = vmatpush.msra.mxu0 %v109
    %379 = vmatpush.msra.mxu0 %v106
    %380 = vmatpush.msra.mxu0 %v103
    %381 = vmatpush.msra.mxu0 %v100
    %382 = vmatpush.msra.mxu0 %v97
    %383 = vmatpush.msra.mxu0 %v94
    %384 = vmatpush.msra.mxu0 %v91
    %385 = vmatpush.msra.mxu0 %v88
    %386 = vmatpush.msra.mxu0 %v85
    %387 = vmatpush.msra.mxu0 %v82
    %388 = vmatpush.msra.mxu0 %v79
    %389 = vmatmul.f32.gmra.mxu0 %v348
    %v390 = vpop.f32.mrf.mxu0
    %v391 = vadd.f32 0.0, %v390
    %392 = vdwg.mxu0
    %393 = vmatpush.msra.mxu0 %v125
    %394 = vmatpush.msra.mxu0 %v122
    %395 = vmatpush.msra.mxu0 %v119
    %396 = vmatpush.msra.mxu0 %v116
    %397 = vmatpush.msra.mxu0 %v113
    %398 = vmatpush.msra.mxu0 %v110
    %399 = vmatpush.msra.mxu0 %v107
    %400 = vmatpush.msra.mxu0 %v104
    %401 = vmatpush.msra.mxu0 %v101
    %402 = vmatpush.msra.mxu0 %v98
    %403 = vmatpush.msra.mxu0 %v95
    %404 = vmatpush.msra.mxu0 %v92
    %405 = vmatpush.msra.mxu0 %v89
    %406 = vmatpush.msra.mxu0 %v86
    %407 = vmatpush.msra.mxu0 %v83
    %408 = vmatpush.msra.mxu0 %v80
    %409 = vmatmul.f32.gmra.mxu0 %v348
    %v410 = vpop.f32.mrf.mxu0
    %v411 = vadd.f32 0.0, %v410
    %412 = vdwg.mxu0
    %v413 = vadd.f32 %v350, %v371
    %v414 = vxor.u32 %v413, 2147483648
    %v415 = vmul.f32 %v414, 1.442695
    %v416 = vpow.pop %v415
    %v417 = vadd.f32 %v416, 1.0
    %v418 = vrcp.pop %v417
    %v419 = vmul.f32 %v417, %v418
    %v420 = vsub.f32 1.0, %v419
    %v421 = vmul.f32 %v418, %v420
    %v422 = vadd.f32 %v418, %v421
    %vm423 = vweird.f32 %v417
    %vm424 = vweird.f32 %v418
    %vm425 = vmor %vm423, %vm424
    %v426 = vsel %vm425, %v418, %v422
    %v427 = vand.u32 2147483647, %v417
    %vm428 = vcmp.eq.f32.partialorder %v427, 8.507059e+37
    %v429 = vand.u32 %v417, 2147483648
    %v430 = vor.u32 1.1754944e-38, %v429
    %v431 = vsel %vm428, %v430, %v426
    %v432 = vmul.f32 1.0, %v431
    %v433 = vadd.f32 %v351, %v391
    %v434 = vxor.u32 %v433, 2147483648
    %v435 = vmul.f32 %v434, 1.442695
    %v436 = vpow.pop %v435
    %v437 = vadd.f32 %v436, 1.0
    %v438 = vrcp.pop %v437
    %v439 = vmul.f32 %v437, %v438
    %v440 = vsub.f32 1.0, %v439
    %v441 = vmul.f32 %v438, %v440
    %v442 = vadd.f32 %v438, %v441
    %vm443 = vweird.f32 %v437
    %vm444 = vweird.f32 %v438
    %vm445 = vmor %vm443, %vm444
    %v446 = vsel %vm445, %v438, %v442
    %v447 = vand.u32 2147483647, %v437
    %vm448 = vcmp.eq.f32.partialorder %v447, 8.507059e+37
    %v449 = vand.u32 %v437, 2147483648
    %v450 = vor.u32 1.1754944e-38, %v449
    %v451 = vsel %vm448, %v450, %v446
    %v452 = vmul.f32 1.0, %v451
    %v453 = vadd.f32 %v411, %v227
    %v454 = vmul.f32 %v432, %v453
    %v455 = vadd.f32 %v352, %v454
    %v456 = vtanh.pop %v455
    %v457 = vsub.f32 1.0, %v452
    %v458 = vmul.f32 %v457, %v456
    %v459 = vmul.f32 %v452, %v348
    %v460 = vadd.f32 %v458, %v459
    %s461 = scalar_lea.vmem [#allocation3], 72
    %v462 = vld [vmem:[%s461] sm:$0xff]
    %v463 = vld [vmem:[%s461 + $0x8] sm:$0xff]
    %v464 = vld [vmem:[%s461 + $0x10] sm:$0xff]
    %465 = vmatpush.msra.mxu0 %v123
    %466 = vmatpush.msra.mxu0 %v120
    %467 = vmatpush.msra.mxu0 %v117
    %468 = vmatpush.msra.mxu0 %v114
    %469 = vmatpush.msra.mxu0 %v111
    %470 = vmatpush.msra.mxu0 %v108
    %471 = vmatpush.msra.mxu0 %v105
    %472 = vmatpush.msra.mxu0 %v102
    %473 = vmatpush.msra.mxu0 %v99
    %474 = vmatpush.msra.mxu0 %v96
    %475 = vmatpush.msra.mxu0 %v93
    %476 = vmatpush.msra.mxu0 %v90
    %477 = vmatpush.msra.mxu0 %v87
    %478 = vmatpush.msra.mxu0 %v84
    %479 = vmatpush.msra.mxu0 %v81
    %480 = vmatpush.msra.mxu0 %v78
    %481 = vmatmul.f32.gmra.mxu0 %v460
    %v482 = vpop.f32.mrf.mxu0
    %v483 = vadd.f32 0.0, %v482
    %484 = vdwg.mxu0
    %485 = vmatpush.msra.mxu0 %v124
    %486 = vmatpush.msra.mxu0 %v121
    %487 = vmatpush.msra.mxu0 %v118
    %488 = vmatpush.msra.mxu0 %v115
    %489 = vmatpush.msra.mxu0 %v112
    %490 = vmatpush.msra.mxu0 %v109
    %491 = vmatpush.msra.mxu0 %v106
    %492 = vmatpush.msra.mxu0 %v103
    %493 = vmatpush.msra.mxu0 %v100
    %494 = vmatpush.msra.mxu0 %v97
    %495 = vmatpush.msra.mxu0 %v94
    %496 = vmatpush.msra.mxu0 %v91
    %497 = vmatpush.msra.mxu0 %v88
    %498 = vmatpush.msra.mxu0 %v85
    %499 = vmatpush.msra.mxu0 %v82
    %500 = vmatpush.msra.mxu0 %v79
    %501 = vmatmul.f32.gmra.mxu0 %v460
    %v502 = vpop.f32.mrf.mxu0
    %v503 = vadd.f32 0.0, %v502
    %504 = vdwg.mxu0
    %505 = vmatpush.msra.mxu0 %v125
    %506 = vmatpush.msra.mxu0 %v122
    %507 = vmatpush.msra.mxu0 %v119
    %508 = vmatpush.msra.mxu0 %v116
    %509 = vmatpush.msra.mxu0 %v113
    %510 = vmatpush.msra.mxu0 %v110
    %511 = vmatpush.msra.mxu0 %v107
    %512 = vmatpush.msra.mxu0 %v104
    %513 = vmatpush.msra.mxu0 %v101
    %514 = vmatpush.msra.mxu0 %v98
    %515 = vmatpush.msra.mxu0 %v95
    %516 = vmatpush.msra.mxu0 %v92
    %517 = vmatpush.msra.mxu0 %v89
    %518 = vmatpush.msra.mxu0 %v86
    %519 = vmatpush.msra.mxu0 %v83
    %520 = vmatpush.msra.mxu0 %v80
    %521 = vmatmul.f32.gmra.mxu0 %v460
    %v522 = vpop.f32.mrf.mxu0
    %v523 = vadd.f32 0.0, %v522
    %524 = vdwg.mxu0
    %v525 = vadd.f32 %v462, %v483
    %v526 = vxor.u32 %v525, 2147483648
    %v527 = vmul.f32 %v526, 1.442695
    %v528 = vpow.pop %v527
    %v529 = vadd.f32 %v528, 1.0
    %v530 = vrcp.pop %v529
    %v531 = vmul.f32 %v529, %v530
    %v532 = vsub.f32 1.0, %v531
    %v533 = vmul.f32 %v530, %v532
    %v534 = vadd.f32 %v530, %v533
    %vm535 = vweird.f32 %v529
    %vm536 = vweird.f32 %v530
    %vm537 = vmor %vm535, %vm536
    %v538 = vsel %vm537, %v530, %v534
    %v539 = vand.u32 2147483647, %v529
    %vm540 = vcmp.eq.f32.partialorder %v539, 8.507059e+37
    %v541 = vand.u32 %v529, 2147483648
    %v542 = vor.u32 1.1754944e-38, %v541
    %v543 = vsel %vm540, %v542, %v538
    %v544 = vmul.f32 1.0, %v543
    %v545 = vadd.f32 %v463, %v503
    %v546 = vxor.u32 %v545, 2147483648
    %v547 = vmul.f32 %v546, 1.442695
    %v548 = vpow.pop %v547
    %v549 = vadd.f32 %v548, 1.0
    %v550 = vrcp.pop %v549
    %v551 = vmul.f32 %v549, %v550
    %v552 = vsub.f32 1.0, %v551
    %v553 = vmul.f32 %v550, %v552
    %v554 = vadd.f32 %v550, %v553
    %vm555 = vweird.f32 %v549
    %vm556 = vweird.f32 %v550
    %vm557 = vmor %vm555, %vm556
    %v558 = vsel %vm557, %v550, %v554
    %v559 = vand.u32 2147483647, %v549
    %vm560 = vcmp.eq.f32.partialorder %v559, 8.507059e+37
    %v561 = vand.u32 %v549, 2147483648
    %v562 = vor.u32 1.1754944e-38, %v561
    %v563 = vsel %vm560, %v562, %v558
    %v564 = vmul.f32 1.0, %v563
    %v565 = vadd.f32 %v523, %v227
    %v566 = vmul.f32 %v544, %v565
    %v567 = vadd.f32 %v464, %v566
    %v568 = vtanh.pop %v567
    %v569 = vsub.f32 1.0, %v564
    %v570 = vmul.f32 %v569, %v568
    %v571 = vmul.f32 %v564, %v460
    %v572 = vadd.f32 %v570, %v571
    %s573 = scalar_lea.vmem [#allocation3], 96
    %v574 = vld [vmem:[%s573] sm:$0xff]
    %v575 = vld [vmem:[%s573 + $0x8] sm:$0xff]
    %v576 = vld [vmem:[%s573 + $0x10] sm:$0xff]
    %577 = vmatpush.msra.mxu0 %v123
    %578 = vmatpush.msra.mxu0 %v120
    %579 = vmatpush.msra.mxu0 %v117
    %580 = vmatpush.msra.mxu0 %v114
    %581 = vmatpush.msra.mxu0 %v111
    %582 = vmatpush.msra.mxu0 %v108
    %583 = vmatpush.msra.mxu0 %v105
    %584 = vmatpush.msra.mxu0 %v102
    %585 = vmatpush.msra.mxu0 %v99
    %586 = vmatpush.msra.mxu0 %v96
    %587 = vmatpush.msra.mxu0 %v93
    %588 = vmatpush.msra.mxu0 %v90
    %589 = vmatpush.msra.mxu0 %v87
    %590 = vmatpush.msra.mxu0 %v84
    %591 = vmatpush.msra.mxu0 %v81
    %592 = vmatpush.msra.mxu0 %v78
    %593 = vmatmul.f32.gmra.mxu0 %v572
    %v594 = vpop.f32.mrf.mxu0
    %v595 = vadd.f32 0.0, %v594
    %596 = vdwg.mxu0
    %597 = vmatpush.msra.mxu0 %v124
    %598 = vmatpush.msra.mxu0 %v121
    %599 = vmatpush.msra.mxu0 %v118
    %600 = vmatpush.msra.mxu0 %v115
    %601 = vmatpush.msra.mxu0 %v112
    %602 = vmatpush.msra.mxu0 %v109
    %603 = vmatpush.msra.mxu0 %v106
    %604 = vmatpush.msra.mxu0 %v103
    %605 = vmatpush.msra.mxu0 %v100
    %606 = vmatpush.msra.mxu0 %v97
    %607 = vmatpush.msra.mxu0 %v94
    %608 = vmatpush.msra.mxu0 %v91
    %609 = vmatpush.msra.mxu0 %v88
    %610 = vmatpush.msra.mxu0 %v85
    %611 = vmatpush.msra.mxu0 %v82
    %612 = vmatpush.msra.mxu0 %v79
    %613 = vmatmul.f32.gmra.mxu0 %v572
    %v614 = vpop.f32.mrf.mxu0
    %v615 = vadd.f32 0.0, %v614
    %616 = vdwg.mxu0
    %617 = vmatpush.msra.mxu0 %v125
    %618 = vmatpush.msra.mxu0 %v122
    %619 = vmatpush.msra.mxu0 %v119
    %620 = vmatpush.msra.mxu0 %v116
    %621 = vmatpush.msra.mxu0 %v113
    %622 = vmatpush.msra.mxu0 %v110
    %623 = vmatpush.msra.mxu0 %v107
    %624 = vmatpush.msra.mxu0 %v104
    %625 = vmatpush.msra.mxu0 %v101
    %626 = vmatpush.msra.mxu0 %v98
    %627 = vmatpush.msra.mxu0 %v95
    %628 = vmatpush.msra.mxu0 %v92
    %629 = vmatpush.msra.mxu0 %v89
    %630 = vmatpush.msra.mxu0 %v86
    %631 = vmatpush.msra.mxu0 %v83
    %632 = vmatpush.msra.mxu0 %v80
    %633 = vmatmul.f32.gmra.mxu0 %v572
    %v634 = vpop.f32.mrf.mxu0
    %v635 = vadd.f32 0.0, %v634
    %636 = vdwg.mxu0
    %v637 = vadd.f32 %v574, %v595
    %v638 = vxor.u32 %v637, 2147483648
    %v639 = vmul.f32 %v638, 1.442695
    %v640 = vpow.pop %v639
    %v641 = vadd.f32 %v640, 1.0
    %v642 = vrcp.pop %v641
    %v643 = vmul.f32 %v641, %v642
    %v644 = vsub.f32 1.0, %v643
    %v645 = vmul.f32 %v642, %v644
    %v646 = vadd.f32 %v642, %v645
    %vm647 = vweird.f32 %v641
    %vm648 = vweird.f32 %v642
    %vm649 = vmor %vm647, %vm648
    %v650 = vsel %vm649, %v642, %v646
    %v651 = vand.u32 2147483647, %v641
    %vm652 = vcmp.eq.f32.partialorder %v651, 8.507059e+37
    %v653 = vand.u32 %v641, 2147483648
    %v654 = vor.u32 1.1754944e-38, %v653
    %v655 = vsel %vm652, %v654, %v650
    %v656 = vmul.f32 1.0, %v655
    %v657 = vadd.f32 %v575, %v615
    %v658 = vxor.u32 %v657, 2147483648
    %v659 = vmul.f32 %v658, 1.442695
    %v660 = vpow.pop %v659
    %v661 = vadd.f32 %v660, 1.0
    %v662 = vrcp.pop %v661
    %v663 = vmul.f32 %v661, %v662
    %v664 = vsub.f32 1.0, %v663
    %v665 = vmul.f32 %v662, %v664
    %v666 = vadd.f32 %v662, %v665
    %vm667 = vweird.f32 %v661
    %vm668 = vweird.f32 %v662
    %vm669 = vmor %vm667, %vm668
    %v670 = vsel %vm669, %v662, %v666
    %v671 = vand.u32 2147483647, %v661
    %vm672 = vcmp.eq.f32.partialorder %v671, 8.507059e+37
    %v673 = vand.u32 %v661, 2147483648
    %v674 = vor.u32 1.1754944e-38, %v673
    %v675 = vsel %vm672, %v674, %v670
    %v676 = vmul.f32 1.0, %v675
    %v677 = vadd.f32 %v635, %v227
    %v678 = vmul.f32 %v656, %v677
    %v679 = vadd.f32 %v576, %v678
    %v680 = vtanh.pop %v679
    %v681 = vsub.f32 1.0, %v676
    %v682 = vmul.f32 %v681, %v680
    %v683 = vmul.f32 %v676, %v572
    %v684 = vadd.f32 %v682, %v683
    %s685 = scalar_lea.vmem [#allocation3], 120
    %v686 = vld [vmem:[%s685] sm:$0xff]
    %v687 = vld [vmem:[%s685 + $0x8] sm:$0xff]
    %v688 = vld [vmem:[%s685 + $0x10] sm:$0xff]
    %689 = vmatpush.msra.mxu0 %v123
    %690 = vmatpush.msra.mxu0 %v120
    %691 = vmatpush.msra.mxu0 %v117
    %692 = vmatpush.msra.mxu0 %v114
    %693 = vmatpush.msra.mxu0 %v111
    %694 = vmatpush.msra.mxu0 %v108
    %695 = vmatpush.msra.mxu0 %v105
    %696 = vmatpush.msra.mxu0 %v102
    %697 = vmatpush.msra.mxu0 %v99
    %698 = vmatpush.msra.mxu0 %v96
    %699 = vmatpush.msra.mxu0 %v93
    %700 = vmatpush.msra.mxu0 %v90
    %701 = vmatpush.msra.mxu0 %v87
    %702 = vmatpush.msra.mxu0 %v84
    %703 = vmatpush.msra.mxu0 %v81
    %704 = vmatpush.msra.mxu0 %v78
    %705 = vmatmul.f32.gmra.mxu0 %v684
    %v706 = vpop.f32.mrf.mxu0
    %v707 = vadd.f32 0.0, %v706
    %708 = vdwg.mxu0
    %709 = vmatpush.msra.mxu0 %v124
    %710 = vmatpush.msra.mxu0 %v121
    %711 = vmatpush.msra.mxu0 %v118
    %712 = vmatpush.msra.mxu0 %v115
    %713 = vmatpush.msra.mxu0 %v112
    %714 = vmatpush.msra.mxu0 %v109
    %715 = vmatpush.msra.mxu0 %v106
    %716 = vmatpush.msra.mxu0 %v103
    %717 = vmatpush.msra.mxu0 %v100
    %718 = vmatpush.msra.mxu0 %v97
    %719 = vmatpush.msra.mxu0 %v94
    %720 = vmatpush.msra.mxu0 %v91
    %721 = vmatpush.msra.mxu0 %v88
    %722 = vmatpush.msra.mxu0 %v85
    %723 = vmatpush.msra.mxu0 %v82
    %724 = vmatpush.msra.mxu0 %v79
    %725 = vmatmul.f32.gmra.mxu0 %v684
    %v726 = vpop.f32.mrf.mxu0
    %v727 = vadd.f32 0.0, %v726
    %728 = vdwg.mxu0
    %729 = vmatpush.msra.mxu0 %v125
    %730 = vmatpush.msra.mxu0 %v122
    %731 = vmatpush.msra.mxu0 %v119
    %732 = vmatpush.msra.mxu0 %v116
    %733 = vmatpush.msra.mxu0 %v113
    %734 = vmatpush.msra.mxu0 %v110
    %735 = vmatpush.msra.mxu0 %v107
    %736 = vmatpush.msra.mxu0 %v104
    %737 = vmatpush.msra.mxu0 %v101
    %738 = vmatpush.msra.mxu0 %v98
    %739 = vmatpush.msra.mxu0 %v95
    %740 = vmatpush.msra.mxu0 %v92
    %741 = vmatpush.msra.mxu0 %v89
    %742 = vmatpush.msra.mxu0 %v86
    %743 = vmatpush.msra.mxu0 %v83
    %744 = vmatpush.msra.mxu0 %v80
    %745 = vmatmul.f32.gmra.mxu0 %v684
    %v746 = vpop.f32.mrf.mxu0
    %v747 = vadd.f32 0.0, %v746
    %748 = vdwg.mxu0
    %v749 = vadd.f32 %v686, %v707
    %v750 = vxor.u32 %v749, 2147483648
    %v751 = vmul.f32 %v750, 1.442695
    %v752 = vpow.pop %v751
    %v753 = vadd.f32 %v752, 1.0
    %v754 = vrcp.pop %v753
    %v755 = vmul.f32 %v753, %v754
    %v756 = vsub.f32 1.0, %v755
    %v757 = vmul.f32 %v754, %v756
    %v758 = vadd.f32 %v754, %v757
    %vm759 = vweird.f32 %v753
    %vm760 = vweird.f32 %v754
    %vm761 = vmor %vm759, %vm760
    %v762 = vsel %vm761, %v754, %v758
    %v763 = vand.u32 2147483647, %v753
    %vm764 = vcmp.eq.f32.partialorder %v763, 8.507059e+37
    %v765 = vand.u32 %v753, 2147483648
    %v766 = vor.u32 1.1754944e-38, %v765
    %v767 = vsel %vm764, %v766, %v762
    %v768 = vmul.f32 1.0, %v767
    %v769 = vadd.f32 %v687, %v727
    %v770 = vxor.u32 %v769, 2147483648
    %v771 = vmul.f32 %v770, 1.442695
    %v772 = vpow.pop %v771
    %v773 = vadd.f32 %v772, 1.0
    %v774 = vrcp.pop %v773
    %v775 = vmul.f32 %v773, %v774
    %v776 = vsub.f32 1.0, %v775
    %v777 = vmul.f32 %v774, %v776
    %v778 = vadd.f32 %v774, %v777
    %vm779 = vweird.f32 %v773
    %vm780 = vweird.f32 %v774
    %vm781 = vmor %vm779, %vm780
    %v782 = vsel %vm781, %v774, %v778
    %v783 = vand.u32 2147483647, %v773
    %vm784 = vcmp.eq.f32.partialorder %v783, 8.507059e+37
    %v785 = vand.u32 %v773, 2147483648
    %v786 = vor.u32 1.1754944e-38, %v785
    %v787 = vsel %vm784, %v786, %v782
    %v788 = vmul.f32 1.0, %v787
    %v789 = vadd.f32 %v747, %v227
    %v790 = vmul.f32 %v768, %v789
    %v791 = vadd.f32 %v688, %v790
    %v792 = vtanh.pop %v791
    %v793 = vsub.f32 1.0, %v788
    %v794 = vmul.f32 %v793, %v792
    %v795 = vmul.f32 %v788, %v684
    %v796 = vadd.f32 %v794, %v795
    %s797 = scalar_lea.vmem [#allocation3], 144
    %v798 = vld [vmem:[%s797] sm:$0xff]
    %v799 = vld [vmem:[%s797 + $0x8] sm:$0xff]
    %v800 = vld [vmem:[%s797 + $0x10] sm:$0xff]
    %801 = vmatpush.msra.mxu0 %v123
    %802 = vmatpush.msra.mxu0 %v120
    %803 = vmatpush.msra.mxu0 %v117
    %804 = vmatpush.msra.mxu0 %v114
    %805 = vmatpush.msra.mxu0 %v111
    %806 = vmatpush.msra.mxu0 %v108
    %807 = vmatpush.msra.mxu0 %v105
    %808 = vmatpush.msra.mxu0 %v102
    %809 = vmatpush.msra.mxu0 %v99
    %810 = vmatpush.msra.mxu0 %v96
    %811 = vmatpush.msra.mxu0 %v93
    %812 = vmatpush.msra.mxu0 %v90
    %813 = vmatpush.msra.mxu0 %v87
    %814 = vmatpush.msra.mxu0 %v84
    %815 = vmatpush.msra.mxu0 %v81
    %816 = vmatpush.msra.mxu0 %v78
    %817 = vmatmul.f32.gmra.mxu0 %v796
    %v818 = vpop.f32.mrf.mxu0
    %v819 = vadd.f32 0.0, %v818
    %820 = vdwg.mxu0
    %821 = vmatpush.msra.mxu0 %v124
    %822 = vmatpush.msra.mxu0 %v121
    %823 = vmatpush.msra.mxu0 %v118
    %824 = vmatpush.msra.mxu0 %v115
    %825 = vmatpush.msra.mxu0 %v112
    %826 = vmatpush.msra.mxu0 %v109
    %827 = vmatpush.msra.mxu0 %v106
    %828 = vmatpush.msra.mxu0 %v103
    %829 = vmatpush.msra.mxu0 %v100
    %830 = vmatpush.msra.mxu0 %v97
    %831 = vmatpush.msra.mxu0 %v94
    %832 = vmatpush.msra.mxu0 %v91
    %833 = vmatpush.msra.mxu0 %v88
    %834 = vmatpush.msra.mxu0 %v85
    %835 = vmatpush.msra.mxu0 %v82
    %836 = vmatpush.msra.mxu0 %v79
    %837 = vmatmul.f32.gmra.mxu0 %v796
    %v838 = vpop.f32.mrf.mxu0
    %v839 = vadd.f32 0.0, %v838
    %840 = vdwg.mxu0
    %841 = vmatpush.msra.mxu0 %v125
    %842 = vmatpush.msra.mxu0 %v122
    %843 = vmatpush.msra.mxu0 %v119
    %844 = vmatpush.msra.mxu0 %v116
    %845 = vmatpush.msra.mxu0 %v113
    %846 = vmatpush.msra.mxu0 %v110
    %847 = vmatpush.msra.mxu0 %v107
    %848 = vmatpush.msra.mxu0 %v104
    %849 = vmatpush.msra.mxu0 %v101
    %850 = vmatpush.msra.mxu0 %v98
    %851 = vmatpush.msra.mxu0 %v95
    %852 = vmatpush.msra.mxu0 %v92
    %853 = vmatpush.msra.mxu0 %v89
    %854 = vmatpush.msra.mxu0 %v86
    %855 = vmatpush.msra.mxu0 %v83
    %856 = vmatpush.msra.mxu0 %v80
    %857 = vmatmul.f32.gmra.mxu0 %v796
    %v858 = vpop.f32.mrf.mxu0
    %v859 = vadd.f32 0.0, %v858
    %860 = vdwg.mxu0
    %v861 = vadd.f32 %v798, %v819
    %v862 = vxor.u32 %v861, 2147483648
    %v863 = vmul.f32 %v862, 1.442695
    %v864 = vpow.pop %v863
    %v865 = vadd.f32 %v864, 1.0
    %v866 = vrcp.pop %v865
    %v867 = vmul.f32 %v865, %v866
    %v868 = vsub.f32 1.0, %v867
    %v869 = vmul.f32 %v866, %v868
    %v870 = vadd.f32 %v866, %v869
    %vm871 = vweird.f32 %v865
    %vm872 = vweird.f32 %v866
    %vm873 = vmor %vm871, %vm872
    %v874 = vsel %vm873, %v866, %v870
    %v875 = vand.u32 2147483647, %v865
    %vm876 = vcmp.eq.f32.partialorder %v875, 8.507059e+37
    %v877 = vand.u32 %v865, 2147483648
    %v878 = vor.u32 1.1754944e-38, %v877
    %v879 = vsel %vm876, %v878, %v874
    %v880 = vmul.f32 1.0, %v879
    %v881 = vadd.f32 %v799, %v839
    %v882 = vxor.u32 %v881, 2147483648
    %v883 = vmul.f32 %v882, 1.442695
    %v884 = vpow.pop %v883
    %v885 = vadd.f32 %v884, 1.0
    %v886 = vrcp.pop %v885
    %v887 = vmul.f32 %v885, %v886
    %v888 = vsub.f32 1.0, %v887
    %v889 = vmul.f32 %v886, %v888
    %v890 = vadd.f32 %v886, %v889
    %vm891 = vweird.f32 %v885
    %vm892 = vweird.f32 %v886
    %vm893 = vmor %vm891, %vm892
    %v894 = vsel %vm893, %v886, %v890
    %v895 = vand.u32 2147483647, %v885
    %vm896 = vcmp.eq.f32.partialorder %v895, 8.507059e+37
    %v897 = vand.u32 %v885, 2147483648
    %v898 = vor.u32 1.1754944e-38, %v897
    %v899 = vsel %vm896, %v898, %v894
    %v900 = vmul.f32 1.0, %v899
    %v901 = vadd.f32 %v859, %v227
    %v902 = vmul.f32 %v880, %v901
    %v903 = vadd.f32 %v800, %v902
    %v904 = vtanh.pop %v903
    %v905 = vsub.f32 1.0, %v900
    %v906 = vmul.f32 %v905, %v904
    %v907 = vmul.f32 %v900, %v796
    %v908 = vadd.f32 %v906, %v907
    %s909 = scalar_lea.vmem [#allocation3], 168
    %v910 = vld [vmem:[%s909] sm:$0xff]
    %v911 = vld [vmem:[%s909 + $0x8] sm:$0xff]
    %v912 = vld [vmem:[%s909 + $0x10] sm:$0xff]
    %913 = vmatpush.msra.mxu0 %v123
    %914 = vmatpush.msra.mxu0 %v120
    %915 = vmatpush.msra.mxu0 %v117
    %916 = vmatpush.msra.mxu0 %v114
    %917 = vmatpush.msra.mxu0 %v111
    %918 = vmatpush.msra.mxu0 %v108
    %919 = vmatpush.msra.mxu0 %v105
    %920 = vmatpush.msra.mxu0 %v102
    %921 = vmatpush.msra.mxu0 %v99
    %922 = vmatpush.msra.mxu0 %v96
    %923 = vmatpush.msra.mxu0 %v93
    %924 = vmatpush.msra.mxu0 %v90
    %925 = vmatpush.msra.mxu0 %v87
    %926 = vmatpush.msra.mxu0 %v84
    %927 = vmatpush.msra.mxu0 %v81
    %928 = vmatpush.msra.mxu0 %v78
    %929 = vmatmul.f32.gmra.mxu0 %v908
    %v930 = vpop.f32.mrf.mxu0
    %v931 = vadd.f32 0.0, %v930
    %932 = vdwg.mxu0
    %933 = vmatpush.msra.mxu0 %v124
    %934 = vmatpush.msra.mxu0 %v121
    %935 = vmatpush.msra.mxu0 %v118
    %936 = vmatpush.msra.mxu0 %v115
    %937 = vmatpush.msra.mxu0 %v112
    %938 = vmatpush.msra.mxu0 %v109
    %939 = vmatpush.msra.mxu0 %v106
    %940 = vmatpush.msra.mxu0 %v103
    %941 = vmatpush.msra.mxu0 %v100
    %942 = vmatpush.msra.mxu0 %v97
    %943 = vmatpush.msra.mxu0 %v94
    %944 = vmatpush.msra.mxu0 %v91
    %945 = vmatpush.msra.mxu0 %v88
    %946 = vmatpush.msra.mxu0 %v85
    %947 = vmatpush.msra.mxu0 %v82
    %948 = vmatpush.msra.mxu0 %v79
    %949 = vmatmul.f32.gmra.mxu0 %v908
    %v950 = vpop.f32.mrf.mxu0
    %v951 = vadd.f32 0.0, %v950
    %952 = vdwg.mxu0
    %953 = vmatpush.msra.mxu0 %v125
    %954 = vmatpush.msra.mxu0 %v122
    %955 = vmatpush.msra.mxu0 %v119
    %956 = vmatpush.msra.mxu0 %v116
    %957 = vmatpush.msra.mxu0 %v113
    %958 = vmatpush.msra.mxu0 %v110
    %959 = vmatpush.msra.mxu0 %v107
    %960 = vmatpush.msra.mxu0 %v104
    %961 = vmatpush.msra.mxu0 %v101
    %962 = vmatpush.msra.mxu0 %v98
    %963 = vmatpush.msra.mxu0 %v95
    %964 = vmatpush.msra.mxu0 %v92
    %965 = vmatpush.msra.mxu0 %v89
    %966 = vmatpush.msra.mxu0 %v86
    %967 = vmatpush.msra.mxu0 %v83
    %968 = vmatpush.msra.mxu0 %v80
    %969 = vmatmul.f32.gmra.mxu0 %v908
    %v970 = vpop.f32.mrf.mxu0
    %v971 = vadd.f32 0.0, %v970
    %972 = vdwg.mxu0
    %v973 = vadd.f32 %v910, %v931
    %v974 = vxor.u32 %v973, 2147483648
    %v975 = vmul.f32 %v974, 1.442695
    %v976 = vpow.pop %v975
    %v977 = vadd.f32 %v976, 1.0
    %v978 = vrcp.pop %v977
    %v979 = vmul.f32 %v977, %v978
    %v980 = vsub.f32 1.0, %v979
    %v981 = vmul.f32 %v978, %v980
    %v982 = vadd.f32 %v978, %v981
    %vm983 = vweird.f32 %v977
    %vm984 = vweird.f32 %v978
    %vm985 = vmor %vm983, %vm984
    %v986 = vsel %vm985, %v978, %v982
    %v987 = vand.u32 2147483647, %v977
    %vm988 = vcmp.eq.f32.partialorder %v987, 8.507059e+37
    %v989 = vand.u32 %v977, 2147483648
    %v990 = vor.u32 1.1754944e-38, %v989
    %v991 = vsel %vm988, %v990, %v986
    %v992 = vmul.f32 1.0, %v991
    %v993 = vadd.f32 %v911, %v951
    %v994 = vxor.u32 %v993, 2147483648
    %v995 = vmul.f32 %v994, 1.442695
    %v996 = vpow.pop %v995
    %v997 = vadd.f32 %v996, 1.0
    %v998 = vrcp.pop %v997
    %v999 = vmul.f32 %v997, %v998
    %v1000 = vsub.f32 1.0, %v999
    %v1001 = vmul.f32 %v998, %v1000
    %v1002 = vadd.f32 %v998, %v1001
    %vm1003 = vweird.f32 %v997
    %vm1004 = vweird.f32 %v998
    %vm1005 = vmor %vm1003, %vm1004
    %v1006 = vsel %vm1005, %v998, %v1002
    %v1007 = vand.u32 2147483647, %v997
    %vm1008 = vcmp.eq.f32.partialorder %v1007, 8.507059e+37
    %v1009 = vand.u32 %v997, 2147483648
    %v1010 = vor.u32 1.1754944e-38, %v1009
    %v1011 = vsel %vm1008, %v1010, %v1006
    %v1012 = vmul.f32 1.0, %v1011
    %v1013 = vadd.f32 %v971, %v227
    %v1014 = vmul.f32 %v992, %v1013
    %v1015 = vadd.f32 %v912, %v1014
    %v1016 = vtanh.pop %v1015
    %v1017 = vsub.f32 1.0, %v1012
    %v1018 = vmul.f32 %v1017, %v1016
    %v1019 = vmul.f32 %v1012, %v908
    %v1020 = vadd.f32 %v1018, %v1019
    %1021 = vst [vmem:[#allocation2] sm:$0xff] %v1020
    // Predicated region
    $region38: #{tpu_custom_call.1} parent=1 // pred_check
      %p1022 = pneg %p68
    $region39: #{tpu_custom_call.1} parent=1 // pred_check_branch
      %1024 = sbr.rel (%p1022) target = $region41
    $region40: #{tpu_custom_call.1} parent=1 // pred_region
      %v1025 = vld [vmem:[#allocation8] sm:$0xff]
      %v1026 = vld [vmem:[#allocation8 + $0x8] sm:$0xff]
      %v1027 = vld [vmem:[#allocation8 + $0x10] sm:$0xff]
      %v1028 = vld [vmem:[#allocation8 + $0x18] sm:$0xff]
      %v1029 = vld [vmem:[#allocation8 + $0x20] sm:$0xff]
      %v1030 = vld [vmem:[#allocation8 + $0x28] sm:$0xff]
      %v1031 = vld [vmem:[#allocation8 + $0x30] sm:$0xff]
      %v1032 = vld [vmem:[#allocation8 + $0x38] sm:$0xff]
      %v1033 = vld [vmem:[#allocation8 + $0x40] sm:$0xff]
      %v1034 = vld [vmem:[#allocation8 + $0x48] sm:$0xff]
      %v1035 = vld [vmem:[#allocation8 + $0x50] sm:$0xff]
      %v1036 = vld [vmem:[#allocation8 + $0x58] sm:$0xff]
      %v1037 = vld [vmem:[#allocation8 + $0x60] sm:$0xff]
      %v1038 = vld [vmem:[#allocation8 + $0x68] sm:$0xff]
      %v1039 = vld [vmem:[#allocation8 + $0x70] sm:$0xff]
      %v1040 = vld [vmem:[#allocation8 + $0x78] sm:$0xff]
      %v1041 = vld [vmem:[%s4] sm:$0x1]
      %v1043 = vperm.slane %v1041, 0
      %1045 = vmatpush.msra.mxu0 %v1040
      %1046 = vmatpush.msra.mxu0 %v1039
      %1047 = vmatpush.msra.mxu0 %v1038
      %1048 = vmatpush.msra.mxu0 %v1037
      %1049 = vmatpush.msra.mxu0 %v1036
      %1050 = vmatpush.msra.mxu0 %v1035
      %1051 = vmatpush.msra.mxu0 %v1034
      %1052 = vmatpush.msra.mxu0 %v1033
      %1053 = vmatpush.msra.mxu0 %v1032
      %1054 = vmatpush.msra.mxu0 %v1031
      %1055 = vmatpush.msra.mxu0 %v1030
      %1056 = vmatpush.msra.mxu0 %v1029
      %1057 = vmatpush.msra.mxu0 %v1028
      %1058 = vmatpush.msra.mxu0 %v1027
      %1059 = vmatpush.msra.mxu0 %v1026
      %1060 = vmatpush.msra.mxu0 %v1025
      %1061 = vmatmul.f32.gmra.mxu0 %v1020
      %v1062 = vpop.f32.mrf.mxu0
      %v1063 = vadd.f32 %v1043, %v1062
      %1064 = vdwg.mxu0
      %1065 = vmax.xlane.f32.xlu0 %v1063
      %v1066 = vpop.xlane.xlu0 %1065
      %v1067 = vsub.f32 %v1063, %v1066
      %v1068 = vmul.f32 %v1067, 1.442695
      %v1069 = vpow.pop %v1068
      %1070 = vadd.xlane.f32.xlu0 %v1069
      %v1071 = vpop.xlane.xlu0 %1070
      %v1072 = vrcp.pop %v1071
      %v1073 = vmul.f32 %v1071, %v1072
      %v1074 = vsub.f32 1.0, %v1073
      %v1075 = vmul.f32 %v1072, %v1074
      %v1076 = vadd.f32 %v1072, %v1075
      %vm1077 = vweird.f32 %v1071
      %vm1078 = vweird.f32 %v1072
      %vm1079 = vmor %vm1077, %vm1078
      %v1080 = vsel %vm1079, %v1072, %v1076
      %v1081 = vand.u32 2147483647, %v1071
      %vm1082 = vcmp.eq.f32.partialorder %v1081, 8.507059e+37
      %v1083 = vand.u32 %v1071, 2147483648
      %v1084 = vor.u32 1.1754944e-38, %v1083
      %v1085 = vsel %vm1082, %v1084, %v1080
      %v1086 = vmul.f32 %v1069, %v1085
      %1087 = vst [vmem:[#allocation9] sm:$0xff] %v1086
    $region41: #{tpu_custom_call.1} parent=1 // pred_fallthru
      _
    // Predicated region
    $region42: #{tpu_custom_call.1} parent=1 // pred_check
      _
    $region43: #{tpu_custom_call.1} parent=1 // pred_check_branch
      %1089 = sbr.rel (0) target = $region45
    $region44: #{tpu_custom_call.1} parent=1 // pred_region
      %1091 = vsyncadd [#allocation5], 0
      %s1093 = sshll.u32 [#allocation9], 4
      %s1094 = int_to_ptr.vmem [resolvable:$true] %s1093
      %s1095 = sshll.u32 %s5, 4
      %s1096 = int_to_ptr.hbm [resolvable:$true] %s1095
      %1098 = dma.vmem_to_hbm [thread:$0]  %s1094, 128, %s1096, [#allocation5]
    $region45: #{tpu_custom_call.1} parent=1 // pred_fallthru
      _
    // Predicated region
    $region46: #{tpu_custom_call.1} parent=1 // pred_check
      _
    $region47: #{tpu_custom_call.1} parent=1 // pred_check_branch
      %1100 = sbr.rel (0) target = $region49
    $region48: #{tpu_custom_call.1} parent=1 // pred_region
      %1102 = dma.done [#allocation5], 128
    $region49: #{tpu_custom_call.1} parent=1 // pred_fallthru
      _
    %1103 = vsyncpa [#allocation4], 1
    %1104 = vsyncpa [#allocation7], 1
    %1105 = vsyncpa [#allocation5], 1

// kernel: tpu_custom_call.1
$region0: #{tpu_custom_call.1}
  #allocation0 [shape = 'u32[]', space=smem, size = 0x4, offset = 0x4, fixed_abs, tag = 'smem constant byte address 0x4 - core index']
  #allocation1 [shape = 'u32[72,128]{1,0:T(1,128)}', space=vmem, size = 0x9000, scoped, tag = 'internal scratch']
  #allocation2 [shape = 'f32[8,128]{1,0:T(8,128)}', space=vmem, size = 0x1000, scoped, tag = 'scratch operand']
  %s0 = inlined_call_operand.hbm [shape: f32[8,8,384], index: 0, kind: input, shape index: {}]
  %s1 = inlined_call_operand.hbm [shape: f32[128,384], index: 1, kind: input, shape index: {}]
  %s2 = inlined_call_operand.vmem [shape: f32[1,128], index: 2, kind: input, shape index: {}]
  %s3 = inlined_call_operand.hbm [shape: f32[128,128], index: 3, kind: input, shape index: {}]
  %s4 = inlined_call_operand.vmem [shape: f32[1,128], index: 4, kind: input, shape index: {}]
  %s5 = inlined_call_operand.hbm [shape: f32[8,128], index: 5, kind: output, shape index: {}]
  %s6 = sld [smem:[#allocation0]]
  $region50: #{tpu_custom_call.1} parent=0
    _
  %s8 = ssub.s32 1, %s6
  %s9 = scalar_select 0, %s8, %s6
  $region1: #{tpu_custom_call.1} parent=0
    #allocation3 [shape = 'u8[98304]{0}', space=vmem, size = 0x18000, scoped, tag = 'input window, operand 0, single buffered']
    #allocation4 [shape = 's32[1]{0}', space=sflag, size = 0x4, scoped, tag = 'scoped memory for tpu_custom_call.1']
    #allocation5 [shape = 's32[1]{0}', space=sflag, size = 0x4, scoped, tag = 'scoped memory for tpu_custom_call.1']
    #allocation6 [shape = 'u8[196608]{0}', space=vmem, size = 0x30000, scoped, tag = 'input window, operand 1, single buffered']
    #allocation7 [shape = 's32[1]{0}', space=sflag, size = 0x4, scoped, tag = 'scoped memory for tpu_custom_call.1']
    #allocation8 [shape = 'u8[65536]{0}', space=vmem, size = 0x10000, scoped, tag = 'input window, operand 3, single buffered']
    #allocation9 [shape = 'u8[4096]{0}', space=vmem, size = 0x1000, scoped, tag = 'output window, operand 0, single buffered']
    %10 = vsyncpa [#allocation4], 0
    %11 = vsyncpa [#allocation7], 0
    %12 = vsyncpa [#allocation5], 0
    // Predicated region
    $region2: #{tpu_custom_call.1} parent=1 // pred_check
      _
    $region3: #{tpu_custom_call.1} parent=1 // pred_check_branch
      %14 = sbr.rel (0) target = $region5
    $region4: #{tpu_custom_call.1} parent=1 // pred_region
      %16 = vsyncadd [#allocation4], 0
      %s17 = sshll.u32 %s0, 4
      %s18 = int_to_ptr.hbm [resolvable:$true] %s17
      %s19 = sshll.u32 [#allocation3], 4
      %s20 = int_to_ptr.vmem [resolvable:$true] %s19
      %25 = dma.hbm_to_vmem [thread:$0]  %s18, 3072, %s20, [#allocation4], 384, 384, 24
    $region5: #{tpu_custom_call.1} parent=1 // pred_fallthru
      _
    // Predicated region
    $region6: #{tpu_custom_call.1} parent=1 // pred_check
      _
    $region7: #{tpu_custom_call.1} parent=1 // pred_check_branch
      %27 = sbr.rel (0) target = $region9
    $region8: #{tpu_custom_call.1} parent=1 // pred_region
      %29 = vsyncadd [#allocation7], 0
      %s30 = sshll.u32 %s1, 4
      %s31 = int_to_ptr.hbm [resolvable:$true] %s30
      %s32 = sshll.u32 [#allocation6], 4
      %s33 = int_to_ptr.vmem [resolvable:$true] %s32
      %38 = dma.hbm_to_vmem [thread:$0]  %s31, 6144, %s33, [#allocation7], 384, 384, 24
    $region9: #{tpu_custom_call.1} parent=1 // pred_fallthru
      _
    // Predicated region
    $region10: #{tpu_custom_call.1} parent=1 // pred_check
      _
    $region11: #{tpu_custom_call.1} parent=1 // pred_check_branch
      %40 = sbr.rel (0) target = $region13
    $region12: #{tpu_custom_call.1} parent=1 // pred_region
      _
    $region13: #{tpu_custom_call.1} parent=1 // pred_fallthru
      _
    // Predicated region
    $region14: #{tpu_custom_call.1} parent=1 // pred_check
      _
    $region15: #{tpu_custom_call.1} parent=1 // pred_check_branch
      %42 = sbr.rel (0) target = $region17
    $region16: #{tpu_custom_call.1} parent=1 // pred_region
      %44 = vsyncadd [#allocation7], 0
      %s45 = sshll.u32 %s3, 4
      %s46 = int_to_ptr.hbm [resolvable:$true] %s45
      %s47 = sshll.u32 [#allocation8], 4
      %s48 = int_to_ptr.vmem [resolvable:$true] %s47
      %53 = dma.hbm_to_vmem [thread:$0]  %s46, 2048, %s48, [#allocation7], 128, 128, 8
    $region17: #{tpu_custom_call.1} parent=1 // pred_fallthru
      _
    // Predicated region
    $region18: #{tpu_custom_call.1} parent=1 // pred_check
      _
    $region19: #{tpu_custom_call.1} parent=1 // pred_check_branch
      %55 = sbr.rel (0) target = $region21
    $region20: #{tpu_custom_call.1} parent=1 // pred_region
      _
    $region21: #{tpu_custom_call.1} parent=1 // pred_fallthru
      _
    // Predicated region
    $region22: #{tpu_custom_call.1} parent=1 // pred_check
      _
    $region23: #{tpu_custom_call.1} parent=1 // pred_check_branch
      %57 = sbr.rel (0) target = $region25
    $region24: #{tpu_custom_call.1} parent=1 // pred_region
      %59 = dma.done [#allocation4], 3072
    $region25: #{tpu_custom_call.1} parent=1 // pred_fallthru
      _
    // Predicated region
    $region26: #{tpu_custom_call.1} parent=1 // pred_check
      _
    $region27: #{tpu_custom_call.1} parent=1 // pred_check_branch
      %61 = sbr.rel (0) target = $region29
    $region28: #{tpu_custom_call.1} parent=1 // pred_region
      %63 = dma.done [#allocation7], 6144
    $region29: #{tpu_custom_call.1} parent=1 // pred_fallthru
      _
    // Predicated region
    $region30: #{tpu_custom_call.1} parent=1 // pred_check
      _
    $region31: #{tpu_custom_call.1} parent=1 // pred_check_branch
      %65 = sbr.rel (0) target = $region33
    $region32: #{tpu_custom_call.1} parent=1 // pred_region
      %67 = dma.done [#allocation7], 2048
    $region33: #{tpu_custom_call.1} parent=1 // pred_fallthru
      _
    %p68 = scmp.eq.s32.totalorder 0, 0
    // Predicated region
    $region34: #{tpu_custom_call.1} parent=1 // pred_check
      %p69 = pneg %p68
    $region35: #{tpu_custom_call.1} parent=1 // pred_check_branch
      %71 = sbr.rel (%p69) target = $region37
    $region36: #{tpu_custom_call.1} parent=1 // pred_region
      %72 = vst [vmem:[#allocation2] sm:$0xff] 0.0
    $region37: #{tpu_custom_call.1} parent=1 // pred_fallthru
      _
    %v73 = vld [vmem:[%s2] sm:$0x1]
    %v74 = vld [vmem:[#allocation2] sm:$0xff]
    %v75 = vld [vmem:[#allocation3] sm:$0xff]
    %v76 = vld [vmem:[#allocation3 + $0x8] sm:$0xff]
    %v77 = vld [vmem:[#allocation3 + $0x10] sm:$0xff]
    %v78 = vld [vmem:[#allocation6] sm:$0xff]
    %v79 = vld [vmem:[#allocation6 + $0x8] sm:$0xff]
    %v80 = vld [vmem:[#allocation6 + $0x10] sm:$0xff]
    %v81 = vld [vmem:[#allocation6 + $0x18] sm:$0xff]
    %v82 = vld [vmem:[#allocation6 + $0x20] sm:$0xff]
    %v83 = vld [vmem:[#allocation6 + $0x28] sm:$0xff]
    %v84 = vld [vmem:[#allocation6 + $0x30] sm:$0xff]
    %v85 = vld [vmem:[#allocation6 + $0x38] sm:$0xff]
    %v86 = vld [vmem:[#allocation6 + $0x40] sm:$0xff]
    %v87 = vld [vmem:[#allocation6 + $0x48] sm:$0xff]
    %v88 = vld [vmem:[#allocation6 + $0x50] sm:$0xff]
    %v89 = vld [vmem:[#allocation6 + $0x58] sm:$0xff]
    %v90 = vld [vmem:[#allocation6 + $0x60] sm:$0xff]
    %v91 = vld [vmem:[#allocation6 + $0x68] sm:$0xff]
    %v92 = vld [vmem:[#allocation6 + $0x70] sm:$0xff]
    %v93 = vld [vmem:[#allocation6 + $0x78] sm:$0xff]
    %v94 = vld [vmem:[#allocation6 + $0x80] sm:$0xff]
    %v95 = vld [vmem:[#allocation6 + $0x88] sm:$0xff]
    %v96 = vld [vmem:[#allocation6 + $0x90] sm:$0xff]
    %v97 = vld [vmem:[#allocation6 + $0x98] sm:$0xff]
    %v98 = vld [vmem:[#allocation6 + $0xa0] sm:$0xff]
    %v99 = vld [vmem:[#allocation6 + $0xa8] sm:$0xff]
    %v100 = vld [vmem:[#allocation6 + $0xb0] sm:$0xff]
    %v101 = vld [vmem:[#allocation6 + $0xb8] sm:$0xff]
    %v102 = vld [vmem:[#allocation6 + $0xc0] sm:$0xff]
    %v103 = vld [vmem:[#allocation6 + $0xc8] sm:$0xff]
    %v104 = vld [vmem:[#allocation6 + $0xd0] sm:$0xff]
    %v105 = vld [vmem:[#allocation6 + $0xd8] sm:$0xff]
    %v106 = vld [vmem:[#allocation6 + $0xe0] sm:$0xff]
    %v107 = vld [vmem:[#allocation6 + $0xe8] sm:$0xff]
    %v108 = vld [vmem:[#allocation6 + $0xf0] sm:$0xff]
    %v109 = vld [vmem:[#allocation6 + $0xf8] sm:$0xff]
    %v110 = vld [vmem:[#allocation6 + $0x100] sm:$0xff]
    %v111 = vld [vmem:[#allocation6 + $0x108] sm:$0xff]
    %v112 = vld [vmem:[#allocation6 + $0x110] sm:$0xff]
    %v113 = vld [vmem:[#allocation6 + $0x118] sm:$0xff]
    %v114 = vld [vmem:[#allocation6 + $0x120] sm:$0xff]
    %v115 = vld [vmem:[#allocation6 + $0x128] sm:$0xff]
    %v116 = vld [vmem:[#allocation6 + $0x130] sm:$0xff]
    %v117 = vld [vmem:[#allocation6 + $0x138] sm:$0xff]
    %v118 = vld [vmem:[#allocation6 + $0x140] sm:$0xff]
    %v119 = vld [vmem:[#allocation6 + $0x148] sm:$0xff]
    %v120 = vld [vmem:[#allocation6 + $0x150] sm:$0xff]
    %v121 = vld [vmem:[#allocation6 + $0x158] sm:$0xff]
    %v122 = vld [vmem:[#allocation6 + $0x160] sm:$0xff]
    %v123 = vld [vmem:[#allocation6 + $0x168] sm:$0xff]
    %v124 = vld [vmem:[#allocation6 + $0x170] sm:$0xff]
    %v125 = vld [vmem:[#allocation6 + $0x178] sm:$0xff]
    %126 = vmatpush.msra.mxu0 %v123
    %127 = vmatpush.msra.mxu0 %v120
    %128 = vmatpush.msra.mxu0 %v117
    %129 = vmatpush.msra.mxu0 %v114
    %130 = vmatpush.msra.mxu0 %v111
    %131 = vmatpush.msra.mxu0 %v108
    %132 = vmatpush.msra.mxu0 %v105
    %133 = vmatpush.msra.mxu0 %v102
    %134 = vmatpush.msra.mxu0 %v99
    %135 = vmatpush.msra.mxu0 %v96
    %136 = vmatpush.msra.mxu0 %v93
    %137 = vmatpush.msra.mxu0 %v90
    %138 = vmatpush.msra.mxu0 %v87
    %139 = vmatpush.msra.mxu0 %v84
    %140 = vmatpush.msra.mxu0 %v81
    %141 = vmatpush.msra.mxu0 %v78
    %142 = vmatmul.f32.gmra.mxu0 %v74
    %v143 = vpop.f32.mrf.mxu0
    %v144 = vadd.f32 0.0, %v143
    %145 = vdwg.mxu0
    %146 = vmatpush.msra.mxu0 %v124
    %147 = vmatpush.msra.mxu0 %v121
    %148 = vmatpush.msra.mxu0 %v118
    %149 = vmatpush.msra.mxu0 %v115
    %150 = vmatpush.msra.mxu0 %v112
    %151 = vmatpush.msra.mxu0 %v109
    %152 = vmatpush.msra.mxu0 %v106
    %153 = vmatpush.msra.mxu0 %v103
    %154 = vmatpush.msra.mxu0 %v100
    %155 = vmatpush.msra.mxu0 %v97
    %156 = vmatpush.msra.mxu0 %v94
    %157 = vmatpush.msra.mxu0 %v91
    %158 = vmatpush.msra.mxu0 %v88
    %159 = vmatpush.msra.mxu0 %v85
    %160 = vmatpush.msra.mxu0 %v82
    %161 = vmatpush.msra.mxu0 %v79
    %162 = vmatmul.f32.gmra.mxu0 %v74
    %v163 = vpop.f32.mrf.mxu0
    %v164 = vadd.f32 0.0, %v163
    %165 = vdwg.mxu0
    %166 = vmatpush.msra.mxu0 %v125
    %167 = vmatpush.msra.mxu0 %v122
    %168 = vmatpush.msra.mxu0 %v119
    %169 = vmatpush.msra.mxu0 %v116
    %170 = vmatpush.msra.mxu0 %v113
    %171 = vmatpush.msra.mxu0 %v110
    %172 = vmatpush.msra.mxu0 %v107
    %173 = vmatpush.msra.mxu0 %v104
    %174 = vmatpush.msra.mxu0 %v101
    %175 = vmatpush.msra.mxu0 %v98
    %176 = vmatpush.msra.mxu0 %v95
    %177 = vmatpush.msra.mxu0 %v92
    %178 = vmatpush.msra.mxu0 %v89
    %179 = vmatpush.msra.mxu0 %v86
    %180 = vmatpush.msra.mxu0 %v83
    %181 = vmatpush.msra.mxu0 %v80
    %182 = vmatmul.f32.gmra.mxu0 %v74
    %v183 = vpop.f32.mrf.mxu0
    %v184 = vadd.f32 0.0, %v183
    %185 = vdwg.mxu0
    %v186 = vadd.f32 %v75, %v144
    %v187 = vxor.u32 %v186, 2147483648
    %v188 = vmul.f32 %v187, 1.442695
    %v189 = vpow.pop %v188
    %v190 = vadd.f32 %v189, 1.0
    %v191 = vrcp.pop %v190
    %v192 = vmul.f32 %v190, %v191
    %v193 = vsub.f32 1.0, %v192
    %v194 = vmul.f32 %v191, %v193
    %v195 = vadd.f32 %v191, %v194
    %vm196 = vweird.f32 %v190
    %vm197 = vweird.f32 %v191
    %vm198 = vmor %vm196, %vm197
    %v199 = vsel %vm198, %v191, %v195
    %v200 = vand.u32 2147483647, %v190
    %vm201 = vcmp.eq.f32.partialorder %v200, 8.507059e+37
    %v202 = vand.u32 %v190, 2147483648
    %v203 = vor.u32 1.1754944e-38, %v202
    %v204 = vsel %vm201, %v203, %v199
    %v205 = vmul.f32 1.0, %v204
    %v206 = vadd.f32 %v76, %v164
    %v207 = vxor.u32 %v206, 2147483648
    %v208 = vmul.f32 %v207, 1.442695
    %v209 = vpow.pop %v208
    %v210 = vadd.f32 %v209, 1.0
    %v211 = vrcp.pop %v210
    %v212 = vmul.f32 %v210, %v211
    %v213 = vsub.f32 1.0, %v212
    %v214 = vmul.f32 %v211, %v213
    %v215 = vadd.f32 %v211, %v214
    %vm216 = vweird.f32 %v210
    %vm217 = vweird.f32 %v211
    %vm218 = vmor %vm216, %vm217
    %v219 = vsel %vm218, %v211, %v215
    %v220 = vand.u32 2147483647, %v210
    %vm221 = vcmp.eq.f32.partialorder %v220, 8.507059e+37
    %v222 = vand.u32 %v210, 2147483648
    %v223 = vor.u32 1.1754944e-38, %v222
    %v224 = vsel %vm221, %v223, %v219
    %v225 = vmul.f32 1.0, %v224
    %v227 = vperm.slane %v73, 0
    %v229 = vadd.f32 %v184, %v227
    %v230 = vmul.f32 %v205, %v229
    %v231 = vadd.f32 %v77, %v230
    %v232 = vtanh.pop %v231
    %v233 = vsub.f32 1.0, %v225
    %v234 = vmul.f32 %v233, %v232
    %v235 = vmul.f32 %v225, %v74
    %v236 = vadd.f32 %v234, %v235
    %s237 = scalar_lea.vmem [#allocation3], 24
    %v238 = vld [vmem:[%s237] sm:$0xff]
    %v239 = vld [vmem:[%s237 + $0x8] sm:$0xff]
    %v240 = vld [vmem:[%s237 + $0x10] sm:$0xff]
    %241 = vmatpush.msra.mxu0 %v123
    %242 = vmatpush.msra.mxu0 %v120
    %243 = vmatpush.msra.mxu0 %v117
    %244 = vmatpush.msra.mxu0 %v114
    %245 = vmatpush.msra.mxu0 %v111
    %246 = vmatpush.msra.mxu0 %v108
    %247 = vmatpush.msra.mxu0 %v105
    %248 = vmatpush.msra.mxu0 %v102
    %249 = vmatpush.msra.mxu0 %v99
    %250 = vmatpush.msra.mxu0 %v96
    %251 = vmatpush.msra.mxu0 %v93
    %252 = vmatpush.msra.mxu0 %v90
    %253 = vmatpush.msra.mxu0 %v87
    %254 = vmatpush.msra.mxu0 %v84
    %255 = vmatpush.msra.mxu0 %v81
    %256 = vmatpush.msra.mxu0 %v78
    %257 = vmatmul.f32.gmra.mxu0 %v236
    %v258 = vpop.f32.mrf.mxu0
    %v259 = vadd.f32 0.0, %v258
    %260 = vdwg.mxu0
    %261 = vmatpush.msra.mxu0 %v124
    %262 = vmatpush.msra.mxu0 %v121
    %263 = vmatpush.msra.mxu0 %v118
    %264 = vmatpush.msra.mxu0 %v115
    %265 = vmatpush.msra.mxu0 %v112
    %266 = vmatpush.msra.mxu0 %v109
    %267 = vmatpush.msra.mxu0 %v106
    %268 = vmatpush.msra.mxu0 %v103
    %269 = vmatpush.msra.mxu0 %v100
    %270 = vmatpush.msra.mxu0 %v97
    %271 = vmatpush.msra.mxu0 %v94
    %272 = vmatpush.msra.mxu0 %v91
    %273 = vmatpush.msra.mxu0 %v88
    %274 = vmatpush.msra.mxu0 %v85
    %275 = vmatpush.msra.mxu0 %v82
    %276 = vmatpush.msra.mxu0 %v79
    %277 = vmatmul.f32.gmra.mxu0 %v236
    %v278 = vpop.f32.mrf.mxu0
    %v279 = vadd.f32 0.0, %v278
    %280 = vdwg.mxu0
    %281 = vmatpush.msra.mxu0 %v125
    %282 = vmatpush.msra.mxu0 %v122
    %283 = vmatpush.msra.mxu0 %v119
    %284 = vmatpush.msra.mxu0 %v116
    %285 = vmatpush.msra.mxu0 %v113
    %286 = vmatpush.msra.mxu0 %v110
    %287 = vmatpush.msra.mxu0 %v107
    %288 = vmatpush.msra.mxu0 %v104
    %289 = vmatpush.msra.mxu0 %v101
    %290 = vmatpush.msra.mxu0 %v98
    %291 = vmatpush.msra.mxu0 %v95
    %292 = vmatpush.msra.mxu0 %v92
    %293 = vmatpush.msra.mxu0 %v89
    %294 = vmatpush.msra.mxu0 %v86
    %295 = vmatpush.msra.mxu0 %v83
    %296 = vmatpush.msra.mxu0 %v80
    %297 = vmatmul.f32.gmra.mxu0 %v236
    %v298 = vpop.f32.mrf.mxu0
    %v299 = vadd.f32 0.0, %v298
    %300 = vdwg.mxu0
    %v301 = vadd.f32 %v238, %v259
    %v302 = vxor.u32 %v301, 2147483648
    %v303 = vmul.f32 %v302, 1.442695
    %v304 = vpow.pop %v303
    %v305 = vadd.f32 %v304, 1.0
    %v306 = vrcp.pop %v305
    %v307 = vmul.f32 %v305, %v306
    %v308 = vsub.f32 1.0, %v307
    %v309 = vmul.f32 %v306, %v308
    %v310 = vadd.f32 %v306, %v309
    %vm311 = vweird.f32 %v305
    %vm312 = vweird.f32 %v306
    %vm313 = vmor %vm311, %vm312
    %v314 = vsel %vm313, %v306, %v310
    %v315 = vand.u32 2147483647, %v305
    %vm316 = vcmp.eq.f32.partialorder %v315, 8.507059e+37
    %v317 = vand.u32 %v305, 2147483648
    %v318 = vor.u32 1.1754944e-38, %v317
    %v319 = vsel %vm316, %v318, %v314
    %v320 = vmul.f32 1.0, %v319
    %v321 = vadd.f32 %v239, %v279
    %v322 = vxor.u32 %v321, 2147483648
    %v323 = vmul.f32 %v322, 1.442695
    %v324 = vpow.pop %v323
    %v325 = vadd.f32 %v324, 1.0
    %v326 = vrcp.pop %v325
    %v327 = vmul.f32 %v325, %v326
    %v328 = vsub.f32 1.0, %v327
    %v329 = vmul.f32 %v326, %v328
    %v330 = vadd.f32 %v326, %v329
    %vm331 = vweird.f32 %v325
    %vm332 = vweird.f32 %v326
    %vm333 = vmor %vm331, %vm332
    %v334 = vsel %vm333, %v326, %v330
    %v335 = vand.u32 2147483647, %v325
    %vm336 = vcmp.eq.f32.partialorder %v335, 8.507059e+37
    %v337 = vand.u32 %v325, 2147483648
    %v338 = vor.u32 1.1754944e-38, %v337
    %v339 = vsel %vm336, %v338, %v334
    %v340 = vmul.f32 1.0, %v339
    %v341 = vadd.f32 %v299, %v227
    %v342 = vmul.f32 %v320, %v341
    %v343 = vadd.f32 %v240, %v342
    %v344 = vtanh.pop %v343
    %v345 = vsub.f32 1.0, %v340
    %v346 = vmul.f32 %v345, %v344
    %v347 = vmul.f32 %v340, %v236
    %v348 = vadd.f32 %v346, %v347
    %s349 = scalar_lea.vmem [#allocation3], 48
    %v350 = vld [vmem:[%s349] sm:$0xff]
    %v351 = vld [vmem:[%s349 + $0x8] sm:$0xff]
    %v352 = vld [vmem:[%s349 + $0x10] sm:$0xff]
    %353 = vmatpush.msra.mxu0 %v123
    %354 = vmatpush.msra.mxu0 %v120
    %355 = vmatpush.msra.mxu0 %v117
    %356 = vmatpush.msra.mxu0 %v114
    %357 = vmatpush.msra.mxu0 %v111
    %358 = vmatpush.msra.mxu0 %v108
    %359 = vmatpush.msra.mxu0 %v105
    %360 = vmatpush.msra.mxu0 %v102
    %361 = vmatpush.msra.mxu0 %v99
    %362 = vmatpush.msra.mxu0 %v96
    %363 = vmatpush.msra.mxu0 %v93
    %364 = vmatpush.msra.mxu0 %v90
    %365 = vmatpush.msra.mxu0 %v87
    %366 = vmatpush.msra.mxu0 %v84
    %367 = vmatpush.msra.mxu0 %v81
    %368 = vmatpush.msra.mxu0 %v78
    %369 = vmatmul.f32.gmra.mxu0 %v348
    %v370 = vpop.f32.mrf.mxu0
    %v371 = vadd.f32 0.0, %v370
    %372 = vdwg.mxu0
    %373 = vmatpush.msra.mxu0 %v124
    %374 = vmatpush.msra.mxu0 %v121
    %375 = vmatpush.msra.mxu0 %v118
    %376 = vmatpush.msra.mxu0 %v115
    %377 = vmatpush.msra.mxu0 %v112
    %378 = vmatpush.msra.mxu0 %v109
    %379 = vmatpush.msra.mxu0 %v106
    %380 = vmatpush.msra.mxu0 %v103
    %381 = vmatpush.msra.mxu0 %v100
    %382 = vmatpush.msra.mxu0 %v97
    %383 = vmatpush.msra.mxu0 %v94
    %384 = vmatpush.msra.mxu0 %v91
    %385 = vmatpush.msra.mxu0 %v88
    %386 = vmatpush.msra.mxu0 %v85
    %387 = vmatpush.msra.mxu0 %v82
    %388 = vmatpush.msra.mxu0 %v79
    %389 = vmatmul.f32.gmra.mxu0 %v348
    %v390 = vpop.f32.mrf.mxu0
    %v391 = vadd.f32 0.0, %v390
    %392 = vdwg.mxu0
    %393 = vmatpush.msra.mxu0 %v125
    %394 = vmatpush.msra.mxu0 %v122
    %395 = vmatpush.msra.mxu0 %v119
    %396 = vmatpush.msra.mxu0 %v116
    %397 = vmatpush.msra.mxu0 %v113
    %398 = vmatpush.msra.mxu0 %v110
    %399 = vmatpush.msra.mxu0 %v107
    %400 = vmatpush.msra.mxu0 %v104
    %401 = vmatpush.msra.mxu0 %v101
    %402 = vmatpush.msra.mxu0 %v98
    %403 = vmatpush.msra.mxu0 %v95
    %404 = vmatpush.msra.mxu0 %v92
    %405 = vmatpush.msra.mxu0 %v89
    %406 = vmatpush.msra.mxu0 %v86
    %407 = vmatpush.msra.mxu0 %v83
    %408 = vmatpush.msra.mxu0 %v80
    %409 = vmatmul.f32.gmra.mxu0 %v348
    %v410 = vpop.f32.mrf.mxu0
    %v411 = vadd.f32 0.0, %v410
    %412 = vdwg.mxu0
    %v413 = vadd.f32 %v350, %v371
    %v414 = vxor.u32 %v413, 2147483648
    %v415 = vmul.f32 %v414, 1.442695
    %v416 = vpow.pop %v415
    %v417 = vadd.f32 %v416, 1.0
    %v418 = vrcp.pop %v417
    %v419 = vmul.f32 %v417, %v418
    %v420 = vsub.f32 1.0, %v419
    %v421 = vmul.f32 %v418, %v420
    %v422 = vadd.f32 %v418, %v421
    %vm423 = vweird.f32 %v417
    %vm424 = vweird.f32 %v418
    %vm425 = vmor %vm423, %vm424
    %v426 = vsel %vm425, %v418, %v422
    %v427 = vand.u32 2147483647, %v417
    %vm428 = vcmp.eq.f32.partialorder %v427, 8.507059e+37
    %v429 = vand.u32 %v417, 2147483648
    %v430 = vor.u32 1.1754944e-38, %v429
    %v431 = vsel %vm428, %v430, %v426
    %v432 = vmul.f32 1.0, %v431
    %v433 = vadd.f32 %v351, %v391
    %v434 = vxor.u32 %v433, 2147483648
    %v435 = vmul.f32 %v434, 1.442695
    %v436 = vpow.pop %v435
    %v437 = vadd.f32 %v436, 1.0
    %v438 = vrcp.pop %v437
    %v439 = vmul.f32 %v437, %v438
    %v440 = vsub.f32 1.0, %v439
    %v441 = vmul.f32 %v438, %v440
    %v442 = vadd.f32 %v438, %v441
    %vm443 = vweird.f32 %v437
    %vm444 = vweird.f32 %v438
    %vm445 = vmor %vm443, %vm444
    %v446 = vsel %vm445, %v438, %v442
    %v447 = vand.u32 2147483647, %v437
    %vm448 = vcmp.eq.f32.partialorder %v447, 8.507059e+37
    %v449 = vand.u32 %v437, 2147483648
    %v450 = vor.u32 1.1754944e-38, %v449
    %v451 = vsel %vm448, %v450, %v446
    %v452 = vmul.f32 1.0, %v451
    %v453 = vadd.f32 %v411, %v227
    %v454 = vmul.f32 %v432, %v453
    %v455 = vadd.f32 %v352, %v454
    %v456 = vtanh.pop %v455
    %v457 = vsub.f32 1.0, %v452
    %v458 = vmul.f32 %v457, %v456
    %v459 = vmul.f32 %v452, %v348
    %v460 = vadd.f32 %v458, %v459
    %s461 = scalar_lea.vmem [#allocation3], 72
    %v462 = vld [vmem:[%s461] sm:$0xff]
    %v463 = vld [vmem:[%s461 + $0x8] sm:$0xff]
    %v464 = vld [vmem:[%s461 + $0x10] sm:$0xff]
    %465 = vmatpush.msra.mxu0 %v123
    %466 = vmatpush.msra.mxu0 %v120
    %467 = vmatpush.msra.mxu0 %v117
    %468 = vmatpush.msra.mxu0 %v114
    %469 = vmatpush.msra.mxu0 %v111
    %470 = vmatpush.msra.mxu0 %v108
    %471 = vmatpush.msra.mxu0 %v105
    %472 = vmatpush.msra.mxu0 %v102
    %473 = vmatpush.msra.mxu0 %v99
    %474 = vmatpush.msra.mxu0 %v96
    %475 = vmatpush.msra.mxu0 %v93
    %476 = vmatpush.msra.mxu0 %v90
    %477 = vmatpush.msra.mxu0 %v87
    %478 = vmatpush.msra.mxu0 %v84
    %479 = vmatpush.msra.mxu0 %v81
    %480 = vmatpush.msra.mxu0 %v78
    %481 = vmatmul.f32.gmra.mxu0 %v460
    %v482 = vpop.f32.mrf.mxu0
    %v483 = vadd.f32 0.0, %v482
    %484 = vdwg.mxu0
    %485 = vmatpush.msra.mxu0 %v124
    %486 = vmatpush.msra.mxu0 %v121
    %487 = vmatpush.msra.mxu0 %v118
    %488 = vmatpush.msra.mxu0 %v115
    %489 = vmatpush.msra.mxu0 %v112
    %490 = vmatpush.msra.mxu0 %v109
    %491 = vmatpush.msra.mxu0 %v106
    %492 = vmatpush.msra.mxu0 %v103
    %493 = vmatpush.msra.mxu0 %v100
    %494 = vmatpush.msra.mxu0 %v97
    %495 = vmatpush.msra.mxu0 %v94
    %496 = vmatpush.msra.mxu0 %v91
    %497 = vmatpush.msra.mxu0 %v88
    %498 = vmatpush.msra.mxu0 %v85
    %499 = vmatpush.msra.mxu0 %v82
    %500 = vmatpush.msra.mxu0 %v79
    %501 = vmatmul.f32.gmra.mxu0 %v460
    %v502 = vpop.f32.mrf.mxu0
    %v503 = vadd.f32 0.0, %v502
    %504 = vdwg.mxu0
    %505 = vmatpush.msra.mxu0 %v125
    %506 = vmatpush.msra.mxu0 %v122
    %507 = vmatpush.msra.mxu0 %v119
    %508 = vmatpush.msra.mxu0 %v116
    %509 = vmatpush.msra.mxu0 %v113
    %510 = vmatpush.msra.mxu0 %v110
    %511 = vmatpush.msra.mxu0 %v107
    %512 = vmatpush.msra.mxu0 %v104
    %513 = vmatpush.msra.mxu0 %v101
    %514 = vmatpush.msra.mxu0 %v98
    %515 = vmatpush.msra.mxu0 %v95
    %516 = vmatpush.msra.mxu0 %v92
    %517 = vmatpush.msra.mxu0 %v89
    %518 = vmatpush.msra.mxu0 %v86
    %519 = vmatpush.msra.mxu0 %v83
    %520 = vmatpush.msra.mxu0 %v80
    %521 = vmatmul.f32.gmra.mxu0 %v460
    %v522 = vpop.f32.mrf.mxu0
    %v523 = vadd.f32 0.0, %v522
    %524 = vdwg.mxu0
    %v525 = vadd.f32 %v462, %v483
    %v526 = vxor.u32 %v525, 2147483648
    %v527 = vmul.f32 %v526, 1.442695
    %v528 = vpow.pop %v527
    %v529 = vadd.f32 %v528, 1.0
    %v530 = vrcp.pop %v529
    %v531 = vmul.f32 %v529, %v530
    %v532 = vsub.f32 1.0, %v531
    %v533 = vmul.f32 %v530, %v532
    %v534 = vadd.f32 %v530, %v533
    %vm535 = vweird.f32 %v529
    %vm536 = vweird.f32 %v530
    %vm537 = vmor %vm535, %vm536
    %v538 = vsel %vm537, %v530, %v534
    %v539 = vand.u32 2147483647, %v529
    %vm540 = vcmp.eq.f32.partialorder %v539, 8.507059e+37
    %v541 = vand.u32 %v529, 2147483648
    %v542 = vor.u32 1.1754944e-38, %v541
    %v543 = vsel %vm540, %v542, %v538
    %v544 = vmul.f32 1.0, %v543
    %v545 = vadd.f32 %v463, %v503
    %v546 = vxor.u32 %v545, 2147483648
    %v547 = vmul.f32 %v546, 1.442695
    %v548 = vpow.pop %v547
    %v549 = vadd.f32 %v548, 1.0
    %v550 = vrcp.pop %v549
    %v551 = vmul.f32 %v549, %v550
    %v552 = vsub.f32 1.0, %v551
    %v553 = vmul.f32 %v550, %v552
    %v554 = vadd.f32 %v550, %v553
    %vm555 = vweird.f32 %v549
    %vm556 = vweird.f32 %v550
    %vm557 = vmor %vm555, %vm556
    %v558 = vsel %vm557, %v550, %v554
    %v559 = vand.u32 2147483647, %v549
    %vm560 = vcmp.eq.f32.partialorder %v559, 8.507059e+37
    %v561 = vand.u32 %v549, 2147483648
    %v562 = vor.u32 1.1754944e-38, %v561
    %v563 = vsel %vm560, %v562, %v558
    %v564 = vmul.f32 1.0, %v563
    %v565 = vadd.f32 %v523, %v227
    %v566 = vmul.f32 %v544, %v565
    %v567 = vadd.f32 %v464, %v566
    %v568 = vtanh.pop %v567
    %v569 = vsub.f32 1.0, %v564
    %v570 = vmul.f32 %v569, %v568
    %v571 = vmul.f32 %v564, %v460
    %v572 = vadd.f32 %v570, %v571
    %s573 = scalar_lea.vmem [#allocation3], 96
    %v574 = vld [vmem:[%s573] sm:$0xff]
    %v575 = vld [vmem:[%s573 + $0x8] sm:$0xff]
    %v576 = vld [vmem:[%s573 + $0x10] sm:$0xff]
    %577 = vmatpush.msra.mxu0 %v123
    %578 = vmatpush.msra.mxu0 %v120
    %579 = vmatpush.msra.mxu0 %v117
    %580 = vmatpush.msra.mxu0 %v114
    %581 = vmatpush.msra.mxu0 %v111
    %582 = vmatpush.msra.mxu0 %v108
    %583 = vmatpush.msra.mxu0 %v105
    %584 = vmatpush.msra.mxu0 %v102
    %585 = vmatpush.msra.mxu0 %v99
    %586 = vmatpush.msra.mxu0 %v96
    %587 = vmatpush.msra.mxu0 %v93
    %588 = vmatpush.msra.mxu0 %v90
    %589 = vmatpush.msra.mxu0 %v87
    %590 = vmatpush.msra.mxu0 %v84
    %591 = vmatpush.msra.mxu0 %v81
    %592 = vmatpush.msra.mxu0 %v78
    %593 = vmatmul.f32.gmra.mxu0 %v572
    %v594 = vpop.f32.mrf.mxu0
    %v595 = vadd.f32 0.0, %v594
    %596 = vdwg.mxu0
    %597 = vmatpush.msra.mxu0 %v124
    %598 = vmatpush.msra.mxu0 %v121
    %599 = vmatpush.msra.mxu0 %v118
    %600 = vmatpush.msra.mxu0 %v115
    %601 = vmatpush.msra.mxu0 %v112
    %602 = vmatpush.msra.mxu0 %v109
    %603 = vmatpush.msra.mxu0 %v106
    %604 = vmatpush.msra.mxu0 %v103
    %605 = vmatpush.msra.mxu0 %v100
    %606 = vmatpush.msra.mxu0 %v97
    %607 = vmatpush.msra.mxu0 %v94
    %608 = vmatpush.msra.mxu0 %v91
    %609 = vmatpush.msra.mxu0 %v88
    %610 = vmatpush.msra.mxu0 %v85
    %611 = vmatpush.msra.mxu0 %v82
    %612 = vmatpush.msra.mxu0 %v79
    %613 = vmatmul.f32.gmra.mxu0 %v572
    %v614 = vpop.f32.mrf.mxu0
    %v615 = vadd.f32 0.0, %v614
    %616 = vdwg.mxu0
    %617 = vmatpush.msra.mxu0 %v125
    %618 = vmatpush.msra.mxu0 %v122
    %619 = vmatpush.msra.mxu0 %v119
    %620 = vmatpush.msra.mxu0 %v116
    %621 = vmatpush.msra.mxu0 %v113
    %622 = vmatpush.msra.mxu0 %v110
    %623 = vmatpush.msra.mxu0 %v107
    %624 = vmatpush.msra.mxu0 %v104
    %625 = vmatpush.msra.mxu0 %v101
    %626 = vmatpush.msra.mxu0 %v98
    %627 = vmatpush.msra.mxu0 %v95
    %628 = vmatpush.msra.mxu0 %v92
    %629 = vmatpush.msra.mxu0 %v89
    %630 = vmatpush.msra.mxu0 %v86
    %631 = vmatpush.msra.mxu0 %v83
    %632 = vmatpush.msra.mxu0 %v80
    %633 = vmatmul.f32.gmra.mxu0 %v572
    %v634 = vpop.f32.mrf.mxu0
    %v635 = vadd.f32 0.0, %v634
    %636 = vdwg.mxu0
    %v637 = vadd.f32 %v574, %v595
    %v638 = vxor.u32 %v637, 2147483648
    %v639 = vmul.f32 %v638, 1.442695
    %v640 = vpow.pop %v639
    %v641 = vadd.f32 %v640, 1.0
    %v642 = vrcp.pop %v641
    %v643 = vmul.f32 %v641, %v642
    %v644 = vsub.f32 1.0, %v643
    %v645 = vmul.f32 %v642, %v644
    %v646 = vadd.f32 %v642, %v645
    %vm647 = vweird.f32 %v641
    %vm648 = vweird.f32 %v642
    %vm649 = vmor %vm647, %vm648
    %v650 = vsel %vm649, %v642, %v646
    %v651 = vand.u32 2147483647, %v641
    %vm652 = vcmp.eq.f32.partialorder %v651, 8.507059e+37
    %v653 = vand.u32 %v641, 2147483648
    %v654 = vor.u32 1.1754944e-38, %v653
    %v655 = vsel %vm652, %v654, %v650
    %v656 = vmul.f32 1.0, %v655
    %v657 = vadd.f32 %v575, %v615
    %v658 = vxor.u32 %v657, 2147483648
    %v659 = vmul.f32 %v658, 1.442695
    %v660 = vpow.pop %v659
    %v661 = vadd.f32 %v660, 1.0
    %v662 = vrcp.pop %v661
    %v663 = vmul.f32 %v661, %v662
    %v664 = vsub.f32 1.0, %v663
    %v665 = vmul.f32 %v662, %v664
    %v666 = vadd.f32 %v662, %v665
    %vm667 = vweird.f32 %v661
    %vm668 = vweird.f32 %v662
    %vm669 = vmor %vm667, %vm668
    %v670 = vsel %vm669, %v662, %v666
    %v671 = vand.u32 2147483647, %v661
    %vm672 = vcmp.eq.f32.partialorder %v671, 8.507059e+37
    %v673 = vand.u32 %v661, 2147483648
    %v674 = vor.u32 1.1754944e-38, %v673
    %v675 = vsel %vm672, %v674, %v670
    %v676 = vmul.f32 1.0, %v675
    %v677 = vadd.f32 %v635, %v227
    %v678 = vmul.f32 %v656, %v677
    %v679 = vadd.f32 %v576, %v678
    %v680 = vtanh.pop %v679
    %v681 = vsub.f32 1.0, %v676
    %v682 = vmul.f32 %v681, %v680
    %v683 = vmul.f32 %v676, %v572
    %v684 = vadd.f32 %v682, %v683
    %s685 = scalar_lea.vmem [#allocation3], 120
    %v686 = vld [vmem:[%s685] sm:$0xff]
    %v687 = vld [vmem:[%s685 + $0x8] sm:$0xff]
    %v688 = vld [vmem:[%s685 + $0x10] sm:$0xff]
    %689 = vmatpush.msra.mxu0 %v123
    %690 = vmatpush.msra.mxu0 %v120
    %691 = vmatpush.msra.mxu0 %v117
    %692 = vmatpush.msra.mxu0 %v114
    %693 = vmatpush.msra.mxu0 %v111
    %694 = vmatpush.msra.mxu0 %v108
    %695 = vmatpush.msra.mxu0 %v105
    %696 = vmatpush.msra.mxu0 %v102
    %697 = vmatpush.msra.mxu0 %v99
    %698 = vmatpush.msra.mxu0 %v96
    %699 = vmatpush.msra.mxu0 %v93
    %700 = vmatpush.msra.mxu0 %v90
    %701 = vmatpush.msra.mxu0 %v87
    %702 = vmatpush.msra.mxu0 %v84
    %703 = vmatpush.msra.mxu0 %v81
    %704 = vmatpush.msra.mxu0 %v78
    %705 = vmatmul.f32.gmra.mxu0 %v684
    %v706 = vpop.f32.mrf.mxu0
    %v707 = vadd.f32 0.0, %v706
    %708 = vdwg.mxu0
    %709 = vmatpush.msra.mxu0 %v124
    %710 = vmatpush.msra.mxu0 %v121
    %711 = vmatpush.msra.mxu0 %v118
    %712 = vmatpush.msra.mxu0 %v115
    %713 = vmatpush.msra.mxu0 %v112
    %714 = vmatpush.msra.mxu0 %v109
    %715 = vmatpush.msra.mxu0 %v106
    %716 = vmatpush.msra.mxu0 %v103
    %717 = vmatpush.msra.mxu0 %v100
    %718 = vmatpush.msra.mxu0 %v97
    %719 = vmatpush.msra.mxu0 %v94
    %720 = vmatpush.msra.mxu0 %v91
    %721 = vmatpush.msra.mxu0 %v88
    %722 = vmatpush.msra.mxu0 %v85
    %723 = vmatpush.msra.mxu0 %v82
    %724 = vmatpush.msra.mxu0 %v79
    %725 = vmatmul.f32.gmra.mxu0 %v684
    %v726 = vpop.f32.mrf.mxu0
    %v727 = vadd.f32 0.0, %v726
    %728 = vdwg.mxu0
    %729 = vmatpush.msra.mxu0 %v125
    %730 = vmatpush.msra.mxu0 %v122
    %731 = vmatpush.msra.mxu0 %v119
    %732 = vmatpush.msra.mxu0 %v116
    %733 = vmatpush.msra.mxu0 %v113
    %734 = vmatpush.msra.mxu0 %v110
    %735 = vmatpush.msra.mxu0 %v107
    %736 = vmatpush.msra.mxu0 %v104
    %737 = vmatpush.msra.mxu0 %v101
    %738 = vmatpush.msra.mxu0 %v98
    %739 = vmatpush.msra.mxu0 %v95
    %740 = vmatpush.msra.mxu0 %v92
    %741 = vmatpush.msra.mxu0 %v89
    %742 = vmatpush.msra.mxu0 %v86
    %743 = vmatpush.msra.mxu0 %v83
    %744 = vmatpush.msra.mxu0 %v80
    %745 = vmatmul.f32.gmra.mxu0 %v684
    %v746 = vpop.f32.mrf.mxu0
    %v747 = vadd.f32 0.0, %v746
    %748 = vdwg.mxu0
    %v749 = vadd.f32 %v686, %v707
    %v750 = vxor.u32 %v749, 2147483648
    %v751 = vmul.f32 %v750, 1.442695
    %v752 = vpow.pop %v751
    %v753 = vadd.f32 %v752, 1.0
    %v754 = vrcp.pop %v753
    %v755 = vmul.f32 %v753, %v754
    %v756 = vsub.f32 1.0, %v755
    %v757 = vmul.f32 %v754, %v756
    %v758 = vadd.f32 %v754, %v757
    %vm759 = vweird.f32 %v753
    %vm760 = vweird.f32 %v754
    %vm761 = vmor %vm759, %vm760
    %v762 = vsel %vm761, %v754, %v758
    %v763 = vand.u32 2147483647, %v753
    %vm764 = vcmp.eq.f32.partialorder %v763, 8.507059e+37
    %v765 = vand.u32 %v753, 2147483648
    %v766 = vor.u32 1.1754944e-38, %v765
    %v767 = vsel %vm764, %v766, %v762
    %v768 = vmul.f32 1.0, %v767
    %v769 = vadd.f32 %v687, %v727
    %v770 = vxor.u32 %v769, 2147483648
    %v771 = vmul.f32 %v770, 1.442695
    %v772 = vpow.pop %v771
    %v773 = vadd.f32 %v772, 1.0
    %v774 = vrcp.pop %v773
    %v775 = vmul.f32 %v773, %v774
    %v776 = vsub.f32 1.0, %v775
    %v777 = vmul.f32 %v774, %v776
    %v778 = vadd.f32 %v774, %v777
    %vm779 = vweird.f32 %v773
    %vm780 = vweird.f32 %v774
    %vm781 = vmor %vm779, %vm780
    %v782 = vsel %vm781, %v774, %v778
    %v783 = vand.u32 2147483647, %v773
    %vm784 = vcmp.eq.f32.partialorder %v783, 8.507059e+37
    %v785 = vand.u32 %v773, 2147483648
    %v786 = vor.u32 1.1754944e-38, %v785
    %v787 = vsel %vm784, %v786, %v782
    %v788 = vmul.f32 1.0, %v787
    %v789 = vadd.f32 %v747, %v227
    %v790 = vmul.f32 %v768, %v789
    %v791 = vadd.f32 %v688, %v790
    %v792 = vtanh.pop %v791
    %v793 = vsub.f32 1.0, %v788
    %v794 = vmul.f32 %v793, %v792
    %v795 = vmul.f32 %v788, %v684
    %v796 = vadd.f32 %v794, %v795
    %s797 = scalar_lea.vmem [#allocation3], 144
    %v798 = vld [vmem:[%s797] sm:$0xff]
    %v799 = vld [vmem:[%s797 + $0x8] sm:$0xff]
    %v800 = vld [vmem:[%s797 + $0x10] sm:$0xff]
    %801 = vmatpush.msra.mxu0 %v123
    %802 = vmatpush.msra.mxu0 %v120
    %803 = vmatpush.msra.mxu0 %v117
    %804 = vmatpush.msra.mxu0 %v114
    %805 = vmatpush.msra.mxu0 %v111
    %806 = vmatpush.msra.mxu0 %v108
    %807 = vmatpush.msra.mxu0 %v105
    %808 = vmatpush.msra.mxu0 %v102
    %809 = vmatpush.msra.mxu0 %v99
    %810 = vmatpush.msra.mxu0 %v96
    %811 = vmatpush.msra.mxu0 %v93
    %812 = vmatpush.msra.mxu0 %v90
    %813 = vmatpush.msra.mxu0 %v87
    %814 = vmatpush.msra.mxu0 %v84
    %815 = vmatpush.msra.mxu0 %v81
    %816 = vmatpush.msra.mxu0 %v78
    %817 = vmatmul.f32.gmra.mxu0 %v796
    %v818 = vpop.f32.mrf.mxu0
    %v819 = vadd.f32 0.0, %v818
    %820 = vdwg.mxu0
    %821 = vmatpush.msra.mxu0 %v124
    %822 = vmatpush.msra.mxu0 %v121
    %823 = vmatpush.msra.mxu0 %v118
    %824 = vmatpush.msra.mxu0 %v115
    %825 = vmatpush.msra.mxu0 %v112
    %826 = vmatpush.msra.mxu0 %v109
    %827 = vmatpush.msra.mxu0 %v106
    %828 = vmatpush.msra.mxu0 %v103
    %829 = vmatpush.msra.mxu0 %v100
    %830 = vmatpush.msra.mxu0 %v97
    %831 = vmatpush.msra.mxu0 %v94
    %832 = vmatpush.msra.mxu0 %v91
    %833 = vmatpush.msra.mxu0 %v88
    %834 = vmatpush.msra.mxu0 %v85
    %835 = vmatpush.msra.mxu0 %v82
    %836 = vmatpush.msra.mxu0 %v79
    %837 = vmatmul.f32.gmra.mxu0 %v796
    %v838 = vpop.f32.mrf.mxu0
    %v839 = vadd.f32 0.0, %v838
    %840 = vdwg.mxu0
    %841 = vmatpush.msra.mxu0 %v125
    %842 = vmatpush.msra.mxu0 %v122
    %843 = vmatpush.msra.mxu0 %v119
    %844 = vmatpush.msra.mxu0 %v116
    %845 = vmatpush.msra.mxu0 %v113
    %846 = vmatpush.msra.mxu0 %v110
    %847 = vmatpush.msra.mxu0 %v107
    %848 = vmatpush.msra.mxu0 %v104
    %849 = vmatpush.msra.mxu0 %v101
    %850 = vmatpush.msra.mxu0 %v98
    %851 = vmatpush.msra.mxu0 %v95
    %852 = vmatpush.msra.mxu0 %v92
    %853 = vmatpush.msra.mxu0 %v89
    %854 = vmatpush.msra.mxu0 %v86
    %855 = vmatpush.msra.mxu0 %v83
    %856 = vmatpush.msra.mxu0 %v80
    %857 = vmatmul.f32.gmra.mxu0 %v796
    %v858 = vpop.f32.mrf.mxu0
    %v859 = vadd.f32 0.0, %v858
    %860 = vdwg.mxu0
    %v861 = vadd.f32 %v798, %v819
    %v862 = vxor.u32 %v861, 2147483648
    %v863 = vmul.f32 %v862, 1.442695
    %v864 = vpow.pop %v863
    %v865 = vadd.f32 %v864, 1.0
    %v866 = vrcp.pop %v865
    %v867 = vmul.f32 %v865, %v866
    %v868 = vsub.f32 1.0, %v867
    %v869 = vmul.f32 %v866, %v868
    %v870 = vadd.f32 %v866, %v869
    %vm871 = vweird.f32 %v865
    %vm872 = vweird.f32 %v866
    %vm873 = vmor %vm871, %vm872
    %v874 = vsel %vm873, %v866, %v870
    %v875 = vand.u32 2147483647, %v865
    %vm876 = vcmp.eq.f32.partialorder %v875, 8.507059e+37
    %v877 = vand.u32 %v865, 2147483648
    %v878 = vor.u32 1.1754944e-38, %v877
    %v879 = vsel %vm876, %v878, %v874
    %v880 = vmul.f32 1.0, %v879
    %v881 = vadd.f32 %v799, %v839
    %v882 = vxor.u32 %v881, 2147483648
    %v883 = vmul.f32 %v882, 1.442695
    %v884 = vpow.pop %v883
    %v885 = vadd.f32 %v884, 1.0
    %v886 = vrcp.pop %v885
    %v887 = vmul.f32 %v885, %v886
    %v888 = vsub.f32 1.0, %v887
    %v889 = vmul.f32 %v886, %v888
    %v890 = vadd.f32 %v886, %v889
    %vm891 = vweird.f32 %v885
    %vm892 = vweird.f32 %v886
    %vm893 = vmor %vm891, %vm892
    %v894 = vsel %vm893, %v886, %v890
    %v895 = vand.u32 2147483647, %v885
    %vm896 = vcmp.eq.f32.partialorder %v895, 8.507059e+37
    %v897 = vand.u32 %v885, 2147483648
    %v898 = vor.u32 1.1754944e-38, %v897
    %v899 = vsel %vm896, %v898, %v894
    %v900 = vmul.f32 1.0, %v899
    %v901 = vadd.f32 %v859, %v227
    %v902 = vmul.f32 %v880, %v901
    %v903 = vadd.f32 %v800, %v902
    %v904 = vtanh.pop %v903
    %v905 = vsub.f32 1.0, %v900
    %v906 = vmul.f32 %v905, %v904
    %v907 = vmul.f32 %v900, %v796
    %v908 = vadd.f32 %v906, %v907
    %s909 = scalar_lea.vmem [#allocation3], 168
    %v910 = vld [vmem:[%s909] sm:$0xff]
    %v911 = vld [vmem:[%s909 + $0x8] sm:$0xff]
    %v912 = vld [vmem:[%s909 + $0x10] sm:$0xff]
    %913 = vmatpush.msra.mxu0 %v123
    %914 = vmatpush.msra.mxu0 %v120
    %915 = vmatpush.msra.mxu0 %v117
    %916 = vmatpush.msra.mxu0 %v114
    %917 = vmatpush.msra.mxu0 %v111
    %918 = vmatpush.msra.mxu0 %v108
    %919 = vmatpush.msra.mxu0 %v105
    %920 = vmatpush.msra.mxu0 %v102
    %921 = vmatpush.msra.mxu0 %v99
    %922 = vmatpush.msra.mxu0 %v96
    %923 = vmatpush.msra.mxu0 %v93
    %924 = vmatpush.msra.mxu0 %v90
    %925 = vmatpush.msra.mxu0 %v87
    %926 = vmatpush.msra.mxu0 %v84
    %927 = vmatpush.msra.mxu0 %v81
    %928 = vmatpush.msra.mxu0 %v78
    %929 = vmatmul.f32.gmra.mxu0 %v908
    %v930 = vpop.f32.mrf.mxu0
    %v931 = vadd.f32 0.0, %v930
    %932 = vdwg.mxu0
    %933 = vmatpush.msra.mxu0 %v124
    %934 = vmatpush.msra.mxu0 %v121
    %935 = vmatpush.msra.mxu0 %v118
    %936 = vmatpush.msra.mxu0 %v115
    %937 = vmatpush.msra.mxu0 %v112
    %938 = vmatpush.msra.mxu0 %v109
    %939 = vmatpush.msra.mxu0 %v106
    %940 = vmatpush.msra.mxu0 %v103
    %941 = vmatpush.msra.mxu0 %v100
    %942 = vmatpush.msra.mxu0 %v97
    %943 = vmatpush.msra.mxu0 %v94
    %944 = vmatpush.msra.mxu0 %v91
    %945 = vmatpush.msra.mxu0 %v88
    %946 = vmatpush.msra.mxu0 %v85
    %947 = vmatpush.msra.mxu0 %v82
    %948 = vmatpush.msra.mxu0 %v79
    %949 = vmatmul.f32.gmra.mxu0 %v908
    %v950 = vpop.f32.mrf.mxu0
    %v951 = vadd.f32 0.0, %v950
    %952 = vdwg.mxu0
    %953 = vmatpush.msra.mxu0 %v125
    %954 = vmatpush.msra.mxu0 %v122
    %955 = vmatpush.msra.mxu0 %v119
    %956 = vmatpush.msra.mxu0 %v116
    %957 = vmatpush.msra.mxu0 %v113
    %958 = vmatpush.msra.mxu0 %v110
    %959 = vmatpush.msra.mxu0 %v107
    %960 = vmatpush.msra.mxu0 %v104
    %961 = vmatpush.msra.mxu0 %v101
    %962 = vmatpush.msra.mxu0 %v98
    %963 = vmatpush.msra.mxu0 %v95
    %964 = vmatpush.msra.mxu0 %v92
    %965 = vmatpush.msra.mxu0 %v89
    %966 = vmatpush.msra.mxu0 %v86
    %967 = vmatpush.msra.mxu0 %v83
    %968 = vmatpush.msra.mxu0 %v80
    %969 = vmatmul.f32.gmra.mxu0 %v908
    %v970 = vpop.f32.mrf.mxu0
    %v971 = vadd.f32 0.0, %v970
    %972 = vdwg.mxu0
    %v973 = vadd.f32 %v910, %v931
    %v974 = vxor.u32 %v973, 2147483648
    %v975 = vmul.f32 %v974, 1.442695
    %v976 = vpow.pop %v975
    %v977 = vadd.f32 %v976, 1.0
    %v978 = vrcp.pop %v977
    %v979 = vmul.f32 %v977, %v978
    %v980 = vsub.f32 1.0, %v979
    %v981 = vmul.f32 %v978, %v980
    %v982 = vadd.f32 %v978, %v981
    %vm983 = vweird.f32 %v977
    %vm984 = vweird.f32 %v978
    %vm985 = vmor %vm983, %vm984
    %v986 = vsel %vm985, %v978, %v982
    %v987 = vand.u32 2147483647, %v977
    %vm988 = vcmp.eq.f32.partialorder %v987, 8.507059e+37
    %v989 = vand.u32 %v977, 2147483648
    %v990 = vor.u32 1.1754944e-38, %v989
    %v991 = vsel %vm988, %v990, %v986
    %v992 = vmul.f32 1.0, %v991
    %v993 = vadd.f32 %v911, %v951
    %v994 = vxor.u32 %v993, 2147483648
    %v995 = vmul.f32 %v994, 1.442695
    %v996 = vpow.pop %v995
    %v997 = vadd.f32 %v996, 1.0
    %v998 = vrcp.pop %v997
    %v999 = vmul.f32 %v997, %v998
    %v1000 = vsub.f32 1.0, %v999
    %v1001 = vmul.f32 %v998, %v1000
    %v1002 = vadd.f32 %v998, %v1001
    %vm1003 = vweird.f32 %v997
    %vm1004 = vweird.f32 %v998
    %vm1005 = vmor %vm1003, %vm1004
    %v1006 = vsel %vm1005, %v998, %v1002
    %v1007 = vand.u32 2147483647, %v997
    %vm1008 = vcmp.eq.f32.partialorder %v1007, 8.507059e+37
    %v1009 = vand.u32 %v997, 2147483648
    %v1010 = vor.u32 1.1754944e-38, %v1009
    %v1011 = vsel %vm1008, %v1010, %v1006
    %v1012 = vmul.f32 1.0, %v1011
    %v1013 = vadd.f32 %v971, %v227
    %v1014 = vmul.f32 %v992, %v1013
    %v1015 = vadd.f32 %v912, %v1014
    %v1016 = vtanh.pop %v1015
    %v1017 = vsub.f32 1.0, %v1012
    %v1018 = vmul.f32 %v1017, %v1016
    %v1019 = vmul.f32 %v1012, %v908
    %v1020 = vadd.f32 %v1018, %v1019
    %1021 = vst [vmem:[#allocation2] sm:$0xff] %v1020
    // Predicated region
    $region38: #{tpu_custom_call.1} parent=1 // pred_check
      %p1022 = pneg %p68
    $region39: #{tpu_custom_call.1} parent=1 // pred_check_branch
      %1024 = sbr.rel (%p1022) target = $region41
    $region40: #{tpu_custom_call.1} parent=1 // pred_region
      %v1025 = vld [vmem:[#allocation8] sm:$0xff]
      %v1026 = vld [vmem:[#allocation8 + $0x8] sm:$0xff]
      %v1027 = vld [vmem:[#allocation8 + $0x10] sm:$0xff]
      %v1028 = vld [vmem:[#allocation8 + $0x18] sm:$0xff]
      %v1029 = vld [vmem:[#allocation8 + $0x20] sm:$0xff]
      %v1030 = vld [vmem:[#allocation8 + $0x28] sm:$0xff]
      %v1031 = vld [vmem:[#allocation8 + $0x30] sm:$0xff]
      %v1032 = vld [vmem:[#allocation8 + $0x38] sm:$0xff]
      %v1033 = vld [vmem:[#allocation8 + $0x40] sm:$0xff]
      %v1034 = vld [vmem:[#allocation8 + $0x48] sm:$0xff]
      %v1035 = vld [vmem:[#allocation8 + $0x50] sm:$0xff]
      %v1036 = vld [vmem:[#allocation8 + $0x58] sm:$0xff]
      %v1037 = vld [vmem:[#allocation8 + $0x60] sm:$0xff]
      %v1038 = vld [vmem:[#allocation8 + $0x68] sm:$0xff]
      %v1039 = vld [vmem:[#allocation8 + $0x70] sm:$0xff]
      %v1040 = vld [vmem:[#allocation8 + $0x78] sm:$0xff]
      %v1041 = vld [vmem:[%s4] sm:$0x1]
      %v1043 = vperm.slane %v1041, 0
      %1045 = vmatpush.msra.mxu0 %v1040
      %1046 = vmatpush.msra.mxu0 %v1039
      %1047 = vmatpush.msra.mxu0 %v1038
      %1048 = vmatpush.msra.mxu0 %v1037
      %1049 = vmatpush.msra.mxu0 %v1036
      %1050 = vmatpush.msra.mxu0 %v1035
      %1051 = vmatpush.msra.mxu0 %v1034
      %1052 = vmatpush.msra.mxu0 %v1033
      %1053 = vmatpush.msra.mxu0 %v1032
      %1054 = vmatpush.msra.mxu0 %v1031
      %1055 = vmatpush.msra.mxu0 %v1030
      %1056 = vmatpush.msra.mxu0 %v1029
      %1057 = vmatpush.msra.mxu0 %v1028
      %1058 = vmatpush.msra.mxu0 %v1027
      %1059 = vmatpush.msra.mxu0 %v1026
      %1060 = vmatpush.msra.mxu0 %v1025
      %1061 = vmatmul.f32.gmra.mxu0 %v1020
      %v1062 = vpop.f32.mrf.mxu0
      %v1063 = vadd.f32 %v1043, %v1062
      %1064 = vdwg.mxu0
      %1065 = vmax.xlane.f32.xlu0 %v1063
      %v1066 = vpop.xlane.xlu0 %1065
      %v1067 = vsub.f32 %v1063, %v1066
      %v1068 = vmul.f32 %v1067, 1.442695
      %v1069 = vpow.pop %v1068
      %1070 = vadd.xlane.f32.xlu0 %v1069
      %v1071 = vpop.xlane.xlu0 %1070
      %v1072 = vrcp.pop %v1071
      %v1073 = vmul.f32 %v1071, %v1072
      %v1074 = vsub.f32 1.0, %v1073
      %v1075 = vmul.f32 %v1072, %v1074
      %v1076 = vadd.f32 %v1072, %v1075
      %vm1077 = vweird.f32 %v1071
      %vm1078 = vweird.f32 %v1072
      %vm1079 = vmor %vm1077, %vm1078
      %v1080 = vsel %vm1079, %v1072, %v1076
      %v1081 = vand.u32 2147483647, %v1071
      %vm1082 = vcmp.eq.f32.partialorder %v1081, 8.507059e+37
      %v1083 = vand.u32 %v1071, 2147483648
      %v1084 = vor.u32 1.1754944e-38, %v1083
      %v1085 = vsel %vm1082, %v1084, %v1080
      %v1086 = vmul.f32 %v1069, %v1085
      %1087 = vst [vmem:[#allocation9] sm:$0xff] %v1086
    $region41: #{tpu_custom_call.1} parent=1 // pred_fallthru
      _
    // Predicated region
    $region42: #{tpu_custom_call.1} parent=1 // pred_check
      _
    $region43: #{tpu_custom_call.1} parent=1 // pred_check_branch
      %1089 = sbr.rel (0) target = $region45
    $region44: #{tpu_custom_call.1} parent=1 // pred_region
      %1091 = vsyncadd [#allocation5], 0
      %s1093 = sshll.u32 [#allocation9], 4
      %s1094 = int_to_ptr.vmem [resolvable:$true] %s1093
      %s1095 = sshll.u32 %s5, 4
      %s1096 = int_to_ptr.hbm [resolvable:$true] %s1095
      %1098 = dma.vmem_to_hbm [thread:$0]  %s1094, 128, %s1096, [#allocation5]
    $region45: #{tpu_custom_call.1} parent=1 // pred_fallthru
      _
    // Predicated region
    $region46: #{tpu_custom_call.1} parent=1 // pred_check
      _
    $region47: #{tpu_custom_call.1} parent=1 // pred_check_branch
      %1100 = sbr.rel (0) target = $region49
    $region48: #{tpu_custom_call.1} parent=1 // pred_region
      %1102 = dma.done [#allocation5], 128
    $region49: #{tpu_custom_call.1} parent=1 // pred_fallthru
      _
    %1103 = vsyncpa [#allocation4], 1
    %1104 = vsyncpa [#allocation7], 1
    %1105 = vsyncpa [#allocation5], 1

</llo_original>
